<compile_context>
chip_gen: v6e
topology: v6e:2x2x1
jax: 0.10.0
libtpu: 0.0.40
codegen_flags: <defaults>
</compile_context>

<pallas_src>
import functools

import numpy as np
import jax
import jax.numpy as jnp
from jax.experimental import pallas as pl
from jax.experimental.pallas import tpu as pltpu

NEG_SLOPE = 0.01  # nn.LeakyReLU(negative_slope=0.01)


# ---------------------------------------------------------------------------
# Host-side constant builders (numpy, baked into the jitted forward).
# ---------------------------------------------------------------------------
def _halo(W):
    """Zero-halo length (lanes) covering the largest 3x3 tap shift |s| = W+1,
    rounded up to a 128-lane multiple (generalises the old fixed-128 halo)."""
    return ((W + 2 + 127) // 128) * 128


def _col_masks(H, W):
    """(2, H*W) f32 *source* masks for the flat-shift im2col:
       row 0 zeros column W-1 (only ever read -- incorrectly, via row wrap --
       by dx=0 taps), row 1 zeros column 0 (same for dx=2 taps).
       Pre-masking the input once per dx replaces 6 per-slab mask multiplies."""
    x = np.arange(H * W) % W
    m = np.ones((2, H * W), np.float32)
    m[0, x == W - 1] = 0.0
    m[1, x == 0] = 0.0
    return m


def _dec_matrix(W):
    """(W, W//2) 0/1 matrix selecting even columns of ONE image row.
    Applied to all rows at once (rows stacked on sublanes) -> O(W^2) constant
    instead of the old O(P^2) pool_sel."""
    D = np.zeros((W, W // 2), np.float32)
    D[2 * np.arange(W // 2), np.arange(W // 2)] = 1.0
    return D


def _dbl_matrix(Wl):
    """(Wl, 2*Wl) 0/1 matrix duplicating every column of ONE image row
    (nearest-neighbour 2x in x). O(W^2) instead of the old O(P^2) up_sel."""
    E = np.zeros((Wl, 2 * Wl), np.float32)
    idx = np.arange(Wl)
    E[idx, 2 * idx] = 1.0
    E[idx, 2 * idx + 1] = 1.0
    return E


# ---------------------------------------------------------------------------
# In-kernel compute helpers (values already in vregs / VMEM).
# ---------------------------------------------------------------------------
def _conv3x3(x, wmat, bias, cm, W, relu, compute_dtype):
    """3x3 conv (stride 1, zero pad 1) on a flattened (C, H*W) image.
    x: (Cin, P); wmat: (Cout, 9*Cin) tap-major in compute_dtype;
    bias: (Cout, 1) f32; cm: (2, P) f32 border source-masks.
    Returns (Cout, P) f32."""
    Cin, P = x.shape
    pad = _halo(W)
    xc = x.astype(compute_dtype)                     # cast ONCE, slabs stay bf16
    zp = jnp.zeros((Cin, pad), compute_dtype)
    # Pre-masked copies: column W-1 (resp. 0) is only ever read across the
    # row-wrap by dx=0 (resp. dx=2) taps, so zeroing it in the source is
    # exactly equivalent to masking every shifted slab.
    x_l = xc * cm[0:1].astype(compute_dtype)
    x_r = xc * cm[1:2].astype(compute_dtype)
    xes = (jnp.concatenate([zp, x_l, zp], axis=1),   # dx = 0
           jnp.concatenate([zp, xc, zp], axis=1),    # dx = 1
           jnp.concatenate([zp, x_r, zp], axis=1))   # dx = 2
    slabs = []
    for dy in range(3):
        for dx in range(3):
            s = (dy - 1) * W + (dx - 1)              # flat-pixel shift of the tap
            slabs.append(xes[dx][:, pad + s: pad + s + P])
    patches = jnp.concatenate(slabs, axis=0)         # (9*Cin, P) in bf16
    acc = jnp.dot(wmat, patches, preferred_element_type=jnp.float32)
    acc = acc + bias
    if relu:
        acc = jnp.where(acc > 0, acc, NEG_SLOPE * acc)
    return acc


def _maxpool2(x, dsel, H, W, compute_dtype):
    """Fused MaxPool2d(2,2) on a flattened (C, P=H*W) image -> (C, P//4) f32.
    dsel: (W, W//2) compute_dtype even-column selector (per row)."""
    C, P = x.shape
    Hl, Wl = H // 2, W // 2
    zp = jnp.zeros((C, W), x.dtype)
    xe = jnp.concatenate([x, zp], axis=1)
    m1 = jnp.maximum(x, xe[:, 1:1 + P])              # max over the x-pair
    m1e = jnp.concatenate([m1, zp], axis=1)
    m2 = jnp.maximum(m1, m1e[:, W:W + P])            # max over the y-pair
    # NOTE (invariant): the +1 lane shift wraps across row boundaries and the
    # +W shift reads the zero pad in the last row; those anchors (odd column /
    # last row) are never selected below because H and W are even and we only
    # keep even rows / even columns -- the contamination is harmless.
    rows = [m2[:, (2 * yl) * W:(2 * yl) * W + W] for yl in range(Hl)]
    stacked = jnp.concatenate(rows, axis=0).astype(compute_dtype)  # (C*Hl, W)
    dec = jnp.dot(stacked, dsel, preferred_element_type=jnp.float32)  # (C*Hl, Wl)
    out_rows = [dec[yl * C:(yl + 1) * C, :] for yl in range(Hl)]
    return jnp.concatenate(out_rows, axis=1)         # (C, Hl*Wl) f32


def _upsample2(x, esel, H_lo, W_lo, compute_dtype):
    """Nearest-neighbour 2x upsample of a flattened (C, Pl) image -> (C, 4*Pl).
    esel: (W_lo, 2*W_lo) compute_dtype column-doubling matrix (per row);
    row doubling is a plain chunk duplication + concat."""
    C, Pl = x.shape
    W = 2 * W_lo
    rows = [x[:, yl * W_lo:(yl + 1) * W_lo] for yl in range(H_lo)]
    stacked = jnp.concatenate(rows, axis=0).astype(compute_dtype)  # (C*H_lo, W_lo)
    dbl = jnp.dot(stacked, esel, preferred_element_type=jnp.float32)  # (C*H_lo, W)
    out_rows = []
    for yl in range(H_lo):
        r = dbl[yl * C:(yl + 1) * C, :]              # row yl, column-doubled
        out_rows += [r, r]                           # nearest: duplicate row
    return jnp.concatenate(out_rows, axis=1)         # (C, 4*Pl) f32


# ---------------------------------------------------------------------------
# Fused kernels (one "down", one "up", one fully-fused "bottom" per level).
# ---------------------------------------------------------------------------
def _down_kernel(x_ref, w0_ref, b0_ref, w1_ref, b1_ref,
                 cm_hi_ref, cm_lo_ref, dsel_ref,
                 up1_ref, low_ref, *, H, W, compute_dtype):
    x = x_ref[0]
    cm_hi = cm_hi_ref[...]
    cm_lo = cm_lo_ref[...]
    # hg[d][0]: conv, no relu (residual branch)
    up1_ref[0] = _conv3x3(x, w0_ref[...], b0_ref[...], cm_hi, W,
                          relu=False, compute_dtype=compute_dtype)
    # MaxPool2d(2,2) + hg[d][1]
    p = _maxpool2(x, dsel_ref[...], H, W, compute_dtype)
    y = _conv3x3(p, w1_ref[...], b1_ref[...], cm_lo, W // 2,
                 relu=True, compute_dtype=compute_dtype)
    low_ref[0] = y.astype(low_ref.dtype)             # bf16 inter-level store


def _up_kernel(low2_ref, up1_ref, w2_ref, b2_ref, w3_ref, b3_ref,
               w4_ref, b4_ref, cm_lo_ref, cm_hi_ref, esel_ref, out_ref,
               *, H_lo, W_lo, compute_dtype):
    cm_lo = cm_lo_ref[...]
    cm_hi = cm_hi_ref[...]
    W_hi = 2 * W_lo
    low3 = _conv3x3(low2_ref[0], w2_ref[...], b2_ref[...], cm_lo, W_lo,
                    relu=True, compute_dtype=compute_dtype)       # hg[d][2]
    up2 = _upsample2(low3, esel_ref[...], H_lo, W_lo, compute_dtype)
    d1 = _conv3x3(up2, w3_ref[...], b3_ref[...], cm_hi, W_hi,
                  relu=True, compute_dtype=compute_dtype)         # hg[d][3]
    d2 = _conv3x3(d1, w4_ref[...], b4_ref[...], cm_hi, W_hi,
                  relu=False, compute_dtype=compute_dtype)        # hg[d][4]
    y = d2 + up1_ref[0]                                           # up1 += deconv2
    out_ref[0] = jnp.where(y > 0, y, NEG_SLOPE * y)               # hg[d][5]


def _bottom_kernel(x_ref, w0_ref, b0_ref, w1_ref, b1_ref, w6_ref, b6_ref,
                   w2_ref, b2_ref, w3_ref, b3_ref, w4_ref, b4_ref,
                   cm_hi_ref, cm_lo_ref, dsel_ref, esel_ref,
                   out_ref, low2_ref, *, H, W, compute_dtype):
    """Deepest level fully fused: down + single-residual + up in one launch
    (up1/low1/low3 never leave VMEM)."""
    x = x_ref[0]
    cm_hi = cm_hi_ref[...]
    cm_lo = cm_lo_ref[...]
    H_lo, W_lo = H // 2, W // 2
    up1 = _conv3x3(x, w0_ref[...], b0_ref[...], cm_hi, W,
                   relu=False, compute_dtype=compute_dtype)       # hg[d][0]
    p = _maxpool2(x, dsel_ref[...], H, W, compute_dtype)
    low1 = _conv3x3(p, w1_ref[...], b1_ref[...], cm_lo, W_lo,
                    relu=True, compute_dtype=compute_dtype)       # hg[d][1]
    low2 = _conv3x3(low1, w6_ref[...], b6_ref[...], cm_lo, W_lo,
                    relu=True, compute_dtype=compute_dtype)       # hg[d][6]
    low2_ref[0] = low2                                            # returned fm
    low3 = _conv3x3(low2, w2_ref[...], b2_ref[...], cm_lo, W_lo,
                    relu=True, compute_dtype=compute_dtype)       # hg[d][2]
    up2 = _upsample2(low3, esel_ref[...], H_lo, W_lo, compute_dtype)
    d1 = _conv3x3(up2, w3_ref[...], b3_ref[...], cm_hi, W,
                  relu=True, compute_dtype=compute_dtype)         # hg[d][3]
    d2 = _conv3x3(d1, w4_ref[...], b4_ref[...], cm_hi, W,
                  relu=False, compute_dtype=compute_dtype)        # hg[d][4]
    y = up1 + d2
    out_ref[0] = jnp.where(y > 0, y, NEG_SLOPE * y)               # hg[d][5]


# ---------------------------------------------------------------------------
# pallas_call wrappers
# ---------------------------------------------------------------------------
def _full_spec(shape):
    zeros = (0,) * len(shape)
    return pl.BlockSpec(shape, lambda n: zeros)


def _conv_flops(cin, cout, pix):
    return 2 * 9 * cin * cout * pix


def _cparams():
    return pltpu.CompilerParams(dimension_semantics=("parallel",),
                                vmem_limit_bytes=64 * 1024 * 1024)


def hg_down(x, conv0, conv1, *, H, W, compute_dtype):
    """up1 = conv_l0(x) (no relu);  low = conv_l1(maxpool2(x)) (bf16)."""
    N, Cin, P = x.shape
    Hl, Wl = H // 2, W // 2
    Pl = Hl * Wl
    w0, b0 = conv0
    w1, b1 = conv1
    c0, c1 = w0.shape[0], w1.shape[0]

    cm_hi = jnp.asarray(_col_masks(H, W))
    cm_lo = jnp.asarray(_col_masks(Hl, Wl))
    dsel = jnp.asarray(_dec_matrix(W)).astype(compute_dtype)

    kernel = functools.partial(_down_kernel, H=H, W=W,
                               compute_dtype=compute_dtype)
    in_specs = [pl.BlockSpec((1, Cin, P), lambda n: (n, 0, 0)),
                _full_spec(w0.shape), _full_spec(b0.shape),
                _full_spec(w1.shape), _full_spec(b1.shape),
                _full_spec(cm_hi.shape), _full_spec(cm_lo.shape),
                _full_spec(dsel.shape)]
    flops = N * (_conv_flops(Cin, c0, P) + _conv_flops(Cin, c1, Pl)
                 + 2 * Cin * Hl * W * Wl)
    bytes_acc = int(x.size * x.dtype.itemsize + N * c0 * P * 4
                    + N * c1 * Pl * 2 + (w0.size + w1.size) * 2)
    return pl.pallas_call(
        kernel,
        out_shape=(jax.ShapeDtypeStruct((N, c0, P), jnp.float32),
                   jax.ShapeDtypeStruct((N, c1, Pl), jnp.bfloat16)),
        grid_spec=pltpu.PrefetchScalarGridSpec(
            num_scalar_prefetch=0, grid=(N,),
            in_specs=in_specs,
            out_specs=[pl.BlockSpec((1, c0, P), lambda n: (n, 0, 0)),
                       pl.BlockSpec((1, c1, Pl), lambda n: (n, 0, 0))]),
        compiler_params=_cparams(),
        cost_estimate=pl.CostEstimate(flops=int(flops), transcendentals=0,
                                      bytes_accessed=bytes_acc),
    )(x, w0, b0, w1, b1, cm_hi, cm_lo, dsel)


def hg_up(low2, up1, conv2, conv3, conv4, *, H_lo, W_lo, compute_dtype):
    """out = LeakyReLU(conv_l4(conv_l3(up2x(conv_l2(low2)))) + up1)."""
    N, c_lo, Pl = low2.shape
    _, c_hi, P = up1.shape
    H, W = 2 * H_lo, 2 * W_lo
    w2, b2 = conv2
    w3, b3 = conv3
    w4, b4 = conv4
    c2, c3, c4 = w2.shape[0], w3.shape[0], w4.shape[0]

    cm_lo = jnp.asarray(_col_masks(H_lo, W_lo))
    cm_hi = jnp.asarray(_col_masks(H, W))
    esel = jnp.asarray(_dbl_matrix(W_lo)).astype(compute_dtype)

    kernel = functools.partial(_up_kernel, H_lo=H_lo, W_lo=W_lo,
                               compute_dtype=compute_dtype)
    in_specs = [pl.BlockSpec((1, c_lo, Pl), lambda n: (n, 0, 0)),
                pl.BlockSpec((1, c_hi, P), lambda n: (n, 0, 0)),
                _full_spec(w2.shape), _full_spec(b2.shape),
                _full_spec(w3.shape), _full_spec(b3.shape),
                _full_spec(w4.shape), _full_spec(b4.shape),
                _full_spec(cm_lo.shape), _full_spec(cm_hi.shape),
                _full_spec(esel.shape)]
    flops = N * (_conv_flops(c_lo, c2, Pl) + _conv_flops(c2, c3, P)
                 + _conv_flops(c3, c4, P) + 2 * c2 * Pl * W)
    bytes_acc = int(low2.size * low2.dtype.itemsize + up1.size * 4
                    + N * c4 * P * 4 + (w2.size + w3.size + w4.size) * 2)
    return pl.pallas_call(
        kernel,
        out_shape=jax.ShapeDtypeStruct((N, c4, P), jnp.float32),
        grid_spec=pltpu.PrefetchScalarGridSpec(
            num_scalar_prefetch=0, grid=(N,),
            in_specs=in_specs,
            out_specs=pl.BlockSpec((1, c4, P), lambda n: (n, 0, 0))),
        compiler_params=_cparams(),
        cost_estimate=pl.CostEstimate(flops=int(flops), transcendentals=0,
                                      bytes_accessed=bytes_acc),
        input_output_aliases={1: 0},   # up1's HBM buffer is reused for `out`
    )(low2, up1, w2, b2, w3, b3, w4, b4, cm_lo, cm_hi, esel)


def hg_bottom(x, conv0, conv1, conv6, conv2, conv3, conv4, *, H, W,
              compute_dtype):
    """Deepest level, fully fused down+up: returns (out, low2)."""
    N, Cin, P = x.shape
    Hl, Wl = H // 2, W // 2
    Pl = Hl * Wl
    w0, b0 = conv0
    w1, b1 = conv1
    w6, b6 = conv6
    w2, b2 = conv2
    w3, b3 = conv3
    w4, b4 = conv4
    c0, c1, c6 = w0.shape[0], w1.shape[0], w6.shape[0]
    c2, c3, c4 = w2.shape[0], w3.shape[0], w4.shape[0]

    cm_hi = jnp.asarray(_col_masks(H, W))
    cm_lo = jnp.asarray(_col_masks(Hl, Wl))
    dsel = jnp.asarray(_dec_matrix(W)).astype(compute_dtype)
    esel = jnp.asarray(_dbl_matrix(Wl)).astype(compute_dtype)

    kernel = functools.partial(_bottom_kernel, H=H, W=W,
                               compute_dtype=compute_dtype)
    in_specs = [pl.BlockSpec((1, Cin, P), lambda n: (n, 0, 0)),
                _full_spec(w0.shape), _full_spec(b0.shape),
                _full_spec(w1.shape), _full_spec(b1.shape),
                _full_spec(w6.shape), _full_spec(b6.shape),
                _full_spec(w2.shape), _full_spec(b2.shape),
                _full_spec(w3.shape), _full_spec(b3.shape),
                _full_spec(w4.shape), _full_spec(b4.shape),
                _full_spec(cm_hi.shape), _full_spec(cm_lo.shape),
                _full_spec(dsel.shape), _full_spec(esel.shape)]
    flops = N * (_conv_flops(Cin, c0, P) + _conv_flops(Cin, c1, Pl)
                 + _conv_flops(c1, c6, Pl) + _conv_flops(c6, c2, Pl)
                 + _conv_flops(c2, c3, P) + _conv_flops(c3, c4, P)
                 + 2 * Cin * Hl * W * Wl + 2 * c2 * Pl * W)
    bytes_acc = int(x.size * x.dtype.itemsize + N * c4 * P * 4
                    + N * c6 * Pl * 4
                    + (w0.size + w1.size + w6.size + w2.size + w3.size
                       + w4.size) * 2)
    return pl.pallas_call(
        kernel,
        out_shape=(jax.ShapeDtypeStruct((N, c4, P), jnp.float32),
                   jax.ShapeDtypeStruct((N, c6, Pl), jnp.float32)),
        grid_spec=pltpu.PrefetchScalarGridSpec(
            num_scalar_prefetch=0, grid=(N,),
            in_specs=in_specs,
            out_specs=[pl.BlockSpec((1, c4, P), lambda n: (n, 0, 0)),
                       pl.BlockSpec((1, c6, Pl), lambda n: (n, 0, 0))]),
        compiler_params=_cparams(),
        cost_estimate=pl.CostEstimate(flops=int(flops), transcendentals=0,
                                      bytes_accessed=bytes_acc),
    )(x, w0, b0, w1, b1, w6, b6, w2, b2, w3, b3, w4, b4,
      cm_hi, cm_lo, dsel, esel)


# ---------------------------------------------------------------------------
# Parameter preparation + hourglass forward (mirrors Hourglass._hour_glass_forward)
# ---------------------------------------------------------------------------
def _prep_conv(w, b, compute_dtype):
    """HWIO (3,3,Cin,Cout) -> (Cout, 9*Cin) tap-major weight matrix in the MXU
    compute dtype, plus a (Cout, 1) f32 bias column."""
    c_out = w.shape[3]
    wmat = jnp.transpose(w, (3, 0, 1, 2)).reshape(c_out, -1).astype(compute_dtype)
    return wmat, b.reshape(c_out, 1).astype(jnp.float32)


def prepare_params(params, compute_dtype):
    return [{name: _prep_conv(w, b, compute_dtype)
             for name, (w, b) in layer.items()} for layer in params]


def hourglass_forward(kparams, x_flat, *, depth, H, W,
                      compute_dtype=jnp.bfloat16):
    """x_flat: (N, C, H*W) f32 (NCHW flattened). Returns NCHW feature maps."""
    assert H % (1 << depth) == 0 and W % (1 << depth) == 0, (
        "spatial dims must be divisible by 2**depth (MaxPool2d(2,2) per level)")
    N = x_flat.shape[0]
    up_fms = []  # (tensor_flat, h, w)

    def rec(d, x, h, w):
        p = kparams[d]
        if d == depth - 1:
            out, low2 = hg_bottom(x, p["l0"], p["l1"], p["l6"], p["l2"],
                                  p["l3"], p["l4"], H=h, W=w,
                                  compute_dtype=compute_dtype)
            up_fms.append((low2, h // 2, w // 2))
            return out
        up1, low = hg_down(x, p["l0"], p["l1"], H=h, W=w,
                           compute_dtype=compute_dtype)
        low2 = rec(d + 1, low, h // 2, w // 2)
        up_fms.append((low2, h // 2, w // 2))
        return hg_up(low2, up1, p["l2"], p["l3"], p["l4"],
                     H_lo=h // 2, W_lo=w // 2, compute_dtype=compute_dtype)

    fm = rec(0, x_flat, H, W)
    outs = [fm.reshape(N, fm.shape[1], H, W)]
    for t, h, w in up_fms[::-1]:
        outs.append(t.reshape(N, t.shape[1], h, w))
    return outs


# ---------------------------------------------------------------------------
# Pure-JAX reference (same bf16-input / f32-accumulation quantization as the
# Pallas kernels, so the comparison stays tight).
# ---------------------------------------------------------------------------
def ref_conv(x, w, b, *, relu, compute_dtype):
    y = jax.lax.conv_general_dilated(
        x.astype(compute_dtype), w.astype(compute_dtype),
        window_strides=(1, 1), padding="SAME",
        dimension_numbers=("NCHW", "HWIO", "NCHW"),
        preferred_element_type=jnp.float32)
    y = y + b.reshape(1, -1, 1, 1)
    if relu:
        y = jnp.where(y > 0, y, NEG_SLOPE * y)
    return y


def ref_maxpool(x):
    N, C, H, W = x.shape
    return jnp.max(x.reshape(N, C, H // 2, 2, W // 2, 2), axis=(3, 5))


def ref_upsample(x):
    return jnp.repeat(jnp.repeat(x, 2, axis=2), 2, axis=3)


def ref_hourglass(params, x, depth, compute_dtype):
    up_fms = []

    def rec(d, x):
        p = params[d]
        up1 = ref_conv(x, *p["l0"], relu=False, compute_dtype=compute_dtype)
        low1 = ref_maxpool(x)
        low1 = ref_conv(low1, *p["l1"], relu=True, compute_dtype=compute_dtype)
        if d == depth - 1:
            low2 = ref_conv(low1, *p["l6"], relu=True, compute_dtype=compute_dtype)
        else:
            low2 = rec(d + 1, low1)
        low3 = ref_conv(low2, *p["l2"], relu=True, compute_dtype=compute_dtype)
        up_fms.append(low2)
        up2 = ref_upsample(low3)
        d1 = ref_conv(up2, *p["l3"], relu=True, compute_dtype=compute_dtype)
        d2 = ref_conv(d1, *p["l4"], relu=False, compute_dtype=compute_dtype)
        y = up1 + d2
        return jnp.where(y > 0, y, NEG_SLOPE * y)

    fm = rec(0, x)
    return [fm] + up_fms[::-1]


# ---------------------------------------------------------------------------
if __name__ == "__main__":
    # Small deterministic config (module defaults bn=False, resBlock=Conv).
    depth, nFeat, increase = 2, 8, 8
    N, H, W = 2, 16, 16
    compute_dtype = jnp.bfloat16  # MXU-native inputs (v5e/v6e/v7x), f32 accum

    key = jax.random.PRNGKey(0)

    def make_conv(k, cin, cout):
        kw, kb = jax.random.split(k)
        w = jax.random.normal(kw, (3, 3, cin, cout), jnp.float32) / np.sqrt(9 * cin)
        b = jax.random.normal(kb, (cout,), jnp.float32) * 0.1
        return (w, b)

    params = []
    for d in range(depth):
        cd = nFeat + increase * d
        cd1 = nFeat + increase * (d + 1)
        dims = {"l0": (cd, cd), "l1": (cd, cd1), "l2": (cd1, cd),
                "l3": (cd, cd), "l4": (cd, cd)}
        if d == depth - 1:
            dims["l6"] = (cd1, cd1)  # _make_single_residual at the deepest level
        layer = {}
        for name, (ci, co) in dims.items():
            key, sub = jax.random.split(key)
            layer[name] = make_conv(sub, ci, co)
        params.append(layer)

    key, kx = jax.random.split(key)
    x_nchw = jax.random.normal(kx, (N, nFeat, H, W), jnp.float32)  # PyTorch NCHW

    kparams = prepare_params(params, compute_dtype)
    x_flat = x_nchw.reshape(N, nFeat, H * W)  # NCHW flattened -> lane-dense pixels

    fwd = jax.jit(functools.partial(hourglass_forward, depth=depth, H=H, W=W,
                                    compute_dtype=compute_dtype))
    outs = jax.block_until_ready(fwd(kparams, x_flat))

    refs = jax.block_until_ready(ref_hourglass(params, x_nchw, depth, compute_dtype))
    for o, r in zip(outs, refs):
        np.testing.assert_allclose(np.asarray(o), np.asarray(r),
                                   rtol=5e-3, atol=5e-3)

    print("KERNEL_OK")
</pallas_src>

<mosaic_0001>
module attributes {stable_mosaic.version = 11 : i64} {
  func.func @_down_kernel(%arg0: i32, %arg1: memref<1x8x256xf32, #tpu.memory_space<vmem>>, %arg2: memref<8x72xbf16, #tpu.memory_space<vmem>>, %arg3: memref<8x1xf32, #tpu.memory_space<vmem>>, %arg4: memref<16x72xbf16, #tpu.memory_space<vmem>>, %arg5: memref<16x1xf32, #tpu.memory_space<vmem>>, %arg6: memref<2x256xf32, #tpu.memory_space<vmem>>, %arg7: memref<2x64xf32, #tpu.memory_space<vmem>>, %arg8: memref<16x8xbf16, #tpu.memory_space<vmem>>, %arg9: memref<1x8x256xf32, #tpu.memory_space<vmem>>, %arg10: memref<1x16x64xbf16, #tpu.memory_space<vmem>>) attributes {dimension_semantics = [#tpu.dimension_semantics<parallel>], iteration_bounds = array<i64: 2>, scalar_prefetch = 0 : i64, scratch_operands = 0 : i64, tpu.core_type = #tpu.core_type<tc>, window_params = [{transform_indices = @transform_0, window_bounds = array<i64: 1, 8, 256>}, {pipeline_mode = #tpu.pipeline_mode<synchronous>, transform_indices = @transform_1, window_bounds = array<i64: 8, 72>}, {pipeline_mode = #tpu.pipeline_mode<synchronous>, transform_indices = @transform_2, window_bounds = array<i64: 8, 1>}, {pipeline_mode = #tpu.pipeline_mode<synchronous>, transform_indices = @transform_3, window_bounds = array<i64: 16, 72>}, {pipeline_mode = #tpu.pipeline_mode<synchronous>, transform_indices = @transform_4, window_bounds = array<i64: 16, 1>}, {pipeline_mode = #tpu.pipeline_mode<synchronous>, transform_indices = @transform_5, window_bounds = array<i64: 2, 256>}, {pipeline_mode = #tpu.pipeline_mode<synchronous>, transform_indices = @transform_6, window_bounds = array<i64: 2, 64>}, {pipeline_mode = #tpu.pipeline_mode<synchronous>, transform_indices = @transform_7, window_bounds = array<i64: 16, 8>}, {transform_indices = @transform_8, window_bounds = array<i64: 1, 8, 256>}, {transform_indices = @transform_9, window_bounds = array<i64: 1, 16, 64>}]} {
    %c0 = arith.constant 0 : index
    %c0_0 = arith.constant 0 : index
    %c0_1 = arith.constant 0 : index
    %0 = vector.load %arg1[%c0, %c0_0, %c0_1] : memref<1x8x256xf32, #tpu.memory_space<vmem>>, vector<1x8x256xf32>
    %1 = vector.shape_cast %0 : vector<1x8x256xf32> to vector<8x256xf32>
    %c0_2 = arith.constant 0 : index
    %c0_3 = arith.constant 0 : index
    %2 = vector.load %arg6[%c0_2, %c0_3] : memref<2x256xf32, #tpu.memory_space<vmem>>, vector<2x256xf32>
    %c0_4 = arith.constant 0 : index
    %c0_5 = arith.constant 0 : index
    %3 = vector.load %arg7[%c0_4, %c0_5] : memref<2x64xf32, #tpu.memory_space<vmem>>, vector<2x64xf32>
    %c0_6 = arith.constant 0 : index
    %c0_7 = arith.constant 0 : index
    %4 = vector.load %arg2[%c0_6, %c0_7] : memref<8x72xbf16, #tpu.memory_space<vmem>>, vector<8x72xbf16>
    %c0_8 = arith.constant 0 : index
    %c0_9 = arith.constant 0 : index
    %5 = vector.load %arg3[%c0_8, %c0_9] : memref<8x1xf32, #tpu.memory_space<vmem>>, vector<8x1xf32>
    %6 = arith.truncf %1 : vector<8x256xf32> to vector<8x256xbf16>
    %cst = arith.constant 0.000000e+00 : bf16
    %7 = vector.broadcast %cst : bf16 to vector<8x128xbf16>
    %8 = vector.extract_strided_slice %2 {offsets = [0, 0], sizes = [1, 256], strides = [1, 1]} : vector<2x256xf32> to vector<1x256xf32>
    %9 = arith.truncf %8 : vector<1x256xf32> to vector<1x256xbf16>
    %10 = vector.broadcast %9 : vector<1x256xbf16> to vector<8x256xbf16>
    %11 = arith.mulf %6, %10 : vector<8x256xbf16>
    %12 = vector.extract_strided_slice %2 {offsets = [1, 0], sizes = [1, 256], strides = [1, 1]} : vector<2x256xf32> to vector<1x256xf32>
    %13 = arith.truncf %12 : vector<1x256xf32> to vector<1x256xbf16>
    %14 = vector.broadcast %13 : vector<1x256xbf16> to vector<8x256xbf16>
    %15 = arith.mulf %6, %14 : vector<8x256xbf16>
    %16 = tpu.concatenate %7, %11, %7 in 1 : vector<8x128xbf16>, vector<8x256xbf16>, vector<8x128xbf16> -> vector<8x512xbf16>
    %17 = tpu.concatenate %7, %6, %7 in 1 : vector<8x128xbf16>, vector<8x256xbf16>, vector<8x128xbf16> -> vector<8x512xbf16>
    %18 = tpu.concatenate %7, %15, %7 in 1 : vector<8x128xbf16>, vector<8x256xbf16>, vector<8x128xbf16> -> vector<8x512xbf16>
    %19 = vector.extract_strided_slice %16 {offsets = [0, 111], sizes = [8, 256], strides = [1, 1]} : vector<8x512xbf16> to vector<8x256xbf16>
    %20 = vector.extract_strided_slice %17 {offsets = [0, 112], sizes = [8, 256], strides = [1, 1]} : vector<8x512xbf16> to vector<8x256xbf16>
    %21 = vector.extract_strided_slice %18 {offsets = [0, 113], sizes = [8, 256], strides = [1, 1]} : vector<8x512xbf16> to vector<8x256xbf16>
    %22 = vector.extract_strided_slice %16 {offsets = [0, 127], sizes = [8, 256], strides = [1, 1]} : vector<8x512xbf16> to vector<8x256xbf16>
    %23 = vector.extract_strided_slice %17 {offsets = [0, 128], sizes = [8, 256], strides = [1, 1]} : vector<8x512xbf16> to vector<8x256xbf16>
    %24 = vector.extract_strided_slice %18 {offsets = [0, 129], sizes = [8, 256], strides = [1, 1]} : vector<8x512xbf16> to vector<8x256xbf16>
    %25 = vector.extract_strided_slice %16 {offsets = [0, 143], sizes = [8, 256], strides = [1, 1]} : vector<8x512xbf16> to vector<8x256xbf16>
    %26 = vector.extract_strided_slice %17 {offsets = [0, 144], sizes = [8, 256], strides = [1, 1]} : vector<8x512xbf16> to vector<8x256xbf16>
    %27 = vector.extract_strided_slice %18 {offsets = [0, 145], sizes = [8, 256], strides = [1, 1]} : vector<8x512xbf16> to vector<8x256xbf16>
    %28 = tpu.concatenate %19, %20, %21, %22, %23, %24, %25, %26, %27 in 0 : vector<8x256xbf16>, vector<8x256xbf16>, vector<8x256xbf16>, vector<8x256xbf16>, vector<8x256xbf16>, vector<8x256xbf16>, vector<8x256xbf16>, vector<8x256xbf16>, vector<8x256xbf16> -> vector<72x256xbf16>
    %cst_10 = arith.constant dense<0.000000e+00> : vector<8x256xf32>
    %29 = tpu.matmul %4, %28, %cst_10 {dimension_numbers = #tpu.dot_dimension_numbers<[1], [0], [0], [1], [0, 0, 1, 1], [], []>} : vector<8x72xbf16>, vector<72x256xbf16>, vector<8x256xf32> -> vector<8x256xf32>
    %30 = vector.broadcast %5 : vector<8x1xf32> to vector<8x256xf32>
    %31 = arith.addf %29, %30 : vector<8x256xf32>
    %c0_11 = arith.constant 0 : index
    %c0_12 = arith.constant 0 : index
    %c0_13 = arith.constant 0 : index
    %32 = vector.load %arg9[%c0_11, %c0_12, %c0_13] : memref<1x8x256xf32, #tpu.memory_space<vmem>>, vector<1x8x256xf32>
    %33 = vector.shape_cast %32 : vector<1x8x256xf32> to vector<8x256xf32>
    %34 = vector.shape_cast %31 : vector<8x256xf32> to vector<1x8x256xf32>
    tpu.vector_store %arg9[%c0_11, %c0_12, %c0_13], %34 {strides = array<i32>} : memref<1x8x256xf32, #tpu.memory_space<vmem>>, vector<1x8x256xf32>,
    %c0_14 = arith.constant 0 : index
    %c0_15 = arith.constant 0 : index
    %35 = vector.load %arg8[%c0_14, %c0_15] : memref<16x8xbf16, #tpu.memory_space<vmem>>, vector<16x8xbf16>
    %cst_16 = arith.constant 0.000000e+00 : f32
    %36 = vector.broadcast %cst_16 : f32 to vector<8x16xf32>
    %37 = tpu.concatenate %1, %36 in 1 : vector<8x256xf32>, vector<8x16xf32> -> vector<8x272xf32>
    %38 = vector.extract_strided_slice %37 {offsets = [0, 1], sizes = [8, 256], strides = [1, 1]} : vector<8x272xf32> to vector<8x256xf32>
    %39 = arith.maximumf %1, %38 : vector<8x256xf32>
    %40 = tpu.concatenate %39, %36 in 1 : vector<8x256xf32>, vector<8x16xf32> -> vector<8x272xf32>
    %41 = vector.extract_strided_slice %40 {offsets = [0, 16], sizes = [8, 256], strides = [1, 1]} : vector<8x272xf32> to vector<8x256xf32>
    %42 = arith.maximumf %39, %41 : vector<8x256xf32>
    %43 = vector.extract_strided_slice %42 {offsets = [0, 0], sizes = [8, 16], strides = [1, 1]} : vector<8x256xf32> to vector<8x16xf32>
    %44 = vector.extract_strided_slice %42 {offsets = [0, 32], sizes = [8, 16], strides = [1, 1]} : vector<8x256xf32> to vector<8x16xf32>
    %45 = vector.extract_strided_slice %42 {offsets = [0, 64], sizes = [8, 16], strides = [1, 1]} : vector<8x256xf32> to vector<8x16xf32>
    %46 = vector.extract_strided_slice %42 {offsets = [0, 96], sizes = [8, 16], strides = [1, 1]} : vector<8x256xf32> to vector<8x16xf32>
    %47 = vector.extract_strided_slice %42 {offsets = [0, 128], sizes = [8, 16], strides = [1, 1]} : vector<8x256xf32> to vector<8x16xf32>
    %48 = vector.extract_strided_slice %42 {offsets = [0, 160], sizes = [8, 16], strides = [1, 1]} : vector<8x256xf32> to vector<8x16xf32>
    %49 = vector.extract_strided_slice %42 {offsets = [0, 192], sizes = [8, 16], strides = [1, 1]} : vector<8x256xf32> to vector<8x16xf32>
    %50 = vector.extract_strided_slice %42 {offsets = [0, 224], sizes = [8, 16], strides = [1, 1]} : vector<8x256xf32> to vector<8x16xf32>
    %51 = tpu.concatenate %43, %44, %45, %46, %47, %48, %49, %50 in 0 : vector<8x16xf32>, vector<8x16xf32>, vector<8x16xf32>, vector<8x16xf32>, vector<8x16xf32>, vector<8x16xf32>, vector<8x16xf32>, vector<8x16xf32> -> vector<64x16xf32>
    %52 = arith.truncf %51 : vector<64x16xf32> to vector<64x16xbf16>
    %cst_17 = arith.constant dense<0.000000e+00> : vector<64x8xf32>
    %53 = tpu.matmul %52, %35, %cst_17 {dimension_numbers = #tpu.dot_dimension_numbers<[1], [0], [0], [1], [0, 0, 1, 1], [], []>} : vector<64x16xbf16>, vector<16x8xbf16>, vector<64x8xf32> -> vector<64x8xf32>
    %54 = vector.extract_strided_slice %53 {offsets = [0, 0], sizes = [8, 8], strides = [1, 1]} : vector<64x8xf32> to vector<8x8xf32>
    %55 = vector.extract_strided_slice %53 {offsets = [8, 0], sizes = [8, 8], strides = [1, 1]} : vector<64x8xf32> to vector<8x8xf32>
    %56 = vector.extract_strided_slice %53 {offsets = [16, 0], sizes = [8, 8], strides = [1, 1]} : vector<64x8xf32> to vector<8x8xf32>
    %57 = vector.extract_strided_slice %53 {offsets = [24, 0], sizes = [8, 8], strides = [1, 1]} : vector<64x8xf32> to vector<8x8xf32>
    %58 = vector.extract_strided_slice %53 {offsets = [32, 0], sizes = [8, 8], strides = [1, 1]} : vector<64x8xf32> to vector<8x8xf32>
    %59 = vector.extract_strided_slice %53 {offsets = [40, 0], sizes = [8, 8], strides = [1, 1]} : vector<64x8xf32> to vector<8x8xf32>
    %60 = vector.extract_strided_slice %53 {offsets = [48, 0], sizes = [8, 8], strides = [1, 1]} : vector<64x8xf32> to vector<8x8xf32>
    %61 = vector.extract_strided_slice %53 {offsets = [56, 0], sizes = [8, 8], strides = [1, 1]} : vector<64x8xf32> to vector<8x8xf32>
    %62 = tpu.concatenate %54, %55, %56, %57, %58, %59, %60, %61 in 1 : vector<8x8xf32>, vector<8x8xf32>, vector<8x8xf32>, vector<8x8xf32>, vector<8x8xf32>, vector<8x8xf32>, vector<8x8xf32>, vector<8x8xf32> -> vector<8x64xf32>
    %c0_18 = arith.constant 0 : index
    %c0_19 = arith.constant 0 : index
    %63 = vector.load %arg4[%c0_18, %c0_19] : memref<16x72xbf16, #tpu.memory_space<vmem>>, vector<16x72xbf16>
    %c0_20 = arith.constant 0 : index
    %c0_21 = arith.constant 0 : index
    %64 = vector.load %arg5[%c0_20, %c0_21] : memref<16x1xf32, #tpu.memory_space<vmem>>, vector<16x1xf32>
    %65 = arith.truncf %62 : vector<8x64xf32> to vector<8x64xbf16>
    %cst_22 = arith.constant 0.000000e+00 : bf16
    %66 = vector.broadcast %cst_22 : bf16 to vector<8x128xbf16>
    %67 = vector.extract_strided_slice %3 {offsets = [0, 0], sizes = [1, 64], strides = [1, 1]} : vector<2x64xf32> to vector<1x64xf32>
    %68 = arith.truncf %67 : vector<1x64xf32> to vector<1x64xbf16>
    %69 = vector.broadcast %68 : vector<1x64xbf16> to vector<8x64xbf16>
    %70 = arith.mulf %65, %69 : vector<8x64xbf16>
    %71 = vector.extract_strided_slice %3 {offsets = [1, 0], sizes = [1, 64], strides = [1, 1]} : vector<2x64xf32> to vector<1x64xf32>
    %72 = arith.truncf %71 : vector<1x64xf32> to vector<1x64xbf16>
    %73 = vector.broadcast %72 : vector<1x64xbf16> to vector<8x64xbf16>
    %74 = arith.mulf %65, %73 : vector<8x64xbf16>
    %75 = tpu.concatenate %66, %70, %66 in 1 : vector<8x128xbf16>, vector<8x64xbf16>, vector<8x128xbf16> -> vector<8x320xbf16>
    %76 = tpu.concatenate %66, %65, %66 in 1 : vector<8x128xbf16>, vector<8x64xbf16>, vector<8x128xbf16> -> vector<8x320xbf16>
    %77 = tpu.concatenate %66, %74, %66 in 1 : vector<8x128xbf16>, vector<8x64xbf16>, vector<8x128xbf16> -> vector<8x320xbf16>
    %78 = vector.extract_strided_slice %75 {offsets = [0, 119], sizes = [8, 64], strides = [1, 1]} : vector<8x320xbf16> to vector<8x64xbf16>
    %79 = vector.extract_strided_slice %76 {offsets = [0, 120], sizes = [8, 64], strides = [1, 1]} : vector<8x320xbf16> to vector<8x64xbf16>
    %80 = vector.extract_strided_slice %77 {offsets = [0, 121], sizes = [8, 64], strides = [1, 1]} : vector<8x320xbf16> to vector<8x64xbf16>
    %81 = vector.extract_strided_slice %75 {offsets = [0, 127], sizes = [8, 64], strides = [1, 1]} : vector<8x320xbf16> to vector<8x64xbf16>
    %82 = vector.extract_strided_slice %76 {offsets = [0, 128], sizes = [8, 64], strides = [1, 1]} : vector<8x320xbf16> to vector<8x64xbf16>
    %83 = vector.extract_strided_slice %77 {offsets = [0, 129], sizes = [8, 64], strides = [1, 1]} : vector<8x320xbf16> to vector<8x64xbf16>
    %84 = vector.extract_strided_slice %75 {offsets = [0, 135], sizes = [8, 64], strides = [1, 1]} : vector<8x320xbf16> to vector<8x64xbf16>
    %85 = vector.extract_strided_slice %76 {offsets = [0, 136], sizes = [8, 64], strides = [1, 1]} : vector<8x320xbf16> to vector<8x64xbf16>
    %86 = vector.extract_strided_slice %77 {offsets = [0, 137], sizes = [8, 64], strides = [1, 1]} : vector<8x320xbf16> to vector<8x64xbf16>
    %87 = tpu.concatenate %78, %79, %80, %81, %82, %83, %84, %85, %86 in 0 : vector<8x64xbf16>, vector<8x64xbf16>, vector<8x64xbf16>, vector<8x64xbf16>, vector<8x64xbf16>, vector<8x64xbf16>, vector<8x64xbf16>, vector<8x64xbf16>, vector<8x64xbf16> -> vector<72x64xbf16>
    %cst_23 = arith.constant dense<0.000000e+00> : vector<16x64xf32>
    %88 = tpu.matmul %63, %87, %cst_23 {dimension_numbers = #tpu.dot_dimension_numbers<[1], [0], [0], [1], [0, 0, 1, 1], [], []>} : vector<16x72xbf16>, vector<72x64xbf16>, vector<16x64xf32> -> vector<16x64xf32>
    %89 = vector.broadcast %64 : vector<16x1xf32> to vector<16x64xf32>
    %90 = arith.addf %88, %89 : vector<16x64xf32>
    %cst_24 = arith.constant 0.000000e+00 : f32
    %91 = vector.broadcast %cst_24 : f32 to vector<16x64xf32>
    %92 = arith.cmpf ogt, %90, %91 : vector<16x64xf32>
    %cst_25 = arith.constant 0.00999999977 : f32
    %93 = vector.broadcast %cst_25 : f32 to vector<16x64xf32>
    %94 = arith.mulf %93, %90 : vector<16x64xf32>
    %95 = arith.select %92, %90, %94 : vector<16x64xi1>, vector<16x64xf32>
    %96 = arith.truncf %95 : vector<16x64xf32> to vector<16x64xbf16>
    %c0_26 = arith.constant 0 : index
    %c0_27 = arith.constant 0 : index
    %c0_28 = arith.constant 0 : index
    %97 = vector.load %arg10[%c0_26, %c0_27, %c0_28] : memref<1x16x64xbf16, #tpu.memory_space<vmem>>, vector<1x16x64xbf16>
    %98 = vector.shape_cast %97 : vector<1x16x64xbf16> to vector<16x64xbf16>
    %99 = vector.shape_cast %96 : vector<16x64xbf16> to vector<1x16x64xbf16>
    tpu.vector_store %arg10[%c0_26, %c0_27, %c0_28], %99 {strides = array<i32>} : memref<1x16x64xbf16, #tpu.memory_space<vmem>>, vector<1x16x64xbf16>,
    return
  }
  func.func @transform_0(%arg0: i32) -> (i32, i32, i32) {
    %c0_i32 = arith.constant 0 : i32
    %c0_i32_0 = arith.constant 0 : i32
    %c0_i32_1 = arith.constant 0 : i32
    return %arg0, %c0_i32, %c0_i32_0 : i32, i32, i32
  }
  func.func @transform_1(%arg0: i32) -> (i32, i32) {
    %c0_i32 = arith.constant 0 : i32
    %c0_i32_0 = arith.constant 0 : i32
    %c0_i32_1 = arith.constant 0 : i32
    return %c0_i32, %c0_i32_0 : i32, i32
  }
  func.func @transform_2(%arg0: i32) -> (i32, i32) {
    %c0_i32 = arith.constant 0 : i32
    %c0_i32_0 = arith.constant 0 : i32
    %c0_i32_1 = arith.constant 0 : i32
    return %c0_i32, %c0_i32_0 : i32, i32
  }
  func.func @transform_3(%arg0: i32) -> (i32, i32) {
    %c0_i32 = arith.constant 0 : i32
    %c0_i32_0 = arith.constant 0 : i32
    %c0_i32_1 = arith.constant 0 : i32
    return %c0_i32, %c0_i32_0 : i32, i32
  }
  func.func @transform_4(%arg0: i32) -> (i32, i32) {
    %c0_i32 = arith.constant 0 : i32
    %c0_i32_0 = arith.constant 0 : i32
    %c0_i32_1 = arith.constant 0 : i32
    return %c0_i32, %c0_i32_0 : i32, i32
  }
  func.func @transform_5(%arg0: i32) -> (i32, i32) {
    %c0_i32 = arith.constant 0 : i32
    %c0_i32_0 = arith.constant 0 : i32
    %c0_i32_1 = arith.constant 0 : i32
    return %c0_i32, %c0_i32_0 : i32, i32
  }
  func.func @transform_6(%arg0: i32) -> (i32, i32) {
    %c0_i32 = arith.constant 0 : i32
    %c0_i32_0 = arith.constant 0 : i32
    %c0_i32_1 = arith.constant 0 : i32
    return %c0_i32, %c0_i32_0 : i32, i32
  }
  func.func @transform_7(%arg0: i32) -> (i32, i32) {
    %c0_i32 = arith.constant 0 : i32
    %c0_i32_0 = arith.constant 0 : i32
    %c0_i32_1 = arith.constant 0 : i32
    return %c0_i32, %c0_i32_0 : i32, i32
  }
  func.func @transform_8(%arg0: i32) -> (i32, i32, i32) {
    %c0_i32 = arith.constant 0 : i32
    %c0_i32_0 = arith.constant 0 : i32
    %c0_i32_1 = arith.constant 0 : i32
    return %arg0, %c0_i32, %c0_i32_0 : i32, i32, i32
  }
  func.func @transform_9(%arg0: i32) -> (i32, i32, i32) {
    %c0_i32 = arith.constant 0 : i32
    %c0_i32_0 = arith.constant 0 : i32
    %c0_i32_1 = arith.constant 0 : i32
    return %arg0, %c0_i32, %c0_i32_0 : i32, i32, i32
  }
}

module attributes {stable_mosaic.version = 11 : i64} {
  func.func @_up_kernel(%arg0: i32, %arg1: memref<1x16x64xf32, #tpu.memory_space<vmem>>, %arg2: memref<1x8x256xf32, #tpu.memory_space<vmem>>, %arg3: memref<8x144xbf16, #tpu.memory_space<vmem>>, %arg4: memref<8x1xf32, #tpu.memory_space<vmem>>, %arg5: memref<8x72xbf16, #tpu.memory_space<vmem>>, %arg6: memref<8x1xf32, #tpu.memory_space<vmem>>, %arg7: memref<8x72xbf16, #tpu.memory_space<vmem>>, %arg8: memref<8x1xf32, #tpu.memory_space<vmem>>, %arg9: memref<2x64xf32, #tpu.memory_space<vmem>>, %arg10: memref<2x256xf32, #tpu.memory_space<vmem>>, %arg11: memref<8x16xbf16, #tpu.memory_space<vmem>>, %arg12: memref<1x8x256xf32, #tpu.memory_space<vmem>>) attributes {dimension_semantics = [#tpu.dimension_semantics<parallel>], iteration_bounds = array<i64: 2>, scalar_prefetch = 0 : i64, scratch_operands = 0 : i64, tpu.core_type = #tpu.core_type<tc>, window_params = [{transform_indices = @transform_0, window_bounds = array<i64: 1, 16, 64>}, {transform_indices = @transform_1, window_bounds = array<i64: 1, 8, 256>}, {pipeline_mode = #tpu.pipeline_mode<synchronous>, transform_indices = @transform_2, window_bounds = array<i64: 8, 144>}, {pipeline_mode = #tpu.pipeline_mode<synchronous>, transform_indices = @transform_3, window_bounds = array<i64: 8, 1>}, {pipeline_mode = #tpu.pipeline_mode<synchronous>, transform_indices = @transform_4, window_bounds = array<i64: 8, 72>}, {pipeline_mode = #tpu.pipeline_mode<synchronous>, transform_indices = @transform_5, window_bounds = array<i64: 8, 1>}, {pipeline_mode = #tpu.pipeline_mode<synchronous>, transform_indices = @transform_6, window_bounds = array<i64: 8, 72>}, {pipeline_mode = #tpu.pipeline_mode<synchronous>, transform_indices = @transform_7, window_bounds = array<i64: 8, 1>}, {pipeline_mode = #tpu.pipeline_mode<synchronous>, transform_indices = @transform_8, window_bounds = array<i64: 2, 64>}, {pipeline_mode = #tpu.pipeline_mode<synchronous>, transform_indices = @transform_9, window_bounds = array<i64: 2, 256>}, {pipeline_mode = #tpu.pipeline_mode<synchronous>, transform_indices = @transform_10, window_bounds = array<i64: 8, 16>}, {transform_indices = @transform_11, window_bounds = array<i64: 1, 8, 256>}]} {
    %c0 = arith.constant 0 : index
    %c0_0 = arith.constant 0 : index
    %0 = vector.load %arg9[%c0, %c0_0] : memref<2x64xf32, #tpu.memory_space<vmem>>, vector<2x64xf32>
    %c0_1 = arith.constant 0 : index
    %c0_2 = arith.constant 0 : index
    %1 = vector.load %arg10[%c0_1, %c0_2] : memref<2x256xf32, #tpu.memory_space<vmem>>, vector<2x256xf32>
    %c0_3 = arith.constant 0 : index
    %c0_4 = arith.constant 0 : index
    %c0_5 = arith.constant 0 : index
    %2 = vector.load %arg1[%c0_3, %c0_4, %c0_5] : memref<1x16x64xf32, #tpu.memory_space<vmem>>, vector<1x16x64xf32>
    %3 = vector.shape_cast %2 : vector<1x16x64xf32> to vector<16x64xf32>
    %c0_6 = arith.constant 0 : index
    %c0_7 = arith.constant 0 : index
    %4 = vector.load %arg3[%c0_6, %c0_7] : memref<8x144xbf16, #tpu.memory_space<vmem>>, vector<8x144xbf16>
    %c0_8 = arith.constant 0 : index
    %c0_9 = arith.constant 0 : index
    %5 = vector.load %arg4[%c0_8, %c0_9] : memref<8x1xf32, #tpu.memory_space<vmem>>, vector<8x1xf32>
    %6 = arith.truncf %3 : vector<16x64xf32> to vector<16x64xbf16>
    %cst = arith.constant 0.000000e+00 : bf16
    %7 = vector.broadcast %cst : bf16 to vector<16x128xbf16>
    %8 = vector.extract_strided_slice %0 {offsets = [0, 0], sizes = [1, 64], strides = [1, 1]} : vector<2x64xf32> to vector<1x64xf32>
    %9 = arith.truncf %8 : vector<1x64xf32> to vector<1x64xbf16>
    %10 = vector.broadcast %9 : vector<1x64xbf16> to vector<16x64xbf16>
    %11 = arith.mulf %6, %10 : vector<16x64xbf16>
    %12 = vector.extract_strided_slice %0 {offsets = [1, 0], sizes = [1, 64], strides = [1, 1]} : vector<2x64xf32> to vector<1x64xf32>
    %13 = arith.truncf %12 : vector<1x64xf32> to vector<1x64xbf16>
    %14 = vector.broadcast %13 : vector<1x64xbf16> to vector<16x64xbf16>
    %15 = arith.mulf %6, %14 : vector<16x64xbf16>
    %16 = tpu.concatenate %7, %11, %7 in 1 : vector<16x128xbf16>, vector<16x64xbf16>, vector<16x128xbf16> -> vector<16x320xbf16>
    %17 = tpu.concatenate %7, %6, %7 in 1 : vector<16x128xbf16>, vector<16x64xbf16>, vector<16x128xbf16> -> vector<16x320xbf16>
    %18 = tpu.concatenate %7, %15, %7 in 1 : vector<16x128xbf16>, vector<16x64xbf16>, vector<16x128xbf16> -> vector<16x320xbf16>
    %19 = vector.extract_strided_slice %16 {offsets = [0, 119], sizes = [16, 64], strides = [1, 1]} : vector<16x320xbf16> to vector<16x64xbf16>
    %20 = vector.extract_strided_slice %17 {offsets = [0, 120], sizes = [16, 64], strides = [1, 1]} : vector<16x320xbf16> to vector<16x64xbf16>
    %21 = vector.extract_strided_slice %18 {offsets = [0, 121], sizes = [16, 64], strides = [1, 1]} : vector<16x320xbf16> to vector<16x64xbf16>
    %22 = vector.extract_strided_slice %16 {offsets = [0, 127], sizes = [16, 64], strides = [1, 1]} : vector<16x320xbf16> to vector<16x64xbf16>
    %23 = vector.extract_strided_slice %17 {offsets = [0, 128], sizes = [16, 64], strides = [1, 1]} : vector<16x320xbf16> to vector<16x64xbf16>
    %24 = vector.extract_strided_slice %18 {offsets = [0, 129], sizes = [16, 64], strides = [1, 1]} : vector<16x320xbf16> to vector<16x64xbf16>
    %25 = vector.extract_strided_slice %16 {offsets = [0, 135], sizes = [16, 64], strides = [1, 1]} : vector<16x320xbf16> to vector<16x64xbf16>
    %26 = vector.extract_strided_slice %17 {offsets = [0, 136], sizes = [16, 64], strides = [1, 1]} : vector<16x320xbf16> to vector<16x64xbf16>
    %27 = vector.extract_strided_slice %18 {offsets = [0, 137], sizes = [16, 64], strides = [1, 1]} : vector<16x320xbf16> to vector<16x64xbf16>
    %28 = tpu.concatenate %19, %20, %21, %22, %23, %24, %25, %26, %27 in 0 : vector<16x64xbf16>, vector<16x64xbf16>, vector<16x64xbf16>, vector<16x64xbf16>, vector<16x64xbf16>, vector<16x64xbf16>, vector<16x64xbf16>, vector<16x64xbf16>, vector<16x64xbf16> -> vector<144x64xbf16>
    %cst_10 = arith.constant dense<0.000000e+00> : vector<8x64xf32>
    %29 = tpu.matmul %4, %28, %cst_10 {dimension_numbers = #tpu.dot_dimension_numbers<[1], [0], [0], [1], [0, 0, 1, 1], [], []>} : vector<8x144xbf16>, vector<144x64xbf16>, vector<8x64xf32> -> vector<8x64xf32>
    %30 = vector.broadcast %5 : vector<8x1xf32> to vector<8x64xf32>
    %31 = arith.addf %29, %30 : vector<8x64xf32>
    %cst_11 = arith.constant 0.000000e+00 : f32
    %32 = vector.broadcast %cst_11 : f32 to vector<8x64xf32>
    %33 = arith.cmpf ogt, %31, %32 : vector<8x64xf32>
    %cst_12 = arith.constant 0.00999999977 : f32
    %34 = vector.broadcast %cst_12 : f32 to vector<8x64xf32>
    %35 = arith.mulf %34, %31 : vector<8x64xf32>
    %36 = arith.select %33, %31, %35 : vector<8x64xi1>, vector<8x64xf32>
    %c0_13 = arith.constant 0 : index
    %c0_14 = arith.constant 0 : index
    %37 = vector.load %arg11[%c0_13, %c0_14] : memref<8x16xbf16, #tpu.memory_space<vmem>>, vector<8x16xbf16>
    %38 = vector.extract_strided_slice %36 {offsets = [0, 0], sizes = [8, 8], strides = [1, 1]} : vector<8x64xf32> to vector<8x8xf32>
    %39 = vector.extract_strided_slice %36 {offsets = [0, 8], sizes = [8, 8], strides = [1, 1]} : vector<8x64xf32> to vector<8x8xf32>
    %40 = vector.extract_strided_slice %36 {offsets = [0, 16], sizes = [8, 8], strides = [1, 1]} : vector<8x64xf32> to vector<8x8xf32>
    %41 = vector.extract_strided_slice %36 {offsets = [0, 24], sizes = [8, 8], strides = [1, 1]} : vector<8x64xf32> to vector<8x8xf32>
    %42 = vector.extract_strided_slice %36 {offsets = [0, 32], sizes = [8, 8], strides = [1, 1]} : vector<8x64xf32> to vector<8x8xf32>
    %43 = vector.extract_strided_slice %36 {offsets = [0, 40], sizes = [8, 8], strides = [1, 1]} : vector<8x64xf32> to vector<8x8xf32>
    %44 = vector.extract_strided_slice %36 {offsets = [0, 48], sizes = [8, 8], strides = [1, 1]} : vector<8x64xf32> to vector<8x8xf32>
    %45 = vector.extract_strided_slice %36 {offsets = [0, 56], sizes = [8, 8], strides = [1, 1]} : vector<8x64xf32> to vector<8x8xf32>
    %46 = tpu.concatenate %38, %39, %40, %41, %42, %43, %44, %45 in 0 : vector<8x8xf32>, vector<8x8xf32>, vector<8x8xf32>, vector<8x8xf32>, vector<8x8xf32>, vector<8x8xf32>, vector<8x8xf32>, vector<8x8xf32> -> vector<64x8xf32>
    %47 = arith.truncf %46 : vector<64x8xf32> to vector<64x8xbf16>
    %cst_15 = arith.constant dense<0.000000e+00> : vector<64x16xf32>
    %48 = tpu.matmul %47, %37, %cst_15 {dimension_numbers = #tpu.dot_dimension_numbers<[1], [0], [0], [1], [0, 0, 1, 1], [], []>} : vector<64x8xbf16>, vector<8x16xbf16>, vector<64x16xf32> -> vector<64x16xf32>
    %49 = vector.extract_strided_slice %48 {offsets = [0, 0], sizes = [8, 16], strides = [1, 1]} : vector<64x16xf32> to vector<8x16xf32>
    %50 = vector.extract_strided_slice %48 {offsets = [8, 0], sizes = [8, 16], strides = [1, 1]} : vector<64x16xf32> to vector<8x16xf32>
    %51 = vector.extract_strided_slice %48 {offsets = [16, 0], sizes = [8, 16], strides = [1, 1]} : vector<64x16xf32> to vector<8x16xf32>
    %52 = vector.extract_strided_slice %48 {offsets = [24, 0], sizes = [8, 16], strides = [1, 1]} : vector<64x16xf32> to vector<8x16xf32>
    %53 = vector.extract_strided_slice %48 {offsets = [32, 0], sizes = [8, 16], strides = [1, 1]} : vector<64x16xf32> to vector<8x16xf32>
    %54 = vector.extract_strided_slice %48 {offsets = [40, 0], sizes = [8, 16], strides = [1, 1]} : vector<64x16xf32> to vector<8x16xf32>
    %55 = vector.extract_strided_slice %48 {offsets = [48, 0], sizes = [8, 16], strides = [1, 1]} : vector<64x16xf32> to vector<8x16xf32>
    %56 = vector.extract_strided_slice %48 {offsets = [56, 0], sizes = [8, 16], strides = [1, 1]} : vector<64x16xf32> to vector<8x16xf32>
    %57 = tpu.concatenate %49, %49, %50, %50, %51, %51, %52, %52, %53, %53, %54, %54, %55, %55, %56, %56 in 1 : vector<8x16xf32>, vector<8x16xf32>, vector<8x16xf32>, vector<8x16xf32>, vector<8x16xf32>, vector<8x16xf32>, vector<8x16xf32>, vector<8x16xf32>, vector<8x16xf32>, vector<8x16xf32>, vector<8x16xf32>, vector<8x16xf32>, vector<8x16xf32>, vector<8x16xf32>, vector<8x16xf32>, vector<8x16xf32> -> vector<8x256xf32>
    %c0_16 = arith.constant 0 : index
    %c0_17 = arith.constant 0 : index
    %58 = vector.load %arg5[%c0_16, %c0_17] : memref<8x72xbf16, #tpu.memory_space<vmem>>, vector<8x72xbf16>
    %c0_18 = arith.constant 0 : index
    %c0_19 = arith.constant 0 : index
    %59 = vector.load %arg6[%c0_18, %c0_19] : memref<8x1xf32, #tpu.memory_space<vmem>>, vector<8x1xf32>
    %60 = arith.truncf %57 : vector<8x256xf32> to vector<8x256xbf16>
    %cst_20 = arith.constant 0.000000e+00 : bf16
    %61 = vector.broadcast %cst_20 : bf16 to vector<8x128xbf16>
    %62 = vector.extract_strided_slice %1 {offsets = [0, 0], sizes = [1, 256], strides = [1, 1]} : vector<2x256xf32> to vector<1x256xf32>
    %63 = arith.truncf %62 : vector<1x256xf32> to vector<1x256xbf16>
    %64 = vector.broadcast %63 : vector<1x256xbf16> to vector<8x256xbf16>
    %65 = arith.mulf %60, %64 : vector<8x256xbf16>
    %66 = vector.extract_strided_slice %1 {offsets = [1, 0], sizes = [1, 256], strides = [1, 1]} : vector<2x256xf32> to vector<1x256xf32>
    %67 = arith.truncf %66 : vector<1x256xf32> to vector<1x256xbf16>
    %68 = vector.broadcast %67 : vector<1x256xbf16> to vector<8x256xbf16>
    %69 = arith.mulf %60, %68 : vector<8x256xbf16>
    %70 = tpu.concatenate %61, %65, %61 in 1 : vector<8x128xbf16>, vector<8x256xbf16>, vector<8x128xbf16> -> vector<8x512xbf16>
    %71 = tpu.concatenate %61, %60, %61 in 1 : vector<8x128xbf16>, vector<8x256xbf16>, vector<8x128xbf16> -> vector<8x512xbf16>
    %72 = tpu.concatenate %61, %69, %61 in 1 : vector<8x128xbf16>, vector<8x256xbf16>, vector<8x128xbf16> -> vector<8x512xbf16>
    %73 = vector.extract_strided_slice %70 {offsets = [0, 111], sizes = [8, 256], strides = [1, 1]} : vector<8x512xbf16> to vector<8x256xbf16>
    %74 = vector.extract_strided_slice %71 {offsets = [0, 112], sizes = [8, 256], strides = [1, 1]} : vector<8x512xbf16> to vector<8x256xbf16>
    %75 = vector.extract_strided_slice %72 {offsets = [0, 113], sizes = [8, 256], strides = [1, 1]} : vector<8x512xbf16> to vector<8x256xbf16>
    %76 = vector.extract_strided_slice %70 {offsets = [0, 127], sizes = [8, 256], strides = [1, 1]} : vector<8x512xbf16> to vector<8x256xbf16>
    %77 = vector.extract_strided_slice %71 {offsets = [0, 128], sizes = [8, 256], strides = [1, 1]} : vector<8x512xbf16> to vector<8x256xbf16>
    %78 = vector.extract_strided_slice %72 {offsets = [0, 129], sizes = [8, 256], strides = [1, 1]} : vector<8x512xbf16> to vector<8x256xbf16>
    %79 = vector.extract_strided_slice %70 {offsets = [0, 143], sizes = [8, 256], strides = [1, 1]} : vector<8x512xbf16> to vector<8x256xbf16>
    %80 = vector.extract_strided_slice %71 {offsets = [0, 144], sizes = [8, 256], strides = [1, 1]} : vector<8x512xbf16> to vector<8x256xbf16>
    %81 = vector.extract_strided_slice %72 {offsets = [0, 145], sizes = [8, 256], strides = [1, 1]} : vector<8x512xbf16> to vector<8x256xbf16>
    %82 = tpu.concatenate %73, %74, %75, %76, %77, %78, %79, %80, %81 in 0 : vector<8x256xbf16>, vector<8x256xbf16>, vector<8x256xbf16>, vector<8x256xbf16>, vector<8x256xbf16>, vector<8x256xbf16>, vector<8x256xbf16>, vector<8x256xbf16>, vector<8x256xbf16> -> vector<72x256xbf16>
    %cst_21 = arith.constant dense<0.000000e+00> : vector<8x256xf32>
    %83 = tpu.matmul %58, %82, %cst_21 {dimension_numbers = #tpu.dot_dimension_numbers<[1], [0], [0], [1], [0, 0, 1, 1], [], []>} : vector<8x72xbf16>, vector<72x256xbf16>, vector<8x256xf32> -> vector<8x256xf32>
    %84 = vector.broadcast %59 : vector<8x1xf32> to vector<8x256xf32>
    %85 = arith.addf %83, %84 : vector<8x256xf32>
    %cst_22 = arith.constant 0.000000e+00 : f32
    %86 = vector.broadcast %cst_22 : f32 to vector<8x256xf32>
    %87 = arith.cmpf ogt, %85, %86 : vector<8x256xf32>
    %cst_23 = arith.constant 0.00999999977 : f32
    %88 = vector.broadcast %cst_23 : f32 to vector<8x256xf32>
    %89 = arith.mulf %88, %85 : vector<8x256xf32>
    %90 = arith.select %87, %85, %89 : vector<8x256xi1>, vector<8x256xf32>
    %c0_24 = arith.constant 0 : index
    %c0_25 = arith.constant 0 : index
    %91 = vector.load %arg7[%c0_24, %c0_25] : memref<8x72xbf16, #tpu.memory_space<vmem>>, vector<8x72xbf16>
    %c0_26 = arith.constant 0 : index
    %c0_27 = arith.constant 0 : index
    %92 = vector.load %arg8[%c0_26, %c0_27] : memref<8x1xf32, #tpu.memory_space<vmem>>, vector<8x1xf32>
    %93 = arith.truncf %90 : vector<8x256xf32> to vector<8x256xbf16>
    %cst_28 = arith.constant 0.000000e+00 : bf16
    %94 = vector.broadcast %cst_28 : bf16 to vector<8x128xbf16>
    %95 = vector.extract_strided_slice %1 {offsets = [0, 0], sizes = [1, 256], strides = [1, 1]} : vector<2x256xf32> to vector<1x256xf32>
    %96 = arith.truncf %95 : vector<1x256xf32> to vector<1x256xbf16>
    %97 = vector.broadcast %96 : vector<1x256xbf16> to vector<8x256xbf16>
    %98 = arith.mulf %93, %97 : vector<8x256xbf16>
    %99 = vector.extract_strided_slice %1 {offsets = [1, 0], sizes = [1, 256], strides = [1, 1]} : vector<2x256xf32> to vector<1x256xf32>
    %100 = arith.truncf %99 : vector<1x256xf32> to vector<1x256xbf16>
    %101 = vector.broadcast %100 : vector<1x256xbf16> to vector<8x256xbf16>
    %102 = arith.mulf %93, %101 : vector<8x256xbf16>
    %103 = tpu.concatenate %94, %98, %94 in 1 : vector<8x128xbf16>, vector<8x256xbf16>, vector<8x128xbf16> -> vector<8x512xbf16>
    %104 = tpu.concatenate %94, %93, %94 in 1 : vector<8x128xbf16>, vector<8x256xbf16>, vector<8x128xbf16> -> vector<8x512xbf16>
    %105 = tpu.concatenate %94, %102, %94 in 1 : vector<8x128xbf16>, vector<8x256xbf16>, vector<8x128xbf16> -> vector<8x512xbf16>
    %106 = vector.extract_strided_slice %103 {offsets = [0, 111], sizes = [8, 256], strides = [1, 1]} : vector<8x512xbf16> to vector<8x256xbf16>
    %107 = vector.extract_strided_slice %104 {offsets = [0, 112], sizes = [8, 256], strides = [1, 1]} : vector<8x512xbf16> to vector<8x256xbf16>
    %108 = vector.extract_strided_slice %105 {offsets = [0, 113], sizes = [8, 256], strides = [1, 1]} : vector<8x512xbf16> to vector<8x256xbf16>
    %109 = vector.extract_strided_slice %103 {offsets = [0, 127], sizes = [8, 256], strides = [1, 1]} : vector<8x512xbf16> to vector<8x256xbf16>
    %110 = vector.extract_strided_slice %104 {offsets = [0, 128], sizes = [8, 256], strides = [1, 1]} : vector<8x512xbf16> to vector<8x256xbf16>
    %111 = vector.extract_strided_slice %105 {offsets = [0, 129], sizes = [8, 256], strides = [1, 1]} : vector<8x512xbf16> to vector<8x256xbf16>
    %112 = vector.extract_strided_slice %103 {offsets = [0, 143], sizes = [8, 256], strides = [1, 1]} : vector<8x512xbf16> to vector<8x256xbf16>
    %113 = vector.extract_strided_slice %104 {offsets = [0, 144], sizes = [8, 256], strides = [1, 1]} : vector<8x512xbf16> to vector<8x256xbf16>
    %114 = vector.extract_strided_slice %105 {offsets = [0, 145], sizes = [8, 256], strides = [1, 1]} : vector<8x512xbf16> to vector<8x256xbf16>
    %115 = tpu.concatenate %106, %107, %108, %109, %110, %111, %112, %113, %114 in 0 : vector<8x256xbf16>, vector<8x256xbf16>, vector<8x256xbf16>, vector<8x256xbf16>, vector<8x256xbf16>, vector<8x256xbf16>, vector<8x256xbf16>, vector<8x256xbf16>, vector<8x256xbf16> -> vector<72x256xbf16>
    %cst_29 = arith.constant dense<0.000000e+00> : vector<8x256xf32>
    %116 = tpu.matmul %91, %115, %cst_29 {dimension_numbers = #tpu.dot_dimension_numbers<[1], [0], [0], [1], [0, 0, 1, 1], [], []>} : vector<8x72xbf16>, vector<72x256xbf16>, vector<8x256xf32> -> vector<8x256xf32>
    %117 = vector.broadcast %92 : vector<8x1xf32> to vector<8x256xf32>
    %118 = arith.addf %116, %117 : vector<8x256xf32>
    %c0_30 = arith.constant 0 : index
    %c0_31 = arith.constant 0 : index
    %c0_32 = arith.constant 0 : index
    %119 = vector.load %arg2[%c0_30, %c0_31, %c0_32] : memref<1x8x256xf32, #tpu.memory_space<vmem>>, vector<1x8x256xf32>
    %120 = vector.shape_cast %119 : vector<1x8x256xf32> to vector<8x256xf32>
    %121 = arith.addf %118, %120 : vector<8x256xf32>
    %cst_33 = arith.constant 0.000000e+00 : f32
    %122 = vector.broadcast %cst_33 : f32 to vector<8x256xf32>
    %123 = arith.cmpf ogt, %121, %122 : vector<8x256xf32>
    %cst_34 = arith.constant 0.00999999977 : f32
    %124 = vector.broadcast %cst_34 : f32 to vector<8x256xf32>
    %125 = arith.mulf %124, %121 : vector<8x256xf32>
    %126 = arith.select %123, %121, %125 : vector<8x256xi1>, vector<8x256xf32>
    %c0_35 = arith.constant 0 : index
    %c0_36 = arith.constant 0 : index
    %c0_37 = arith.constant 0 : index
    %127 = vector.load %arg12[%c0_35, %c0_36, %c0_37] : memref<1x8x256xf32, #tpu.memory_space<vmem>>, vector<1x8x256xf32>
    %128 = vector.shape_cast %127 : vector<1x8x256xf32> to vector<8x256xf32>
    %129 = vector.shape_cast %126 : vector<8x256xf32> to vector<1x8x256xf32>
    tpu.vector_store %arg12[%c0_35, %c0_36, %c0_37], %129 {strides = array<i32>} : memref<1x8x256xf32, #tpu.memory_space<vmem>>, vector<1x8x256xf32>,
    return
  }
  func.func @transform_0(%arg0: i32) -> (i32, i32, i32) {
    %c0_i32 = arith.constant 0 : i32
    %c0_i32_0 = arith.constant 0 : i32
    %c0_i32_1 = arith.constant 0 : i32
    return %arg0, %c0_i32, %c0_i32_0 : i32, i32, i32
  }
  func.func @transform_1(%arg0: i32) -> (i32, i32, i32) {
    %c0_i32 = arith.constant 0 : i32
    %c0_i32_0 = arith.constant 0 : i32
    %c0_i32_1 = arith.constant 0 : i32
    return %arg0, %c0_i32, %c0_i32_0 : i32, i32, i32
  }
  func.func @transform_2(%arg0: i32) -> (i32, i32) {
    %c0_i32 = arith.constant 0 : i32
    %c0_i32_0 = arith.constant 0 : i32
    %c0_i32_1 = arith.constant 0 : i32
    return %c0_i32, %c0_i32_0 : i32, i32
  }
  func.func @transform_3(%arg0: i32) -> (i32, i32) {
    %c0_i32 = arith.constant 0 : i32
    %c0_i32_0 = arith.constant 0 : i32
    %c0_i32_1 = arith.constant 0 : i32
    return %c0_i32, %c0_i32_0 : i32, i32
  }
  func.func @transform_4(%arg0: i32) -> (i32, i32) {
    %c0_i32 = arith.constant 0 : i32
    %c0_i32_0 = arith.constant 0 : i32
    %c0_i32_1 = arith.constant 0 : i32
    return %c0_i32, %c0_i32_0 : i32, i32
  }
  func.func @transform_5(%arg0: i32) -> (i32, i32) {
    %c0_i32 = arith.constant 0 : i32
    %c0_i32_0 = arith.constant 0 : i32
    %c0_i32_1 = arith.constant 0 : i32
    return %c0_i32, %c0_i32_0 : i32, i32
  }
  func.func @transform_6(%arg0: i32) -> (i32, i32) {
    %c0_i32 = arith.constant 0 : i32
    %c0_i32_0 = arith.constant 0 : i32
    %c0_i32_1 = arith.constant 0 : i32
    return %c0_i32, %c0_i32_0 : i32, i32
  }
  func.func @transform_7(%arg0: i32) -> (i32, i32) {
    %c0_i32 = arith.constant 0 : i32
    %c0_i32_0 = arith.constant 0 : i32
    %c0_i32_1 = arith.constant 0 : i32
    return %c0_i32, %c0_i32_0 : i32, i32
  }
  func.func @transform_8(%arg0: i32) -> (i32, i32) {
    %c0_i32 = arith.constant 0 : i32
    %c0_i32_0 = arith.constant 0 : i32
    %c0_i32_1 = arith.constant 0 : i32
    return %c0_i32, %c0_i32_0 : i32, i32
  }
  func.func @transform_9(%arg0: i32) -> (i32, i32) {
    %c0_i32 = arith.constant 0 : i32
    %c0_i32_0 = arith.constant 0 : i32
    %c0_i32_1 = arith.constant 0 : i32
    return %c0_i32, %c0_i32_0 : i32, i32
  }
  func.func @transform_10(%arg0: i32) -> (i32, i32) {
    %c0_i32 = arith.constant 0 : i32
    %c0_i32_0 = arith.constant 0 : i32
    %c0_i32_1 = arith.constant 0 : i32
    return %c0_i32, %c0_i32_0 : i32, i32
  }
  func.func @transform_11(%arg0: i32) -> (i32, i32, i32) {
    %c0_i32 = arith.constant 0 : i32
    %c0_i32_0 = arith.constant 0 : i32
    %c0_i32_1 = arith.constant 0 : i32
    return %arg0, %c0_i32, %c0_i32_0 : i32, i32, i32
  }
}

module attributes {stable_mosaic.version = 11 : i64} {
  func.func @_bottom_kernel(%arg0: i32, %arg1: memref<1x16x64xbf16, #tpu.memory_space<vmem>>, %arg2: memref<16x144xbf16, #tpu.memory_space<vmem>>, %arg3: memref<16x1xf32, #tpu.memory_space<vmem>>, %arg4: memref<24x144xbf16, #tpu.memory_space<vmem>>, %arg5: memref<24x1xf32, #tpu.memory_space<vmem>>, %arg6: memref<24x216xbf16, #tpu.memory_space<vmem>>, %arg7: memref<24x1xf32, #tpu.memory_space<vmem>>, %arg8: memref<16x216xbf16, #tpu.memory_space<vmem>>, %arg9: memref<16x1xf32, #tpu.memory_space<vmem>>, %arg10: memref<16x144xbf16, #tpu.memory_space<vmem>>, %arg11: memref<16x1xf32, #tpu.memory_space<vmem>>, %arg12: memref<16x144xbf16, #tpu.memory_space<vmem>>, %arg13: memref<16x1xf32, #tpu.memory_space<vmem>>, %arg14: memref<2x64xf32, #tpu.memory_space<vmem>>, %arg15: memref<2x16xf32, #tpu.memory_space<vmem>>, %arg16: memref<8x4xbf16, #tpu.memory_space<vmem>>, %arg17: memref<4x8xbf16, #tpu.memory_space<vmem>>, %arg18: memref<1x16x64xf32, #tpu.memory_space<vmem>>, %arg19: memref<1x24x16xf32, #tpu.memory_space<vmem>>) attributes {dimension_semantics = [#tpu.dimension_semantics<parallel>], iteration_bounds = array<i64: 2>, scalar_prefetch = 0 : i64, scratch_operands = 0 : i64, tpu.core_type = #tpu.core_type<tc>, window_params = [{transform_indices = @transform_0, window_bounds = array<i64: 1, 16, 64>}, {pipeline_mode = #tpu.pipeline_mode<synchronous>, transform_indices = @transform_1, window_bounds = array<i64: 16, 144>}, {pipeline_mode = #tpu.pipeline_mode<synchronous>, transform_indices = @transform_2, window_bounds = array<i64: 16, 1>}, {pipeline_mode = #tpu.pipeline_mode<synchronous>, transform_indices = @transform_3, window_bounds = array<i64: 24, 144>}, {pipeline_mode = #tpu.pipeline_mode<synchronous>, transform_indices = @transform_4, window_bounds = array<i64: 24, 1>}, {pipeline_mode = #tpu.pipeline_mode<synchronous>, transform_indices = @transform_5, window_bounds = array<i64: 24, 216>}, {pipeline_mode = #tpu.pipeline_mode<synchronous>, transform_indices = @transform_6, window_bounds = array<i64: 24, 1>}, {pipeline_mode = #tpu.pipeline_mode<synchronous>, transform_indices = @transform_7, window_bounds = array<i64: 16, 216>}, {pipeline_mode = #tpu.pipeline_mode<synchronous>, transform_indices = @transform_8, window_bounds = array<i64: 16, 1>}, {pipeline_mode = #tpu.pipeline_mode<synchronous>, transform_indices = @transform_9, window_bounds = array<i64: 16, 144>}, {pipeline_mode = #tpu.pipeline_mode<synchronous>, transform_indices = @transform_10, window_bounds = array<i64: 16, 1>}, {pipeline_mode = #tpu.pipeline_mode<synchronous>, transform_indices = @transform_11, window_bounds = array<i64: 16, 144>}, {pipeline_mode = #tpu.pipeline_mode<synchronous>, transform_indices = @transform_12, window_bounds = array<i64: 16, 1>}, {pipeline_mode = #tpu.pipeline_mode<synchronous>, transform_indices = @transform_13, window_bounds = array<i64: 2, 64>}, {pipeline_mode = #tpu.pipeline_mode<synchronous>, transform_indices = @transform_14, window_bounds = array<i64: 2, 16>}, {pipeline_mode = #tpu.pipeline_mode<synchronous>, transform_indices = @transform_15, window_bounds = array<i64: 8, 4>}, {pipeline_mode = #tpu.pipeline_mode<synchronous>, transform_indices = @transform_16, window_bounds = array<i64: 4, 8>}, {transform_indices = @transform_17, window_bounds = array<i64: 1, 16, 64>}, {transform_indices = @transform_18, window_bounds = array<i64: 1, 24, 16>}]} {
    %c0 = arith.constant 0 : index
    %c0_0 = arith.constant 0 : index
    %c0_1 = arith.constant 0 : index
    %0 = vector.load %arg1[%c0, %c0_0, %c0_1] : memref<1x16x64xbf16, #tpu.memory_space<vmem>>, vector<1x16x64xbf16>
    %1 = vector.shape_cast %0 : vector<1x16x64xbf16> to vector<16x64xbf16>
    %c0_2 = arith.constant 0 : index
    %c0_3 = arith.constant 0 : index
    %2 = vector.load %arg14[%c0_2, %c0_3] : memref<2x64xf32, #tpu.memory_space<vmem>>, vector<2x64xf32>
    %c0_4 = arith.constant 0 : index
    %c0_5 = arith.constant 0 : index
    %3 = vector.load %arg15[%c0_4, %c0_5] : memref<2x16xf32, #tpu.memory_space<vmem>>, vector<2x16xf32>
    %c0_6 = arith.constant 0 : index
    %c0_7 = arith.constant 0 : index
    %4 = vector.load %arg2[%c0_6, %c0_7] : memref<16x144xbf16, #tpu.memory_space<vmem>>, vector<16x144xbf16>
    %c0_8 = arith.constant 0 : index
    %c0_9 = arith.constant 0 : index
    %5 = vector.load %arg3[%c0_8, %c0_9] : memref<16x1xf32, #tpu.memory_space<vmem>>, vector<16x1xf32>
    %cst = arith.constant 0.000000e+00 : bf16
    %6 = vector.broadcast %cst : bf16 to vector<16x128xbf16>
    %7 = vector.extract_strided_slice %2 {offsets = [0, 0], sizes = [1, 64], strides = [1, 1]} : vector<2x64xf32> to vector<1x64xf32>
    %8 = arith.truncf %7 : vector<1x64xf32> to vector<1x64xbf16>
    %9 = vector.broadcast %8 : vector<1x64xbf16> to vector<16x64xbf16>
    %10 = arith.mulf %1, %9 : vector<16x64xbf16>
    %11 = vector.extract_strided_slice %2 {offsets = [1, 0], sizes = [1, 64], strides = [1, 1]} : vector<2x64xf32> to vector<1x64xf32>
    %12 = arith.truncf %11 : vector<1x64xf32> to vector<1x64xbf16>
    %13 = vector.broadcast %12 : vector<1x64xbf16> to vector<16x64xbf16>
    %14 = arith.mulf %1, %13 : vector<16x64xbf16>
    %15 = tpu.concatenate %6, %10, %6 in 1 : vector<16x128xbf16>, vector<16x64xbf16>, vector<16x128xbf16> -> vector<16x320xbf16>
    %16 = tpu.concatenate %6, %1, %6 in 1 : vector<16x128xbf16>, vector<16x64xbf16>, vector<16x128xbf16> -> vector<16x320xbf16>
    %17 = tpu.concatenate %6, %14, %6 in 1 : vector<16x128xbf16>, vector<16x64xbf16>, vector<16x128xbf16> -> vector<16x320xbf16>
    %18 = vector.extract_strided_slice %15 {offsets = [0, 119], sizes = [16, 64], strides = [1, 1]} : vector<16x320xbf16> to vector<16x64xbf16>
    %19 = vector.extract_strided_slice %16 {offsets = [0, 120], sizes = [16, 64], strides = [1, 1]} : vector<16x320xbf16> to vector<16x64xbf16>
    %20 = vector.extract_strided_slice %17 {offsets = [0, 121], sizes = [16, 64], strides = [1, 1]} : vector<16x320xbf16> to vector<16x64xbf16>
    %21 = vector.extract_strided_slice %15 {offsets = [0, 127], sizes = [16, 64], strides = [1, 1]} : vector<16x320xbf16> to vector<16x64xbf16>
    %22 = vector.extract_strided_slice %16 {offsets = [0, 128], sizes = [16, 64], strides = [1, 1]} : vector<16x320xbf16> to vector<16x64xbf16>
    %23 = vector.extract_strided_slice %17 {offsets = [0, 129], sizes = [16, 64], strides = [1, 1]} : vector<16x320xbf16> to vector<16x64xbf16>
    %24 = vector.extract_strided_slice %15 {offsets = [0, 135], sizes = [16, 64], strides = [1, 1]} : vector<16x320xbf16> to vector<16x64xbf16>
    %25 = vector.extract_strided_slice %16 {offsets = [0, 136], sizes = [16, 64], strides = [1, 1]} : vector<16x320xbf16> to vector<16x64xbf16>
    %26 = vector.extract_strided_slice %17 {offsets = [0, 137], sizes = [16, 64], strides = [1, 1]} : vector<16x320xbf16> to vector<16x64xbf16>
    %27 = tpu.concatenate %18, %19, %20, %21, %22, %23, %24, %25, %26 in 0 : vector<16x64xbf16>, vector<16x64xbf16>, vector<16x64xbf16>, vector<16x64xbf16>, vector<16x64xbf16>, vector<16x64xbf16>, vector<16x64xbf16>, vector<16x64xbf16>, vector<16x64xbf16> -> vector<144x64xbf16>
    %cst_10 = arith.constant dense<0.000000e+00> : vector<16x64xf32>
    %28 = tpu.matmul %4, %27, %cst_10 {dimension_numbers = #tpu.dot_dimension_numbers<[1], [0], [0], [1], [0, 0, 1, 1], [], []>} : vector<16x144xbf16>, vector<144x64xbf16>, vector<16x64xf32> -> vector<16x64xf32>
    %29 = vector.broadcast %5 : vector<16x1xf32> to vector<16x64xf32>
    %30 = arith.addf %28, %29 : vector<16x64xf32>
    %c0_11 = arith.constant 0 : index
    %c0_12 = arith.constant 0 : index
    %31 = vector.load %arg16[%c0_11, %c0_12] : memref<8x4xbf16, #tpu.memory_space<vmem>>, vector<8x4xbf16>
    %cst_13 = arith.constant 0.000000e+00 : bf16
    %32 = vector.broadcast %cst_13 : bf16 to vector<16x8xbf16>
    %33 = tpu.concatenate %1, %32 in 1 : vector<16x64xbf16>, vector<16x8xbf16> -> vector<16x72xbf16>
    %34 = vector.extract_strided_slice %33 {offsets = [0, 1], sizes = [16, 64], strides = [1, 1]} : vector<16x72xbf16> to vector<16x64xbf16>
    %35 = arith.maximumf %1, %34 : vector<16x64xbf16>
    %36 = tpu.concatenate %35, %32 in 1 : vector<16x64xbf16>, vector<16x8xbf16> -> vector<16x72xbf16>
    %37 = vector.extract_strided_slice %36 {offsets = [0, 8], sizes = [16, 64], strides = [1, 1]} : vector<16x72xbf16> to vector<16x64xbf16>
    %38 = arith.maximumf %35, %37 : vector<16x64xbf16>
    %39 = vector.extract_strided_slice %38 {offsets = [0, 0], sizes = [16, 8], strides = [1, 1]} : vector<16x64xbf16> to vector<16x8xbf16>
    %40 = vector.extract_strided_slice %38 {offsets = [0, 16], sizes = [16, 8], strides = [1, 1]} : vector<16x64xbf16> to vector<16x8xbf16>
    %41 = vector.extract_strided_slice %38 {offsets = [0, 32], sizes = [16, 8], strides = [1, 1]} : vector<16x64xbf16> to vector<16x8xbf16>
    %42 = vector.extract_strided_slice %38 {offsets = [0, 48], sizes = [16, 8], strides = [1, 1]} : vector<16x64xbf16> to vector<16x8xbf16>
    %43 = tpu.concatenate %39, %40, %41, %42 in 0 : vector<16x8xbf16>, vector<16x8xbf16>, vector<16x8xbf16>, vector<16x8xbf16> -> vector<64x8xbf16>
    %cst_14 = arith.constant dense<0.000000e+00> : vector<64x4xf32>
    %44 = tpu.matmul %43, %31, %cst_14 {dimension_numbers = #tpu.dot_dimension_numbers<[1], [0], [0], [1], [0, 0, 1, 1], [], []>} : vector<64x8xbf16>, vector<8x4xbf16>, vector<64x4xf32> -> vector<64x4xf32>
    %45 = vector.extract_strided_slice %44 {offsets = [0, 0], sizes = [16, 4], strides = [1, 1]} : vector<64x4xf32> to vector<16x4xf32>
    %46 = vector.extract_strided_slice %44 {offsets = [16, 0], sizes = [16, 4], strides = [1, 1]} : vector<64x4xf32> to vector<16x4xf32>
    %47 = vector.extract_strided_slice %44 {offsets = [32, 0], sizes = [16, 4], strides = [1, 1]} : vector<64x4xf32> to vector<16x4xf32>
    %48 = vector.extract_strided_slice %44 {offsets = [48, 0], sizes = [16, 4], strides = [1, 1]} : vector<64x4xf32> to vector<16x4xf32>
    %49 = tpu.concatenate %45, %46, %47, %48 in 1 : vector<16x4xf32>, vector<16x4xf32>, vector<16x4xf32>, vector<16x4xf32> -> vector<16x16xf32>
    %c0_15 = arith.constant 0 : index
    %c0_16 = arith.constant 0 : index
    %50 = vector.load %arg4[%c0_15, %c0_16] : memref<24x144xbf16, #tpu.memory_space<vmem>>, vector<24x144xbf16>
    %c0_17 = arith.constant 0 : index
    %c0_18 = arith.constant 0 : index
    %51 = vector.load %arg5[%c0_17, %c0_18] : memref<24x1xf32, #tpu.memory_space<vmem>>, vector<24x1xf32>
    %52 = arith.truncf %49 : vector<16x16xf32> to vector<16x16xbf16>
    %cst_19 = arith.constant 0.000000e+00 : bf16
    %53 = vector.broadcast %cst_19 : bf16 to vector<16x128xbf16>
    %54 = vector.extract_strided_slice %3 {offsets = [0, 0], sizes = [1, 16], strides = [1, 1]} : vector<2x16xf32> to vector<1x16xf32>
    %55 = arith.truncf %54 : vector<1x16xf32> to vector<1x16xbf16>
    %56 = vector.broadcast %55 : vector<1x16xbf16> to vector<16x16xbf16>
    %57 = arith.mulf %52, %56 : vector<16x16xbf16>
    %58 = vector.extract_strided_slice %3 {offsets = [1, 0], sizes = [1, 16], strides = [1, 1]} : vector<2x16xf32> to vector<1x16xf32>
    %59 = arith.truncf %58 : vector<1x16xf32> to vector<1x16xbf16>
    %60 = vector.broadcast %59 : vector<1x16xbf16> to vector<16x16xbf16>
    %61 = arith.mulf %52, %60 : vector<16x16xbf16>
    %62 = tpu.concatenate %53, %57, %53 in 1 : vector<16x128xbf16>, vector<16x16xbf16>, vector<16x128xbf16> -> vector<16x272xbf16>
    %63 = tpu.concatenate %53, %52, %53 in 1 : vector<16x128xbf16>, vector<16x16xbf16>, vector<16x128xbf16> -> vector<16x272xbf16>
    %64 = tpu.concatenate %53, %61, %53 in 1 : vector<16x128xbf16>, vector<16x16xbf16>, vector<16x128xbf16> -> vector<16x272xbf16>
    %65 = vector.extract_strided_slice %62 {offsets = [0, 123], sizes = [16, 16], strides = [1, 1]} : vector<16x272xbf16> to vector<16x16xbf16>
    %66 = vector.extract_strided_slice %63 {offsets = [0, 124], sizes = [16, 16], strides = [1, 1]} : vector<16x272xbf16> to vector<16x16xbf16>
    %67 = vector.extract_strided_slice %64 {offsets = [0, 125], sizes = [16, 16], strides = [1, 1]} : vector<16x272xbf16> to vector<16x16xbf16>
    %68 = vector.extract_strided_slice %62 {offsets = [0, 127], sizes = [16, 16], strides = [1, 1]} : vector<16x272xbf16> to vector<16x16xbf16>
    %69 = vector.extract_strided_slice %63 {offsets = [0, 128], sizes = [16, 16], strides = [1, 1]} : vector<16x272xbf16> to vector<16x16xbf16>
    %70 = vector.extract_strided_slice %64 {offsets = [0, 129], sizes = [16, 16], strides = [1, 1]} : vector<16x272xbf16> to vector<16x16xbf16>
    %71 = vector.extract_strided_slice %62 {offsets = [0, 131], sizes = [16, 16], strides = [1, 1]} : vector<16x272xbf16> to vector<16x16xbf16>
    %72 = vector.extract_strided_slice %63 {offsets = [0, 132], sizes = [16, 16], strides = [1, 1]} : vector<16x272xbf16> to vector<16x16xbf16>
    %73 = vector.extract_strided_slice %64 {offsets = [0, 133], sizes = [16, 16], strides = [1, 1]} : vector<16x272xbf16> to vector<16x16xbf16>
    %74 = tpu.concatenate %65, %66, %67, %68, %69, %70, %71, %72, %73 in 0 : vector<16x16xbf16>, vector<16x16xbf16>, vector<16x16xbf16>, vector<16x16xbf16>, vector<16x16xbf16>, vector<16x16xbf16>, vector<16x16xbf16>, vector<16x16xbf16>, vector<16x16xbf16> -> vector<144x16xbf16>
    %cst_20 = arith.constant dense<0.000000e+00> : vector<24x16xf32>
    %75 = tpu.matmul %50, %74, %cst_20 {dimension_numbers = #tpu.dot_dimension_numbers<[1], [0], [0], [1], [0, 0, 1, 1], [], []>} : vector<24x144xbf16>, vector<144x16xbf16>, vector<24x16xf32> -> vector<24x16xf32>
    %76 = vector.broadcast %51 : vector<24x1xf32> to vector<24x16xf32>
    %77 = arith.addf %75, %76 : vector<24x16xf32>
    %cst_21 = arith.constant 0.000000e+00 : f32
    %78 = vector.broadcast %cst_21 : f32 to vector<24x16xf32>
    %79 = arith.cmpf ogt, %77, %78 : vector<24x16xf32>
    %cst_22 = arith.constant 0.00999999977 : f32
    %80 = vector.broadcast %cst_22 : f32 to vector<24x16xf32>
    %81 = arith.mulf %80, %77 : vector<24x16xf32>
    %82 = arith.select %79, %77, %81 : vector<24x16xi1>, vector<24x16xf32>
    %c0_23 = arith.constant 0 : index
    %c0_24 = arith.constant 0 : index
    %83 = vector.load %arg6[%c0_23, %c0_24] : memref<24x216xbf16, #tpu.memory_space<vmem>>, vector<24x216xbf16>
    %c0_25 = arith.constant 0 : index
    %c0_26 = arith.constant 0 : index
    %84 = vector.load %arg7[%c0_25, %c0_26] : memref<24x1xf32, #tpu.memory_space<vmem>>, vector<24x1xf32>
    %85 = arith.truncf %82 : vector<24x16xf32> to vector<24x16xbf16>
    %cst_27 = arith.constant 0.000000e+00 : bf16
    %86 = vector.broadcast %cst_27 : bf16 to vector<24x128xbf16>
    %87 = vector.extract_strided_slice %3 {offsets = [0, 0], sizes = [1, 16], strides = [1, 1]} : vector<2x16xf32> to vector<1x16xf32>
    %88 = arith.truncf %87 : vector<1x16xf32> to vector<1x16xbf16>
    %89 = vector.broadcast %88 : vector<1x16xbf16> to vector<24x16xbf16>
    %90 = arith.mulf %85, %89 : vector<24x16xbf16>
    %91 = vector.extract_strided_slice %3 {offsets = [1, 0], sizes = [1, 16], strides = [1, 1]} : vector<2x16xf32> to vector<1x16xf32>
    %92 = arith.truncf %91 : vector<1x16xf32> to vector<1x16xbf16>
    %93 = vector.broadcast %92 : vector<1x16xbf16> to vector<24x16xbf16>
    %94 = arith.mulf %85, %93 : vector<24x16xbf16>
    %95 = tpu.concatenate %86, %90, %86 in 1 : vector<24x128xbf16>, vector<24x16xbf16>, vector<24x128xbf16> -> vector<24x272xbf16>
    %96 = tpu.concatenate %86, %85, %86 in 1 : vector<24x128xbf16>, vector<24x16xbf16>, vector<24x128xbf16> -> vector<24x272xbf16>
    %97 = tpu.concatenate %86, %94, %86 in 1 : vector<24x128xbf16>, vector<24x16xbf16>, vector<24x128xbf16> -> vector<24x272xbf16>
    %98 = vector.extract_strided_slice %95 {offsets = [0, 123], sizes = [24, 16], strides = [1, 1]} : vector<24x272xbf16> to vector<24x16xbf16>
    %99 = vector.extract_strided_slice %96 {offsets = [0, 124], sizes = [24, 16], strides = [1, 1]} : vector<24x272xbf16> to vector<24x16xbf16>
    %100 = vector.extract_strided_slice %97 {offsets = [0, 125], sizes = [24, 16], strides = [1, 1]} : vector<24x272xbf16> to vector<24x16xbf16>
    %101 = vector.extract_strided_slice %95 {offsets = [0, 127], sizes = [24, 16], strides = [1, 1]} : vector<24x272xbf16> to vector<24x16xbf16>
    %102 = vector.extract_strided_slice %96 {offsets = [0, 128], sizes = [24, 16], strides = [1, 1]} : vector<24x272xbf16> to vector<24x16xbf16>
    %103 = vector.extract_strided_slice %97 {offsets = [0, 129], sizes = [24, 16], strides = [1, 1]} : vector<24x272xbf16> to vector<24x16xbf16>
    %104 = vector.extract_strided_slice %95 {offsets = [0, 131], sizes = [24, 16], strides = [1, 1]} : vector<24x272xbf16> to vector<24x16xbf16>
    %105 = vector.extract_strided_slice %96 {offsets = [0, 132], sizes = [24, 16], strides = [1, 1]} : vector<24x272xbf16> to vector<24x16xbf16>
    %106 = vector.extract_strided_slice %97 {offsets = [0, 133], sizes = [24, 16], strides = [1, 1]} : vector<24x272xbf16> to vector<24x16xbf16>
    %107 = tpu.concatenate %98, %99, %100, %101, %102, %103, %104, %105, %106 in 0 : vector<24x16xbf16>, vector<24x16xbf16>, vector<24x16xbf16>, vector<24x16xbf16>, vector<24x16xbf16>, vector<24x16xbf16>, vector<24x16xbf16>, vector<24x16xbf16>, vector<24x16xbf16> -> vector<216x16xbf16>
    %cst_28 = arith.constant dense<0.000000e+00> : vector<24x16xf32>
    %108 = tpu.matmul %83, %107, %cst_28 {dimension_numbers = #tpu.dot_dimension_numbers<[1], [0], [0], [1], [0, 0, 1, 1], [], []>} : vector<24x216xbf16>, vector<216x16xbf16>, vector<24x16xf32> -> vector<24x16xf32>
    %109 = vector.broadcast %84 : vector<24x1xf32> to vector<24x16xf32>
    %110 = arith.addf %108, %109 : vector<24x16xf32>
    %cst_29 = arith.constant 0.000000e+00 : f32
    %111 = vector.broadcast %cst_29 : f32 to vector<24x16xf32>
    %112 = arith.cmpf ogt, %110, %111 : vector<24x16xf32>
    %cst_30 = arith.constant 0.00999999977 : f32
    %113 = vector.broadcast %cst_30 : f32 to vector<24x16xf32>
    %114 = arith.mulf %113, %110 : vector<24x16xf32>
    %115 = arith.select %112, %110, %114 : vector<24x16xi1>, vector<24x16xf32>
    %c0_31 = arith.constant 0 : index
    %c0_32 = arith.constant 0 : index
    %c0_33 = arith.constant 0 : index
    %116 = vector.load %arg19[%c0_31, %c0_32, %c0_33] : memref<1x24x16xf32, #tpu.memory_space<vmem>>, vector<1x24x16xf32>
    %117 = vector.shape_cast %116 : vector<1x24x16xf32> to vector<24x16xf32>
    %118 = vector.shape_cast %115 : vector<24x16xf32> to vector<1x24x16xf32>
    tpu.vector_store %arg19[%c0_31, %c0_32, %c0_33], %118 {strides = array<i32>} : memref<1x24x16xf32, #tpu.memory_space<vmem>>, vector<1x24x16xf32>,
    %c0_34 = arith.constant 0 : index
    %c0_35 = arith.constant 0 : index
    %119 = vector.load %arg8[%c0_34, %c0_35] : memref<16x216xbf16, #tpu.memory_space<vmem>>, vector<16x216xbf16>
    %c0_36 = arith.constant 0 : index
    %c0_37 = arith.constant 0 : index
    %120 = vector.load %arg9[%c0_36, %c0_37] : memref<16x1xf32, #tpu.memory_space<vmem>>, vector<16x1xf32>
    %121 = arith.truncf %115 : vector<24x16xf32> to vector<24x16xbf16>
    %cst_38 = arith.constant 0.000000e+00 : bf16
    %122 = vector.broadcast %cst_38 : bf16 to vector<24x128xbf16>
    %123 = vector.extract_strided_slice %3 {offsets = [0, 0], sizes = [1, 16], strides = [1, 1]} : vector<2x16xf32> to vector<1x16xf32>
    %124 = arith.truncf %123 : vector<1x16xf32> to vector<1x16xbf16>
    %125 = vector.broadcast %124 : vector<1x16xbf16> to vector<24x16xbf16>
    %126 = arith.mulf %121, %125 : vector<24x16xbf16>
    %127 = vector.extract_strided_slice %3 {offsets = [1, 0], sizes = [1, 16], strides = [1, 1]} : vector<2x16xf32> to vector<1x16xf32>
    %128 = arith.truncf %127 : vector<1x16xf32> to vector<1x16xbf16>
    %129 = vector.broadcast %128 : vector<1x16xbf16> to vector<24x16xbf16>
    %130 = arith.mulf %121, %129 : vector<24x16xbf16>
    %131 = tpu.concatenate %122, %126, %122 in 1 : vector<24x128xbf16>, vector<24x16xbf16>, vector<24x128xbf16> -> vector<24x272xbf16>
    %132 = tpu.concatenate %122, %121, %122 in 1 : vector<24x128xbf16>, vector<24x16xbf16>, vector<24x128xbf16> -> vector<24x272xbf16>
    %133 = tpu.concatenate %122, %130, %122 in 1 : vector<24x128xbf16>, vector<24x16xbf16>, vector<24x128xbf16> -> vector<24x272xbf16>
    %134 = vector.extract_strided_slice %131 {offsets = [0, 123], sizes = [24, 16], strides = [1, 1]} : vector<24x272xbf16> to vector<24x16xbf16>
    %135 = vector.extract_strided_slice %132 {offsets = [0, 124], sizes = [24, 16], strides = [1, 1]} : vector<24x272xbf16> to vector<24x16xbf16>
    %136 = vector.extract_strided_slice %133 {offsets = [0, 125], sizes = [24, 16], strides = [1, 1]} : vector<24x272xbf16> to vector<24x16xbf16>
    %137 = vector.extract_strided_slice %131 {offsets = [0, 127], sizes = [24, 16], strides = [1, 1]} : vector<24x272xbf16> to vector<24x16xbf16>
    %138 = vector.extract_strided_slice %132 {offsets = [0, 128], sizes = [24, 16], strides = [1, 1]} : vector<24x272xbf16> to vector<24x16xbf16>
    %139 = vector.extract_strided_slice %133 {offsets = [0, 129], sizes = [24, 16], strides = [1, 1]} : vector<24x272xbf16> to vector<24x16xbf16>
    %140 = vector.extract_strided_slice %131 {offsets = [0, 131], sizes = [24, 16], strides = [1, 1]} : vector<24x272xbf16> to vector<24x16xbf16>
    %141 = vector.extract_strided_slice %132 {offsets = [0, 132], sizes = [24, 16], strides = [1, 1]} : vector<24x272xbf16> to vector<24x16xbf16>
    %142 = vector.extract_strided_slice %133 {offsets = [0, 133], sizes = [24, 16], strides = [1, 1]} : vector<24x272xbf16> to vector<24x16xbf16>
    %143 = tpu.concatenate %134, %135, %136, %137, %138, %139, %140, %141, %142 in 0 : vector<24x16xbf16>, vector<24x16xbf16>, vector<24x16xbf16>, vector<24x16xbf16>, vector<24x16xbf16>, vector<24x16xbf16>, vector<24x16xbf16>, vector<24x16xbf16>, vector<24x16xbf16> -> vector<216x16xbf16>
    %cst_39 = arith.constant dense<0.000000e+00> : vector<16x16xf32>
    %144 = tpu.matmul %119, %143, %cst_39 {dimension_numbers = #tpu.dot_dimension_numbers<[1], [0], [0], [1], [0, 0, 1, 1], [], []>} : vector<16x216xbf16>, vector<216x16xbf16>, vector<16x16xf32> -> vector<16x16xf32>
    %145 = vector.broadcast %120 : vector<16x1xf32> to vector<16x16xf32>
    %146 = arith.addf %144, %145 : vector<16x16xf32>
    %cst_40 = arith.constant 0.000000e+00 : f32
    %147 = vector.broadcast %cst_40 : f32 to vector<16x16xf32>
    %148 = arith.cmpf ogt, %146, %147 : vector<16x16xf32>
    %cst_41 = arith.constant 0.00999999977 : f32
    %149 = vector.broadcast %cst_41 : f32 to vector<16x16xf32>
    %150 = arith.mulf %149, %146 : vector<16x16xf32>
    %151 = arith.select %148, %146, %150 : vector<16x16xi1>, vector<16x16xf32>
    %c0_42 = arith.constant 0 : index
    %c0_43 = arith.constant 0 : index
    %152 = vector.load %arg17[%c0_42, %c0_43] : memref<4x8xbf16, #tpu.memory_space<vmem>>, vector<4x8xbf16>
    %153 = vector.extract_strided_slice %151 {offsets = [0, 0], sizes = [16, 4], strides = [1, 1]} : vector<16x16xf32> to vector<16x4xf32>
    %154 = vector.extract_strided_slice %151 {offsets = [0, 4], sizes = [16, 4], strides = [1, 1]} : vector<16x16xf32> to vector<16x4xf32>
    %155 = vector.extract_strided_slice %151 {offsets = [0, 8], sizes = [16, 4], strides = [1, 1]} : vector<16x16xf32> to vector<16x4xf32>
    %156 = vector.extract_strided_slice %151 {offsets = [0, 12], sizes = [16, 4], strides = [1, 1]} : vector<16x16xf32> to vector<16x4xf32>
    %157 = tpu.concatenate %153, %154, %155, %156 in 0 : vector<16x4xf32>, vector<16x4xf32>, vector<16x4xf32>, vector<16x4xf32> -> vector<64x4xf32>
    %158 = arith.truncf %157 : vector<64x4xf32> to vector<64x4xbf16>
    %cst_44 = arith.constant dense<0.000000e+00> : vector<64x8xf32>
    %159 = tpu.matmul %158, %152, %cst_44 {dimension_numbers = #tpu.dot_dimension_numbers<[1], [0], [0], [1], [0, 0, 1, 1], [], []>} : vector<64x4xbf16>, vector<4x8xbf16>, vector<64x8xf32> -> vector<64x8xf32>
    %160 = vector.extract_strided_slice %159 {offsets = [0, 0], sizes = [16, 8], strides = [1, 1]} : vector<64x8xf32> to vector<16x8xf32>
    %161 = vector.extract_strided_slice %159 {offsets = [16, 0], sizes = [16, 8], strides = [1, 1]} : vector<64x8xf32> to vector<16x8xf32>
    %162 = vector.extract_strided_slice %159 {offsets = [32, 0], sizes = [16, 8], strides = [1, 1]} : vector<64x8xf32> to vector<16x8xf32>
    %163 = vector.extract_strided_slice %159 {offsets = [48, 0], sizes = [16, 8], strides = [1, 1]} : vector<64x8xf32> to vector<16x8xf32>
    %164 = tpu.concatenate %160, %160, %161, %161, %162, %162, %163, %163 in 1 : vector<16x8xf32>, vector<16x8xf32>, vector<16x8xf32>, vector<16x8xf32>, vector<16x8xf32>, vector<16x8xf32>, vector<16x8xf32>, vector<16x8xf32> -> vector<16x64xf32>
    %c0_45 = arith.constant 0 : index
    %c0_46 = arith.constant 0 : index
    %165 = vector.load %arg10[%c0_45, %c0_46] : memref<16x144xbf16, #tpu.memory_space<vmem>>, vector<16x144xbf16>
    %c0_47 = arith.constant 0 : index
    %c0_48 = arith.constant 0 : index
    %166 = vector.load %arg11[%c0_47, %c0_48] : memref<16x1xf32, #tpu.memory_space<vmem>>, vector<16x1xf32>
    %167 = arith.truncf %164 : vector<16x64xf32> to vector<16x64xbf16>
    %cst_49 = arith.constant 0.000000e+00 : bf16
    %168 = vector.broadcast %cst_49 : bf16 to vector<16x128xbf16>
    %169 = vector.extract_strided_slice %2 {offsets = [0, 0], sizes = [1, 64], strides = [1, 1]} : vector<2x64xf32> to vector<1x64xf32>
    %170 = arith.truncf %169 : vector<1x64xf32> to vector<1x64xbf16>
    %171 = vector.broadcast %170 : vector<1x64xbf16> to vector<16x64xbf16>
    %172 = arith.mulf %167, %171 : vector<16x64xbf16>
    %173 = vector.extract_strided_slice %2 {offsets = [1, 0], sizes = [1, 64], strides = [1, 1]} : vector<2x64xf32> to vector<1x64xf32>
    %174 = arith.truncf %173 : vector<1x64xf32> to vector<1x64xbf16>
    %175 = vector.broadcast %174 : vector<1x64xbf16> to vector<16x64xbf16>
    %176 = arith.mulf %167, %175 : vector<16x64xbf16>
    %177 = tpu.concatenate %168, %172, %168 in 1 : vector<16x128xbf16>, vector<16x64xbf16>, vector<16x128xbf16> -> vector<16x320xbf16>
    %178 = tpu.concatenate %168, %167, %168 in 1 : vector<16x128xbf16>, vector<16x64xbf16>, vector<16x128xbf16> -> vector<16x320xbf16>
    %179 = tpu.concatenate %168, %176, %168 in 1 : vector<16x128xbf16>, vector<16x64xbf16>, vector<16x128xbf16> -> vector<16x320xbf16>
    %180 = vector.extract_strided_slice %177 {offsets = [0, 119], sizes = [16, 64], strides = [1, 1]} : vector<16x320xbf16> to vector<16x64xbf16>
    %181 = vector.extract_strided_slice %178 {offsets = [0, 120], sizes = [16, 64], strides = [1, 1]} : vector<16x320xbf16> to vector<16x64xbf16>
    %182 = vector.extract_strided_slice %179 {offsets = [0, 121], sizes = [16, 64], strides = [1, 1]} : vector<16x320xbf16> to vector<16x64xbf16>
    %183 = vector.extract_strided_slice %177 {offsets = [0, 127], sizes = [16, 64], strides = [1, 1]} : vector<16x320xbf16> to vector<16x64xbf16>
    %184 = vector.extract_strided_slice %178 {offsets = [0, 128], sizes = [16, 64], strides = [1, 1]} : vector<16x320xbf16> to vector<16x64xbf16>
    %185 = vector.extract_strided_slice %179 {offsets = [0, 129], sizes = [16, 64], strides = [1, 1]} : vector<16x320xbf16> to vector<16x64xbf16>
    %186 = vector.extract_strided_slice %177 {offsets = [0, 135], sizes = [16, 64], strides = [1, 1]} : vector<16x320xbf16> to vector<16x64xbf16>
    %187 = vector.extract_strided_slice %178 {offsets = [0, 136], sizes = [16, 64], strides = [1, 1]} : vector<16x320xbf16> to vector<16x64xbf16>
    %188 = vector.extract_strided_slice %179 {offsets = [0, 137], sizes = [16, 64], strides = [1, 1]} : vector<16x320xbf16> to vector<16x64xbf16>
    %189 = tpu.concatenate %180, %181, %182, %183, %184, %185, %186, %187, %188 in 0 : vector<16x64xbf16>, vector<16x64xbf16>, vector<16x64xbf16>, vector<16x64xbf16>, vector<16x64xbf16>, vector<16x64xbf16>, vector<16x64xbf16>, vector<16x64xbf16>, vector<16x64xbf16> -> vector<144x64xbf16>
    %cst_50 = arith.constant dense<0.000000e+00> : vector<16x64xf32>
    %190 = tpu.matmul %165, %189, %cst_50 {dimension_numbers = #tpu.dot_dimension_numbers<[1], [0], [0], [1], [0, 0, 1, 1], [], []>} : vector<16x144xbf16>, vector<144x64xbf16>, vector<16x64xf32> -> vector<16x64xf32>
    %191 = vector.broadcast %166 : vector<16x1xf32> to vector<16x64xf32>
    %192 = arith.addf %190, %191 : vector<16x64xf32>
    %cst_51 = arith.constant 0.000000e+00 : f32
    %193 = vector.broadcast %cst_51 : f32 to vector<16x64xf32>
    %194 = arith.cmpf ogt, %192, %193 : vector<16x64xf32>
    %cst_52 = arith.constant 0.00999999977 : f32
    %195 = vector.broadcast %cst_52 : f32 to vector<16x64xf32>
    %196 = arith.mulf %195, %192 : vector<16x64xf32>
    %197 = arith.select %194, %192, %196 : vector<16x64xi1>, vector<16x64xf32>
    %c0_53 = arith.constant 0 : index
    %c0_54 = arith.constant 0 : index
    %198 = vector.load %arg12[%c0_53, %c0_54] : memref<16x144xbf16, #tpu.memory_space<vmem>>, vector<16x144xbf16>
    %c0_55 = arith.constant 0 : index
    %c0_56 = arith.constant 0 : index
    %199 = vector.load %arg13[%c0_55, %c0_56] : memref<16x1xf32, #tpu.memory_space<vmem>>, vector<16x1xf32>
    %200 = arith.truncf %197 : vector<16x64xf32> to vector<16x64xbf16>
    %cst_57 = arith.constant 0.000000e+00 : bf16
    %201 = vector.broadcast %cst_57 : bf16 to vector<16x128xbf16>
    %202 = vector.extract_strided_slice %2 {offsets = [0, 0], sizes = [1, 64], strides = [1, 1]} : vector<2x64xf32> to vector<1x64xf32>
    %203 = arith.truncf %202 : vector<1x64xf32> to vector<1x64xbf16>
    %204 = vector.broadcast %203 : vector<1x64xbf16> to vector<16x64xbf16>
    %205 = arith.mulf %200, %204 : vector<16x64xbf16>
    %206 = vector.extract_strided_slice %2 {offsets = [1, 0], sizes = [1, 64], strides = [1, 1]} : vector<2x64xf32> to vector<1x64xf32>
    %207 = arith.truncf %206 : vector<1x64xf32> to vector<1x64xbf16>
    %208 = vector.broadcast %207 : vector<1x64xbf16> to vector<16x64xbf16>
    %209 = arith.mulf %200, %208 : vector<16x64xbf16>
    %210 = tpu.concatenate %201, %205, %201 in 1 : vector<16x128xbf16>, vector<16x64xbf16>, vector<16x128xbf16> -> vector<16x320xbf16>
    %211 = tpu.concatenate %201, %200, %201 in 1 : vector<16x128xbf16>, vector<16x64xbf16>, vector<16x128xbf16> -> vector<16x320xbf16>
    %212 = tpu.concatenate %201, %209, %201 in 1 : vector<16x128xbf16>, vector<16x64xbf16>, vector<16x128xbf16> -> vector<16x320xbf16>
    %213 = vector.extract_strided_slice %210 {offsets = [0, 119], sizes = [16, 64], strides = [1, 1]} : vector<16x320xbf16> to vector<16x64xbf16>
    %214 = vector.extract_strided_slice %211 {offsets = [0, 120], sizes = [16, 64], strides = [1, 1]} : vector<16x320xbf16> to vector<16x64xbf16>
    %215 = vector.extract_strided_slice %212 {offsets = [0, 121], sizes = [16, 64], strides = [1, 1]} : vector<16x320xbf16> to vector<16x64xbf16>
    %216 = vector.extract_strided_slice %210 {offsets = [0, 127], sizes = [16, 64], strides = [1, 1]} : vector<16x320xbf16> to vector<16x64xbf16>
    %217 = vector.extract_strided_slice %211 {offsets = [0, 128], sizes = [16, 64], strides = [1, 1]} : vector<16x320xbf16> to vector<16x64xbf16>
    %218 = vector.extract_strided_slice %212 {offsets = [0, 129], sizes = [16, 64], strides = [1, 1]} : vector<16x320xbf16> to vector<16x64xbf16>
    %219 = vector.extract_strided_slice %210 {offsets = [0, 135], sizes = [16, 64], strides = [1, 1]} : vector<16x320xbf16> to vector<16x64xbf16>
    %220 = vector.extract_strided_slice %211 {offsets = [0, 136], sizes = [16, 64], strides = [1, 1]} : vector<16x320xbf16> to vector<16x64xbf16>
    %221 = vector.extract_strided_slice %212 {offsets = [0, 137], sizes = [16, 64], strides = [1, 1]} : vector<16x320xbf16> to vector<16x64xbf16>
    %222 = tpu.concatenate %213, %214, %215, %216, %217, %218, %219, %220, %221 in 0 : vector<16x64xbf16>, vector<16x64xbf16>, vector<16x64xbf16>, vector<16x64xbf16>, vector<16x64xbf16>, vector<16x64xbf16>, vector<16x64xbf16>, vector<16x64xbf16>, vector<16x64xbf16> -> vector<144x64xbf16>
    %cst_58 = arith.constant dense<0.000000e+00> : vector<16x64xf32>
    %223 = tpu.matmul %198, %222, %cst_58 {dimension_numbers = #tpu.dot_dimension_numbers<[1], [0], [0], [1], [0, 0, 1, 1], [], []>} : vector<16x144xbf16>, vector<144x64xbf16>, vector<16x64xf32> -> vector<16x64xf32>
    %224 = vector.broadcast %199 : vector<16x1xf32> to vector<16x64xf32>
    %225 = arith.addf %223, %224 : vector<16x64xf32>
    %226 = arith.addf %30, %225 : vector<16x64xf32>
    %cst_59 = arith.constant 0.000000e+00 : f32
    %227 = vector.broadcast %cst_59 : f32 to vector<16x64xf32>
    %228 = arith.cmpf ogt, %226, %227 : vector<16x64xf32>
    %cst_60 = arith.constant 0.00999999977 : f32
    %229 = vector.broadcast %cst_60 : f32 to vector<16x64xf32>
    %230 = arith.mulf %229, %226 : vector<16x64xf32>
    %231 = arith.select %228, %226, %230 : vector<16x64xi1>, vector<16x64xf32>
    %c0_61 = arith.constant 0 : index
    %c0_62 = arith.constant 0 : index
    %c0_63 = arith.constant 0 : index
    %232 = vector.load %arg18[%c0_61, %c0_62, %c0_63] : memref<1x16x64xf32, #tpu.memory_space<vmem>>, vector<1x16x64xf32>
    %233 = vector.shape_cast %232 : vector<1x16x64xf32> to vector<16x64xf32>
    %234 = vector.shape_cast %231 : vector<16x64xf32> to vector<1x16x64xf32>
    tpu.vector_store %arg18[%c0_61, %c0_62, %c0_63], %234 {strides = array<i32>} : memref<1x16x64xf32, #tpu.memory_space<vmem>>, vector<1x16x64xf32>,
    return
  }
  func.func @transform_0(%arg0: i32) -> (i32, i32, i32) {
    %c0_i32 = arith.constant 0 : i32
    %c0_i32_0 = arith.constant 0 : i32
    %c0_i32_1 = arith.constant 0 : i32
    return %arg0, %c0_i32, %c0_i32_0 : i32, i32, i32
  }
  func.func @transform_1(%arg0: i32) -> (i32, i32) {
    %c0_i32 = arith.constant 0 : i32
    %c0_i32_0 = arith.constant 0 : i32
    %c0_i32_1 = arith.constant 0 : i32
    return %c0_i32, %c0_i32_0 : i32, i32
  }
  func.func @transform_2(%arg0: i32) -> (i32, i32) {
    %c0_i32 = arith.constant 0 : i32
    %c0_i32_0 = arith.constant 0 : i32
    %c0_i32_1 = arith.constant 0 : i32
    return %c0_i32, %c0_i32_0 : i32, i32
  }
  func.func @transform_3(%arg0: i32) -> (i32, i32) {
    %c0_i32 = arith.constant 0 : i32
    %c0_i32_0 = arith.constant 0 : i32
    %c0_i32_1 = arith.constant 0 : i32
    return %c0_i32, %c0_i32_0 : i32, i32
  }
  func.func @transform_4(%arg0: i32) -> (i32, i32) {
    %c0_i32 = arith.constant 0 : i32
    %c0_i32_0 = arith.constant 0 : i32
    %c0_i32_1 = arith.constant 0 : i32
    return %c0_i32, %c0_i32_0 : i32, i32
  }
  func.func @transform_5(%arg0: i32) -> (i32, i32) {
    %c0_i32 = arith.constant 0 : i32
    %c0_i32_0 = arith.constant 0 : i32
    %c0_i32_1 = arith.constant 0 : i32
    return %c0_i32, %c0_i32_0 : i32, i32
  }
  func.func @transform_6(%arg0: i32) -> (i32, i32) {
    %c0_i32 = arith.constant 0 : i32
    %c0_i32_0 = arith.constant 0 : i32
    %c0_i32_1 = arith.constant 0 : i32
    return %c0_i32, %c0_i32_0 : i32, i32
  }
  func.func @transform_7(%arg0: i32) -> (i32, i32) {
    %c0_i32 = arith.constant 0 : i32
    %c0_i32_0 = arith.constant 0 : i32
    %c0_i32_1 = arith.constant 0 : i32
    return %c0_i32, %c0_i32_0 : i32, i32
  }
  func.func @transform_8(%arg0: i32) -> (i32, i32) {
    %c0_i32 = arith.constant 0 : i32
    %c0_i32_0 = arith.constant 0 : i32
    %c0_i32_1 = arith.constant 0 : i32
    return %c0_i32, %c0_i32_0 : i32, i32
  }
  func.func @transform_9(%arg0: i32) -> (i32, i32) {
    %c0_i32 = arith.constant 0 : i32
    %c0_i32_0 = arith.constant 0 : i32
    %c0_i32_1 = arith.constant 0 : i32
    return %c0_i32, %c0_i32_0 : i32, i32
  }
  func.func @transform_10(%arg0: i32) -> (i32, i32) {
    %c0_i32 = arith.constant 0 : i32
    %c0_i32_0 = arith.constant 0 : i32
    %c0_i32_1 = arith.constant 0 : i32
    return %c0_i32, %c0_i32_0 : i32, i32
  }
  func.func @transform_11(%arg0: i32) -> (i32, i32) {
    %c0_i32 = arith.constant 0 : i32
    %c0_i32_0 = arith.constant 0 : i32
    %c0_i32_1 = arith.constant 0 : i32
    return %c0_i32, %c0_i32_0 : i32, i32
  }
  func.func @transform_12(%arg0: i32) -> (i32, i32) {
    %c0_i32 = arith.constant 0 : i32
    %c0_i32_0 = arith.constant 0 : i32
    %c0_i32_1 = arith.constant 0 : i32
    return %c0_i32, %c0_i32_0 : i32, i32
  }
  func.func @transform_13(%arg0: i32) -> (i32, i32) {
    %c0_i32 = arith.constant 0 : i32
    %c0_i32_0 = arith.constant 0 : i32
    %c0_i32_1 = arith.constant 0 : i32
    return %c0_i32, %c0_i32_0 : i32, i32
  }
  func.func @transform_14(%arg0: i32) -> (i32, i32) {
    %c0_i32 = arith.constant 0 : i32
    %c0_i32_0 = arith.constant 0 : i32
    %c0_i32_1 = arith.constant 0 : i32
    return %c0_i32, %c0_i32_0 : i32, i32
  }
  func.func @transform_15(%arg0: i32) -> (i32, i32) {
    %c0_i32 = arith.constant 0 : i32
    %c0_i32_0 = arith.constant 0 : i32
    %c0_i32_1 = arith.constant 0 : i32
    return %c0_i32, %c0_i32_0 : i32, i32
  }
  func.func @transform_16(%arg0: i32) -> (i32, i32) {
    %c0_i32 = arith.constant 0 : i32
    %c0_i32_0 = arith.constant 0 : i32
    %c0_i32_1 = arith.constant 0 : i32
    return %c0_i32, %c0_i32_0 : i32, i32
  }
  func.func @transform_17(%arg0: i32) -> (i32, i32, i32) {
    %c0_i32 = arith.constant 0 : i32
    %c0_i32_0 = arith.constant 0 : i32
    %c0_i32_1 = arith.constant 0 : i32
    return %arg0, %c0_i32, %c0_i32_0 : i32, i32, i32
  }
  func.func @transform_18(%arg0: i32) -> (i32, i32, i32) {
    %c0_i32 = arith.constant 0 : i32
    %c0_i32_0 = arith.constant 0 : i32
    %c0_i32_1 = arith.constant 0 : i32
    return %arg0, %c0_i32, %c0_i32_0 : i32, i32, i32
  }
}

</mosaic_0001>

<llo_original>
// kernel: hourglass_forward.3
$region0: #{hourglass_forward.3}
  #allocation0 [shape = 'u32[]', space=smem, size = 0x4, offset = 0x4, fixed_abs, tag = 'smem constant byte address 0x4 - core index']
  #allocation1 [shape = 'u32[144,128]{1,0:T(1,128)}', space=vmem, size = 0x12000, scoped, tag = 'internal scratch']
  %s0 = inlined_call_operand.vmem [shape: f32[2,8,256], index: 0, kind: input, shape index: {}]
  %s1 = inlined_call_operand.vmem [shape: bf16[8,72], index: 1, kind: input, shape index: {}]
  %s2 = inlined_call_operand.vmem [shape: f32[8,1], index: 2, kind: input, shape index: {}]
  %s3 = inlined_call_operand.vmem [shape: bf16[16,72], index: 3, kind: input, shape index: {}]
  %s4 = inlined_call_operand.vmem [shape: f32[16,1], index: 4, kind: input, shape index: {}]
  %s5 = inlined_call_operand.vmem [shape: f32[2,256], index: 5, kind: input, shape index: {}]
  %s6 = inlined_call_operand.vmem [shape: f32[2,64], index: 6, kind: input, shape index: {}]
  %s7 = inlined_call_operand.vmem [shape: bf16[16,8], index: 7, kind: input, shape index: {}]
  %s8 = inlined_call_operand.vmem [shape: f32[2,8,256], index: 8, kind: output, shape index: {0}]
  %s9 = inlined_call_operand.vmem [shape: bf16[2,16,64], index: 9, kind: output, shape index: {1}]
  %10 = xla_tuple %s8, %s9
  %s11 = sld [smem:[#allocation0]]
  $region73: #{hourglass_forward.3} parent=0
    _
  %s13 = ssub.s32 1, %s11
  %s14 = scalar_select 0, %s13, %s11
  loop: start=0, step=1, limit=4
  $region2: #{hourglass_forward.3} parent=0 // loop_pre_header
    _
  $region3: #{hourglass_forward.3} parent=0 // loop_header
    %s16 = sphi 0, %s20
    %p17 = scmp.ge.s32.totalorder %s16, 4
    %s26 = sphi 0, %s28
    %s29 = sphi 0, %s26
    %s30 = sphi 0, %s29
    %s46 = sphi 0, %s30
    %s50 = sphi 0, %s50
    %s52 = sphi 0, %s50
    %s53 = sphi 0, %s52
    %s67 = sphi 0, %s53
    %s71 = sphi 0, %s71
    %s73 = sphi 0, %s71
    %s74 = sphi 0, %s73
    %s88 = sphi 0, %s74
    %s92 = sphi 0, %s92
    %s94 = sphi 0, %s92
    %s95 = sphi 0, %s94
    %s109 = sphi 0, %s95
    %s113 = sphi 0, %s113
    %s115 = sphi 0, %s113
    %s116 = sphi 0, %s115
    %s130 = sphi 0, %s116
    %s134 = sphi 0, %s134
    %s136 = sphi 0, %s134
    %s137 = sphi 0, %s136
    %s151 = sphi 0, %s137
    %s155 = sphi 0, %s155
    %s157 = sphi 0, %s155
    %s158 = sphi 0, %s157
    %s172 = sphi 0, %s158
    %s176 = sphi 0, %s176
    %s178 = sphi 0, %s176
    %s179 = sphi 0, %s178
    %s193 = sphi 0, %s179
    %s199 = sphi 0, %s201
    %s202 = sphi 0, %s199
    %s203 = sphi 0, %s202
    %s219 = sphi 0, %s203
    %s225 = sphi 0, %s227
    %s228 = sphi 0, %s225
    %s229 = sphi 0, %s228
    %s245 = sphi 0, %s229
  $region4: #{hourglass_forward.3} parent=0 // loop_header_branch
    %19 = sbr.rel (%p17) target = $region8
  $region5: #{hourglass_forward.3} parent=0 // loop_body
    %s21 = ssub.s32 %s16, 1
    %s22 = ssub.s32 %s16, 2
    %s23 = sadd.s32 %s16, 1
    %s24 = ssub.s32 %s16, %s23
    %p25 = scmp.eq.s32.totalorder %s24, 0
    %s27 = sadd.s32 %s26, 1
    %s28 = scalar_select %p25, %s26, %s27
    %p31 = pneg %p25
    %p32 = scmp.eq.s32.totalorder %s16, 1
    %p33 = por %p31, %p32
    %p34 = scmp.ne.s32.totalorder %s26, %s29
    %p35 = scmp.eq.s32.totalorder %s16, 0
    %p36 = por %p34, %p35
    %p37 = scmp.ne.s32.totalorder %s26, %s29
    %p38 = scmp.eq.s32.totalorder %s21, 1
    %p39 = por %p37, %p38
    %p40 = scmp.ne.s32.totalorder %s29, %s30
    %p41 = scmp.eq.s32.totalorder %s21, 0
    %p42 = por %p40, %p41
    %p43 = scmp.ne.s32.totalorder %s29, %s30
    %p44 = scmp.eq.s32.totalorder %s22, 1
    %p45 = por %p43, %p44
    %p47 = scmp.ne.s32.totalorder %s30, %s46
    %p48 = scmp.eq.s32.totalorder %s22, 0
    %p49 = por %p47, %p48
    %s51 = sadd.s32 %s50, 1
    %p54 = scmp.eq.s32.totalorder %s16, 1
    %p55 = scmp.ne.s32.totalorder %s50, %s52
    %p56 = scmp.eq.s32.totalorder %s16, 0
    %p57 = por %p55, %p56
    %p58 = scmp.ne.s32.totalorder %s50, %s52
    %p59 = scmp.eq.s32.totalorder %s21, 1
    %p60 = por %p58, %p59
    %p61 = scmp.ne.s32.totalorder %s52, %s53
    %p62 = scmp.eq.s32.totalorder %s21, 0
    %p63 = por %p61, %p62
    %p64 = scmp.ne.s32.totalorder %s52, %s53
    %p65 = scmp.eq.s32.totalorder %s22, 1
    %p66 = por %p64, %p65
    %p68 = scmp.ne.s32.totalorder %s53, %s67
    %p69 = scmp.eq.s32.totalorder %s22, 0
    %p70 = por %p68, %p69
    %s72 = sadd.s32 %s71, 1
    %p75 = scmp.eq.s32.totalorder %s16, 1
    %p76 = scmp.ne.s32.totalorder %s71, %s73
    %p77 = scmp.eq.s32.totalorder %s16, 0
    %p78 = por %p76, %p77
    %p79 = scmp.ne.s32.totalorder %s71, %s73
    %p80 = scmp.eq.s32.totalorder %s21, 1
    %p81 = por %p79, %p80
    %p82 = scmp.ne.s32.totalorder %s73, %s74
    %p83 = scmp.eq.s32.totalorder %s21, 0
    %p84 = por %p82, %p83
    %p85 = scmp.ne.s32.totalorder %s73, %s74
    %p86 = scmp.eq.s32.totalorder %s22, 1
    %p87 = por %p85, %p86
    %p89 = scmp.ne.s32.totalorder %s74, %s88
    %p90 = scmp.eq.s32.totalorder %s22, 0
    %p91 = por %p89, %p90
    %s93 = sadd.s32 %s92, 1
    %p96 = scmp.eq.s32.totalorder %s16, 1
    %p97 = scmp.ne.s32.totalorder %s92, %s94
    %p98 = scmp.eq.s32.totalorder %s16, 0
    %p99 = por %p97, %p98
    %p100 = scmp.ne.s32.totalorder %s92, %s94
    %p101 = scmp.eq.s32.totalorder %s21, 1
    %p102 = por %p100, %p101
    %p103 = scmp.ne.s32.totalorder %s94, %s95
    %p104 = scmp.eq.s32.totalorder %s21, 0
    %p105 = por %p103, %p104
    %p106 = scmp.ne.s32.totalorder %s94, %s95
    %p107 = scmp.eq.s32.totalorder %s22, 1
    %p108 = por %p106, %p107
    %p110 = scmp.ne.s32.totalorder %s95, %s109
    %p111 = scmp.eq.s32.totalorder %s22, 0
    %p112 = por %p110, %p111
    %s114 = sadd.s32 %s113, 1
    %p117 = scmp.eq.s32.totalorder %s16, 1
    %p118 = scmp.ne.s32.totalorder %s113, %s115
    %p119 = scmp.eq.s32.totalorder %s16, 0
    %p120 = por %p118, %p119
    %p121 = scmp.ne.s32.totalorder %s113, %s115
    %p122 = scmp.eq.s32.totalorder %s21, 1
    %p123 = por %p121, %p122
    %p124 = scmp.ne.s32.totalorder %s115, %s116
    %p125 = scmp.eq.s32.totalorder %s21, 0
    %p126 = por %p124, %p125
    %p127 = scmp.ne.s32.totalorder %s115, %s116
    %p128 = scmp.eq.s32.totalorder %s22, 1
    %p129 = por %p127, %p128
    %p131 = scmp.ne.s32.totalorder %s116, %s130
    %p132 = scmp.eq.s32.totalorder %s22, 0
    %p133 = por %p131, %p132
    %s135 = sadd.s32 %s134, 1
    %p138 = scmp.eq.s32.totalorder %s16, 1
    %p139 = scmp.ne.s32.totalorder %s134, %s136
    %p140 = scmp.eq.s32.totalorder %s16, 0
    %p141 = por %p139, %p140
    %p142 = scmp.ne.s32.totalorder %s134, %s136
    %p143 = scmp.eq.s32.totalorder %s21, 1
    %p144 = por %p142, %p143
    %p145 = scmp.ne.s32.totalorder %s136, %s137
    %p146 = scmp.eq.s32.totalorder %s21, 0
    %p147 = por %p145, %p146
    %p148 = scmp.ne.s32.totalorder %s136, %s137
    %p149 = scmp.eq.s32.totalorder %s22, 1
    %p150 = por %p148, %p149
    %p152 = scmp.ne.s32.totalorder %s137, %s151
    %p153 = scmp.eq.s32.totalorder %s22, 0
    %p154 = por %p152, %p153
    %s156 = sadd.s32 %s155, 1
    %p159 = scmp.eq.s32.totalorder %s16, 1
    %p160 = scmp.ne.s32.totalorder %s155, %s157
    %p161 = scmp.eq.s32.totalorder %s16, 0
    %p162 = por %p160, %p161
    %p163 = scmp.ne.s32.totalorder %s155, %s157
    %p164 = scmp.eq.s32.totalorder %s21, 1
    %p165 = por %p163, %p164
    %p166 = scmp.ne.s32.totalorder %s157, %s158
    %p167 = scmp.eq.s32.totalorder %s21, 0
    %p168 = por %p166, %p167
    %p169 = scmp.ne.s32.totalorder %s157, %s158
    %p170 = scmp.eq.s32.totalorder %s22, 1
    %p171 = por %p169, %p170
    %p173 = scmp.ne.s32.totalorder %s158, %s172
    %p174 = scmp.eq.s32.totalorder %s22, 0
    %p175 = por %p173, %p174
    %s177 = sadd.s32 %s176, 1
    %p180 = scmp.eq.s32.totalorder %s16, 1
    %p181 = scmp.ne.s32.totalorder %s176, %s178
    %p182 = scmp.eq.s32.totalorder %s16, 0
    %p183 = por %p181, %p182
    %p184 = scmp.ne.s32.totalorder %s176, %s178
    %p185 = scmp.eq.s32.totalorder %s21, 1
    %p186 = por %p184, %p185
    %p187 = scmp.ne.s32.totalorder %s178, %s179
    %p188 = scmp.eq.s32.totalorder %s21, 0
    %p189 = por %p187, %p188
    %p190 = scmp.ne.s32.totalorder %s178, %s179
    %p191 = scmp.eq.s32.totalorder %s22, 1
    %p192 = por %p190, %p191
    %p194 = scmp.ne.s32.totalorder %s179, %s193
    %p195 = scmp.eq.s32.totalorder %s22, 0
    %p196 = por %p194, %p195
    %s197 = ssub.s32 %s16, %s23
    %p198 = scmp.eq.s32.totalorder %s197, 0
    %s200 = sadd.s32 %s199, 1
    %s201 = scalar_select %p198, %s199, %s200
    %p204 = pneg %p198
    %p205 = scmp.eq.s32.totalorder %s16, 1
    %p206 = por %p204, %p205
    %p207 = scmp.ne.s32.totalorder %s199, %s202
    %p208 = scmp.eq.s32.totalorder %s16, 0
    %p209 = por %p207, %p208
    %p210 = scmp.ne.s32.totalorder %s199, %s202
    %p211 = scmp.eq.s32.totalorder %s21, 1
    %p212 = por %p210, %p211
    %p213 = scmp.ne.s32.totalorder %s202, %s203
    %p214 = scmp.eq.s32.totalorder %s21, 0
    %p215 = por %p213, %p214
    %p216 = scmp.ne.s32.totalorder %s202, %s203
    %p217 = scmp.eq.s32.totalorder %s22, 1
    %p218 = por %p216, %p217
    %p220 = scmp.ne.s32.totalorder %s203, %s219
    %p221 = scmp.eq.s32.totalorder %s22, 0
    %p222 = por %p220, %p221
    %s223 = ssub.s32 %s16, %s23
    %p224 = scmp.eq.s32.totalorder %s223, 0
    %s226 = sadd.s32 %s225, 1
    %s227 = scalar_select %p224, %s225, %s226
    %p230 = pneg %p224
    %p231 = scmp.eq.s32.totalorder %s16, 1
    %p232 = por %p230, %p231
    %p233 = scmp.ne.s32.totalorder %s225, %s228
    %p234 = scmp.eq.s32.totalorder %s16, 0
    %p235 = por %p233, %p234
    %p236 = scmp.ne.s32.totalorder %s225, %s228
    %p237 = scmp.eq.s32.totalorder %s21, 1
    %p238 = por %p236, %p237
    %p239 = scmp.ne.s32.totalorder %s228, %s229
    %p240 = scmp.eq.s32.totalorder %s21, 0
    %p241 = por %p239, %p240
    %p242 = scmp.ne.s32.totalorder %s228, %s229
    %p243 = scmp.eq.s32.totalorder %s22, 1
    %p244 = por %p242, %p243
    %p246 = scmp.ne.s32.totalorder %s229, %s245
    %p247 = scmp.eq.s32.totalorder %s22, 0
    %p248 = por %p246, %p247
    %p249 = scmp.le.s32.totalorder 1, %s16
    %p250 = scmp.lt.s32.totalorder %s16, 3
    %p251 = pnand %p249, %p250
    %p252 = pneg %p251
    // Predicated region
    $region9: #{hourglass_forward.3} parent=5 // pred_check
      _
    $region10: #{hourglass_forward.3} parent=5 // pred_check_branch
      %254 = sbr.rel (%p251) target = $region12
    $region11: #{hourglass_forward.3} parent=5 // pred_region
      %s255 = ssub.s32 %s16, 1
      // Predicated region
      $region13: #{hourglass_forward.3} parent=11 // pred_check
        %p256 = pneg %p63
      $region14: #{hourglass_forward.3} parent=11 // pred_check_branch
        %258 = sbr.rel (%p256) target = $region16
      $region15: #{hourglass_forward.3} parent=11 // pred_region
        _
      $region16: #{hourglass_forward.3} parent=11 // pred_fallthru
        _
      // Predicated region
      $region17: #{hourglass_forward.3} parent=11 // pred_check
        %p259 = pneg %p84
      $region18: #{hourglass_forward.3} parent=11 // pred_check_branch
        %261 = sbr.rel (%p259) target = $region20
      $region19: #{hourglass_forward.3} parent=11 // pred_region
        _
      $region20: #{hourglass_forward.3} parent=11 // pred_fallthru
        _
      // Predicated region
      $region21: #{hourglass_forward.3} parent=11 // pred_check
        %p262 = pneg %p105
      $region22: #{hourglass_forward.3} parent=11 // pred_check_branch
        %264 = sbr.rel (%p262) target = $region24
      $region23: #{hourglass_forward.3} parent=11 // pred_region
        _
      $region24: #{hourglass_forward.3} parent=11 // pred_fallthru
        _
      // Predicated region
      $region25: #{hourglass_forward.3} parent=11 // pred_check
        %p265 = pneg %p126
      $region26: #{hourglass_forward.3} parent=11 // pred_check_branch
        %267 = sbr.rel (%p265) target = $region28
      $region27: #{hourglass_forward.3} parent=11 // pred_region
        _
      $region28: #{hourglass_forward.3} parent=11 // pred_fallthru
        _
      // Predicated region
      $region29: #{hourglass_forward.3} parent=11 // pred_check
        %p268 = pneg %p147
      $region30: #{hourglass_forward.3} parent=11 // pred_check_branch
        %270 = sbr.rel (%p268) target = $region32
      $region31: #{hourglass_forward.3} parent=11 // pred_region
        _
      $region32: #{hourglass_forward.3} parent=11 // pred_fallthru
        _
      // Predicated region
      $region33: #{hourglass_forward.3} parent=11 // pred_check
        %p271 = pneg %p168
      $region34: #{hourglass_forward.3} parent=11 // pred_check_branch
        %273 = sbr.rel (%p271) target = $region36
      $region35: #{hourglass_forward.3} parent=11 // pred_region
        _
      $region36: #{hourglass_forward.3} parent=11 // pred_fallthru
        _
      // Predicated region
      $region37: #{hourglass_forward.3} parent=11 // pred_check
        %p274 = pneg %p189
      $region38: #{hourglass_forward.3} parent=11 // pred_check_branch
        %276 = sbr.rel (%p274) target = $region40
      $region39: #{hourglass_forward.3} parent=11 // pred_region
        _
      $region40: #{hourglass_forward.3} parent=11 // pred_fallthru
        _
    $region12: #{hourglass_forward.3} parent=5 // pred_fallthru
      _
    %p277 = scmp.lt.s32.totalorder %s16, 2
    // Predicated region
    $region41: #{hourglass_forward.3} parent=5 // pred_check
      %p278 = pneg %p277
    $region42: #{hourglass_forward.3} parent=5 // pred_check_branch
      %280 = sbr.rel (%p278) target = $region44
    $region43: #{hourglass_forward.3} parent=5 // pred_region
      // Predicated region
      $region45: #{hourglass_forward.3} parent=43 // pred_check
        %p281 = pneg %p36
      $region46: #{hourglass_forward.3} parent=43 // pred_check_branch
        %283 = sbr.rel (%p281) target = $region48
      $region47: #{hourglass_forward.3} parent=43 // pred_region
        %p284 = scmp.lt.s32.totalorder %s16, 1
        %s285 = scalar_select %p284, %s16, 1
        %s286 = smul.addr %s285, 2
        %s287 = smul.addr %s286, 8
        %s288 = scalar_lea.vmem %s0, %s287
      $region48: #{hourglass_forward.3} parent=43 // pred_fallthru
        _
    $region44: #{hourglass_forward.3} parent=5 // pred_fallthru
      _
    %p289 = scmp.le.s32.totalorder 1, %s16
    %p290 = scmp.lt.s32.totalorder %s16, 3
    %p291 = pnand %p289, %p290
    %p292 = pneg %p291
    // Predicated region
    $region49: #{hourglass_forward.3} parent=5 // pred_check
      _
    $region50: #{hourglass_forward.3} parent=5 // pred_check_branch
      %294 = sbr.rel (%p291) target = $region52
    $region51: #{hourglass_forward.3} parent=5 // pred_region
      %s295 = ssub.s32 %s16, 1
      %p296 = scmp.lt.s32.totalorder %s21, 1
      %s297 = scalar_select %p296, %s21, 1
      %s298 = smul.addr %s297, 2
      %s299 = smul.addr %s298, 8
      %s300 = scalar_lea.vmem %s0, %s299
      %p301 = pneg %p42
      %p302 = pneg %p39
      %p303 = pneg %p63
      %p304 = pneg %p60
      %p305 = pneg %p84
      %p306 = pneg %p81
      %p307 = pneg %p105
      %p308 = pneg %p102
      %p309 = pneg %p126
      %p310 = pneg %p123
      %p311 = pneg %p147
      %p312 = pneg %p144
      %p313 = pneg %p168
      %p314 = pneg %p165
      %p315 = pneg %p189
      %p316 = pneg %p186
      %p317 = pneg %p215
      %p318 = pneg %p212
      %p319 = scmp.lt.s32.totalorder %s21, 1
      %s320 = scalar_select %p319, %s21, 1
      %s321 = smul.addr %s320, 2
      %s322 = smul.addr %s321, 8
      %s323 = scalar_lea.vmem %s8, %s322
      %p324 = pneg %p241
      %p325 = pneg %p238
      %p326 = scmp.lt.s32.totalorder %s21, 1
      %s327 = scalar_select %p326, %s21, 1
      %s328 = smul.addr %s327, 2
      %s329 = smul.addr %s328, 4
      %s330 = scalar_lea.vmem %s9, %s329
      %p331 = scmp.lt.s32.totalorder %s21, 1
      %s332 = scalar_select %p331, %s21, 1
      %s333 = smul.addr %s332, 2
      %s334 = smul.addr %s333, 8
      %s335 = scalar_lea.vmem %s0, %s334
      %p336 = scmp.lt.s32.totalorder %s21, 1
      %s337 = scalar_select %p336, %s21, 1
      %s338 = smul.addr %s337, 2
      %s339 = smul.addr %s338, 8
      %s340 = scalar_lea.vmem %s8, %s339
      %p341 = scmp.lt.s32.totalorder %s21, 1
      %s342 = scalar_select %p341, %s21, 1
      %s343 = smul.addr %s342, 2
      %s344 = smul.addr %s343, 4
      %s345 = scalar_lea.vmem %s9, %s344
      %v347 = vld [vmem:[%s335] sm:$0xff]
      %v348 = vld [vmem:[%s335 + $0x8] sm:$0xff]
      %v349 = vld [vmem:[%s5] sm:$0xf]
      %v350 = vld [vmem:[%s6] sm:$0x3]
      %v351 = vld [vmem:[%s1] sm:$0xf]
      %v352 = vld [vmem:[%s2] sm:$0xff]
      %v353 = vpack.c.bf16 %v347, %v347
      %v354 = vpack.c.bf16 %v348, %v348
      %v356 = vlaneseq
      %v357 = vshrl.u32 %v356, 7
      %v358 = vsub.s32 0, %v357
      %v359 = vrot.slane %v349, %v358
      %v360 = vlaneseq
      %v361 = vshrl.u32 %v360, 7
      %v362 = vsub.s32 2, %v361
      %v363 = vrot.slane %v349, %v362
      %v366 = vpack.c.bf16 %v359, %v359
      %v367 = vpack.c.bf16 %v363, %v363
      %v369 = vpack.i.b16 %v366, %v366
      %v371 = vlaneseq
      %v372 = vshrl.u32 %v371, 7
      %v373 = vsub.s32 0, %v372
      %v374 = vrot.slane %v369, %v373
      %v376 = vpack.i.b16 %v367, %v367
      %v378 = vlaneseq
      %v379 = vshrl.u32 %v378, 7
      %v380 = vsub.s32 0, %v379
      %v381 = vrot.slane %v376, %v380
      %v382 = vmul.bf16 %v353, %v374
      %v383 = vmul.bf16 %v354, %v381
      %v384 = vlaneseq
      %v385 = vshrl.u32 %v384, 7
      %v386 = vsub.s32 1, %v385
      %v387 = vrot.slane %v349, %v386
      %v388 = vlaneseq
      %v389 = vshrl.u32 %v388, 7
      %v390 = vsub.s32 3, %v389
      %v391 = vrot.slane %v349, %v390
      %v394 = vpack.c.bf16 %v387, %v387
      %v395 = vpack.c.bf16 %v391, %v391
      %v397 = vshrl.u32 %v394, 16
      %v398 = vpack.i.b16 %v397, %v397
      %v400 = vlaneseq
      %v401 = vshrl.u32 %v400, 7
      %v402 = vsub.s32 0, %v401
      %v403 = vrot.slane %v398, %v402
      %v405 = vshrl.u32 %v395, 16
      %v406 = vpack.i.b16 %v405, %v405
      %v408 = vlaneseq
      %v409 = vshrl.u32 %v408, 7
      %v410 = vsub.s32 0, %v409
      %v411 = vrot.slane %v406, %v410
      %v412 = vmul.bf16 %v353, %v403
      %v413 = vmul.bf16 %v354, %v411
      %v417 = vrot.slane 0, 4
      %v418 = vrot.slane %v353, 4
      %v419 = vrot.slane %v354, 4
      %420 = vrot.lane.b32.xlu0 %v417, 127
      %v421 = vpop.permute.xlu0 %420
      %422 = vrot.lane.b32.xlu0 %v418, 127
      %v423 = vpop.permute.xlu0 %422
      %424 = vrot.lane.b32.xlu0 %v419, 127
      %v425 = vpop.permute.xlu0 %424
      %vm426 = vcmask 1039360
      %v427 = vsel %vm426, %v421, %v423
      %v428 = vsel %vm426, %v423, %v425
      %431 = vrot.lane.b32.xlu0 0, 126
      %v432 = vpop.permute.xlu0 %431
      %433 = vrot.lane.b32.xlu0 %v412, 126
      %v434 = vpop.permute.xlu0 %433
      %435 = vrot.lane.b32.xlu0 %v413, 126
      %v436 = vpop.permute.xlu0 %435
      %vm437 = vcmask 1031168
      %v438 = vsel %vm437, %v432, %v434
      %v439 = vsel %vm437, %v434, %v436
      %v442 = vrot.slane %v382, 4
      %v443 = vrot.slane %v383, 4
      %444 = vrot.lane.b32.xlu0 %v417, 112
      %v445 = vpop.permute.xlu0 %444
      %446 = vrot.lane.b32.xlu0 %v442, 112
      %v447 = vpop.permute.xlu0 %446
      %448 = vrot.lane.b32.xlu0 %v443, 112
      %v449 = vpop.permute.xlu0 %448
      %vm450 = vcmask 916480
      %v451 = vsel %vm450, %v445, %v447
      %v452 = vsel %vm450, %v447, %v449
      %453 = vrot.lane.b32.xlu0 %v353, 111
      %v454 = vpop.permute.xlu0 %453
      %455 = vrot.lane.b32.xlu0 %v354, 111
      %v456 = vpop.permute.xlu0 %455
      %vm457 = vcmask 908288
      %v458 = vsel %vm457, %v454, %v456
      %v459 = vrot.slane %v412, 4
      %v460 = vrot.slane %v413, 4
      %461 = vrot.lane.b32.xlu0 %v459, 110
      %v462 = vpop.permute.xlu0 %461
      %463 = vrot.lane.b32.xlu0 %v460, 110
      %v464 = vpop.permute.xlu0 %463
      %465 = vrot.lane.b32.xlu0 %v417, 110
      %v466 = vpop.permute.xlu0 %465
      %vm467 = vcmask 900096
      %v468 = vsel %vm467, %v462, %v464
      %v469 = vsel %vm467, %v464, %v466
      %470 = vrot.lane.b32.xlu0 %v382, 96
      %v471 = vpop.permute.xlu0 %470
      %472 = vrot.lane.b32.xlu0 %v383, 96
      %v473 = vpop.permute.xlu0 %472
      %474 = vrot.lane.b32.xlu0 0, 96
      %v475 = vpop.permute.xlu0 %474
      %vm476 = vcmask 785408
      %v477 = vsel %vm476, %v471, %v473
      %v478 = vsel %vm476, %v473, %v475
      %479 = vrot.lane.b32.xlu0 %v418, 95
      %v480 = vpop.permute.xlu0 %479
      %481 = vrot.lane.b32.xlu0 %v419, 95
      %v482 = vpop.permute.xlu0 %481
      %483 = vrot.lane.b32.xlu0 %v417, 95
      %v484 = vpop.permute.xlu0 %483
      %vm485 = vcmask 777216
      %v486 = vsel %vm485, %v480, %v482
      %v487 = vsel %vm485, %v482, %v484
      %488 = vrot.lane.b32.xlu0 %v412, 94
      %v489 = vpop.permute.xlu0 %488
      %490 = vrot.lane.b32.xlu0 %v413, 94
      %v491 = vpop.permute.xlu0 %490
      %492 = vrot.lane.b32.xlu0 0, 94
      %v493 = vpop.permute.xlu0 %492
      %vm494 = vcmask 769024
      %v495 = vsel %vm494, %v489, %v491
      %v496 = vsel %vm494, %v491, %v493
      %vm497 = vcmask 1043456
      %v500 = vsel %vm497, 0, %v427
      %v503 = vsel %vm497, %v382, %v428
      %v506 = vsel %vm497, %v383, %v425
      %v509 = vsel %vm497, %v438, %v451
      %v512 = vsel %vm497, %v439, %v452
      %v515 = vsel %vm497, %v436, %v449
      %v518 = vsel %vm497, %v454, %v462
      %v521 = vsel %vm497, %v458, %v468
      %v524 = vsel %vm497, %v456, %v469
      %v527 = vsel %vm497, %v471, %v480
      %v530 = vsel %vm497, %v477, %v486
      %v533 = vsel %vm497, %v478, %v487
      %535 = vset.pattern.permute.xlu0 0
      %536 = vperm.xlu0 %535, %v352
      %v537 = vpop.permute.xlu0 %536
      %551 = vrot.lane.b32.xlu0 %v500, 17
      %v552 = vpop.permute.xlu0 %551
      %553 = vrot.lane.b32.xlu0 %v503, 17
      %v554 = vpop.permute.xlu0 %553
      %555 = vrot.lane.b32.xlu0 %v506, 17
      %v556 = vpop.permute.xlu0 %555
      %557 = vrot.lane.b32.xlu0 %v509, 17
      %v558 = vpop.permute.xlu0 %557
      %559 = vrot.lane.b32.xlu0 %v512, 17
      %v560 = vpop.permute.xlu0 %559
      %561 = vrot.lane.b32.xlu0 %v515, 17
      %v562 = vpop.permute.xlu0 %561
      %563 = vrot.lane.b32.xlu0 %v518, 17
      %v564 = vpop.permute.xlu0 %563
      %565 = vrot.lane.b32.xlu0 %v521, 17
      %v566 = vpop.permute.xlu0 %565
      %567 = vrot.lane.b32.xlu0 %v524, 17
      %v568 = vpop.permute.xlu0 %567
      %569 = vrot.lane.b32.xlu0 %v527, 17
      %v570 = vpop.permute.xlu0 %569
      %571 = vrot.lane.b32.xlu0 %v530, 17
      %v572 = vpop.permute.xlu0 %571
      %573 = vrot.lane.b32.xlu0 %v533, 17
      %v574 = vpop.permute.xlu0 %573
      %575 = vrot.lane.b32.xlu0 %v489, 17
      %v576 = vpop.permute.xlu0 %575
      %577 = vrot.lane.b32.xlu0 %v495, 17
      %v578 = vpop.permute.xlu0 %577
      %579 = vrot.lane.b32.xlu0 %v496, 17
      %v580 = vpop.permute.xlu0 %579
      %vm581 = vcmask 138240
      %v582 = vsel %vm581, %v552, %v554
      %v583 = vsel %vm581, %v554, %v556
      %v584 = vsel %vm581, %v558, %v560
      %v585 = vsel %vm581, %v560, %v562
      %v586 = vsel %vm581, %v564, %v566
      %v587 = vsel %vm581, %v566, %v568
      %v588 = vsel %vm581, %v570, %v572
      %v589 = vsel %vm581, %v572, %v574
      %v590 = vsel %vm581, %v576, %v578
      %v591 = vsel %vm581, %v578, %v580
      %vm600 = vcmask 588800
      %v602 = vsel %vm600, %v351, 0
      %v605 = vsel %vm497, %v590, 0
      %v608 = vsel %vm497, %v591, 0
      %610 = vmatprep.subr.bf16.mxu0 0
      %611 = vmatpush1.bf16.msra.mxu0 0
      %612 = vmatprep.subr.bf16.mxu0 0
      %613 = vmatpush1.bf16.msra.mxu0 0
      %614 = vmatprep.subr.bf16.mxu0 0
      %615 = vmatpush1.bf16.msra.mxu0 0
      %616 = vmatprep.subr.bf16.mxu0 %v608
      %617 = vmatpush1.bf16.msra.mxu0 %v605
      %618 = vmatprep.subr.bf16.mxu0 %v589
      %619 = vmatpush1.bf16.msra.mxu0 %v588
      %620 = vmatprep.subr.bf16.mxu0 %v587
      %621 = vmatpush1.bf16.msra.mxu0 %v586
      %622 = vmatprep.subr.bf16.mxu0 %v585
      %623 = vmatpush1.bf16.msra.mxu0 %v584
      %624 = vmatprep.subr.bf16.mxu0 %v583
      %625 = vmatpush1.bf16.msra.mxu0 %v582
      %626 = vmatprep.subr.bf16.mxu0 0
      %627 = vmatpush2.bf16.msra.mxu0 0
      %628 = vmatprep.subr.bf16.mxu0 0
      %629 = vmatpush2.bf16.msra.mxu0 0
      %630 = vmatprep.subr.bf16.mxu0 0
      %631 = vmatpush2.bf16.msra.mxu0 0
      %632 = vmatprep.subr.bf16.mxu0 0
      %633 = vmatpush2.bf16.msra.mxu0 0
      %634 = vmatprep.subr.bf16.mxu0 0
      %635 = vmatpush2.bf16.msra.mxu0 0
      %636 = vmatprep.subr.bf16.mxu0 0
      %637 = vmatpush2.bf16.msra.mxu0 0
      %638 = vmatprep.subr.bf16.mxu0 0
      %639 = vmatpush2.bf16.msra.mxu0 0
      %640 = vmatprep.subr.bf16.mxu0 0
      %641 = vmatpush2.bf16.msra.mxu0 0
      %642 = vmatprep.mubr.bf16.mxu0 0
      %643 = vmatmul.mubr.bf16.gmra.mxu0 %v602
      %v644 = vpop.f32.mrf.mxu0
      %v645 = vadd.f32 %v537, %v644
      %v646 = vpop.f32.mrf.mxu0
      %v647 = vadd.f32 %v537, %v646
      %v648 = vpop.f32.mrf.mxu0
      %v649 = vpop.f32.mrf.mxu0
      %650 = vdwg.mxu0
      %651 = vst [vmem:[%s340] sm:$0xff] %v645
      %652 = vst [vmem:[%s340 + $0x8] sm:$0xff] %v647
      %v653 = vld [vmem:[%s7] sm:$0xf]
      %v654 = vld [vmem:[%s7 + $0x4] sm:$0xf]
      %658 = vrot.lane.b32.xlu0 %v347, 127
      %v659 = vpop.permute.xlu0 %658
      %660 = vrot.lane.b32.xlu0 %v348, 127
      %v661 = vpop.permute.xlu0 %660
      %662 = vrot.lane.b32.xlu0 0.0, 127
      %v663 = vpop.permute.xlu0 %662
      %vm664 = vcmask 1039360
      %v665 = vsel %vm664, %v659, %v661
      %v666 = vsel %vm664, %v661, %v663
      %v669 = vmax.f32 %v347, %v665
      %v670 = vmax.f32 %v348, %v666
      %673 = vrot.lane.b32.xlu0 %v669, 112
      %v674 = vpop.permute.xlu0 %673
      %675 = vrot.lane.b32.xlu0 %v670, 112
      %v676 = vpop.permute.xlu0 %675
      %677 = vrot.lane.b32.xlu0 0.0, 112
      %v678 = vpop.permute.xlu0 %677
      %vm679 = vcmask 916480
      %v680 = vsel %vm679, %v674, %v676
      %v681 = vsel %vm679, %v676, %v678
      %v684 = vmax.f32 %v669, %v680
      %v685 = vmax.f32 %v670, %v681
      %687 = vrot.lane.b32.xlu0 %v684, 96
      %v688 = vpop.permute.xlu0 %687
      %690 = vrot.lane.b32.xlu0 %v684, 64
      %v691 = vpop.permute.xlu0 %690
      %693 = vrot.lane.b32.xlu0 %v684, 32
      %v694 = vpop.permute.xlu0 %693
      %697 = vrot.lane.b32.xlu0 %v685, 96
      %v698 = vpop.permute.xlu0 %697
      %700 = vrot.lane.b32.xlu0 %v685, 64
      %v701 = vpop.permute.xlu0 %700
      %703 = vrot.lane.b32.xlu0 %v685, 32
      %v704 = vpop.permute.xlu0 %703
      %v706 = vpack.c.bf16 %v688, %v684
      %v707 = vpack.c.bf16 %v694, %v691
      %v708 = vpack.c.bf16 %v698, %v685
      %v709 = vpack.c.bf16 %v704, %v701
      %v712 = vunpack.c.l.b16 %v653
      %v713 = vunpack.c.l.b16 %v654
      %v714 = vpack.c.b16 %v713, %v712
      %vm716 = vcmask 130048
      %v718 = vsel %vm716, %v706, 0
      %v721 = vsel %vm716, %v707, 0
      %v724 = vsel %vm716, %v708, 0
      %v727 = vsel %vm716, %v709, 0
      %729 = vmatprep.subr.bf16.mxu0 0
      %730 = vmatpush1.bf16.msra.mxu0 0
      %731 = vmatprep.subr.bf16.mxu0 0
      %732 = vmatpush1.bf16.msra.mxu0 0
      %733 = vmatprep.subr.bf16.mxu0 0
      %734 = vmatpush1.bf16.msra.mxu0 0
      %735 = vmatprep.subr.bf16.mxu0 0
      %736 = vmatpush1.bf16.msra.mxu0 0
      %737 = vmatprep.subr.bf16.mxu0 0
      %738 = vmatpush1.bf16.msra.mxu0 0
      %739 = vmatprep.subr.bf16.mxu0 0
      %740 = vmatpush1.bf16.msra.mxu0 0
      %741 = vmatprep.subr.bf16.mxu0 0
      %742 = vmatpush1.bf16.msra.mxu0 0
      %743 = vmatprep.subr.bf16.mxu0 0
      %744 = vmatpush1.bf16.msra.mxu0 %v714
      %745 = vmatprep.subr.bf16.mxu0 0
      %746 = vmatpush2.bf16.msra.mxu0 0
      %747 = vmatprep.subr.bf16.mxu0 0
      %748 = vmatpush2.bf16.msra.mxu0 0
      %749 = vmatprep.subr.bf16.mxu0 0
      %750 = vmatpush2.bf16.msra.mxu0 0
      %751 = vmatprep.subr.bf16.mxu0 0
      %752 = vmatpush2.bf16.msra.mxu0 0
      %753 = vmatprep.subr.bf16.mxu0 0
      %754 = vmatpush2.bf16.msra.mxu0 0
      %755 = vmatprep.subr.bf16.mxu0 0
      %756 = vmatpush2.bf16.msra.mxu0 0
      %757 = vmatprep.subr.bf16.mxu0 0
      %758 = vmatpush2.bf16.msra.mxu0 0
      %759 = vmatprep.subr.bf16.mxu0 0
      %760 = vmatpush2.bf16.msra.mxu0 0
      %761 = vmatprep.mubr.bf16.mxu0 0
      %762 = vmatmul.mubr.bf16.gmra.mxu0 %v718
      %v763 = vpop.f32.mrf.mxu0
      %v764 = vadd.f32 0.0, %v763
      %v765 = vpop.f32.mrf.mxu0
      %v766 = vpop.f32.mrf.mxu0
      %v767 = vadd.f32 0.0, %v766
      %v768 = vpop.f32.mrf.mxu0
      %769 = vmatprep.mubr.bf16.mxu0 0
      %770 = vmatmul.mubr.bf16.gmra.mxu0 %v721
      %v771 = vpop.f32.mrf.mxu0
      %v772 = vadd.f32 0.0, %v771
      %v773 = vpop.f32.mrf.mxu0
      %v774 = vpop.f32.mrf.mxu0
      %v775 = vadd.f32 0.0, %v774
      %v776 = vpop.f32.mrf.mxu0
      %777 = vmatprep.mubr.bf16.mxu0 0
      %778 = vmatmul.mubr.bf16.gmra.mxu0 %v724
      %v779 = vpop.f32.mrf.mxu0
      %v780 = vadd.f32 0.0, %v779
      %v781 = vpop.f32.mrf.mxu0
      %v782 = vpop.f32.mrf.mxu0
      %v783 = vadd.f32 0.0, %v782
      %v784 = vpop.f32.mrf.mxu0
      %785 = vmatprep.mubr.bf16.mxu0 0
      %786 = vmatmul.mubr.bf16.gmra.mxu0 %v727
      %v787 = vpop.f32.mrf.mxu0
      %v788 = vadd.f32 0.0, %v787
      %v789 = vpop.f32.mrf.mxu0
      %v790 = vpop.f32.mrf.mxu0
      %v791 = vadd.f32 0.0, %v790
      %v792 = vpop.f32.mrf.mxu0
      %793 = vdwg.mxu0
      %795 = vrot.lane.b32.xlu0 %v767, 8
      %v796 = vpop.permute.xlu0 %795
      %799 = vrot.lane.b32.xlu0 %v772, 16
      %v800 = vpop.permute.xlu0 %799
      %803 = vrot.lane.b32.xlu0 %v775, 24
      %v804 = vpop.permute.xlu0 %803
      %807 = vrot.lane.b32.xlu0 %v780, 32
      %v808 = vpop.permute.xlu0 %807
      %811 = vrot.lane.b32.xlu0 %v783, 40
      %v812 = vpop.permute.xlu0 %811
      %815 = vrot.lane.b32.xlu0 %v788, 48
      %v816 = vpop.permute.xlu0 %815
      %819 = vrot.lane.b32.xlu0 %v791, 56
      %v820 = vpop.permute.xlu0 %819
      %vm822 = vcmask 64512
      %v823 = vsel %vm822, %v764, %v796
      %v824 = vsel %vm716, %v823, %v800
      %vm825 = vcmask 195584
      %v826 = vsel %vm825, %v824, %v804
      %vm827 = vcmask 261120
      %v828 = vsel %vm827, %v826, %v808
      %vm829 = vcmask 326656
      %v830 = vsel %vm829, %v828, %v812
      %vm831 = vcmask 392192
      %v832 = vsel %vm831, %v830, %v816
      %vm833 = vcmask 457728
      %v834 = vsel %vm833, %v832, %v820
      %v835 = vld [vmem:[%s3] sm:$0xf]
      %v836 = vld [vmem:[%s3 + $0x4] sm:$0xf]
      %v837 = vld [vmem:[%s4] sm:$0xff]
      %v838 = vld [vmem:[%s4 + $0x8] sm:$0xff]
      %v839 = vpack.c.bf16 %v834, %v834
      %v840 = vpack.c.bf16 %v350, %v350
      %v842 = vpack.i.b16 %v840, %v840
      %v844 = vlaneseq
      %v845 = vshrl.u32 %v844, 7
      %v846 = vsub.s32 0, %v845
      %v847 = vrot.slane %v842, %v846
      %v848 = vmul.bf16 %v839, %v847
      %v849 = vshrl.u32 %v840, 16
      %v850 = vpack.i.b16 %v849, %v849
      %v852 = vlaneseq
      %v853 = vshrl.u32 %v852, 7
      %v854 = vsub.s32 0, %v853
      %v855 = vrot.slane %v850, %v854
      %v856 = vmul.bf16 %v839, %v855
      %vm857 = vcmask 523264
      %v859 = vsel %vm857, %v848, 0
      %v861 = vsel %vm857, %v839, 0
      %v863 = vsel %vm857, %v856, 0
      %v865 = vrot.slane %v861, 4
      %866 = vrot.lane.b32.xlu0 %v865, 127
      %v867 = vpop.permute.xlu0 %866
      %v868 = vsel %vm426, %v421, %v867
      %870 = vrot.lane.b32.xlu0 %v863, 126
      %v871 = vpop.permute.xlu0 %870
      %v872 = vsel %vm437, %v432, %v871
      %v874 = vrot.slane %v859, 4
      %875 = vrot.lane.b32.xlu0 %v417, 120
      %v876 = vpop.permute.xlu0 %875
      %877 = vrot.lane.b32.xlu0 %v874, 120
      %v878 = vpop.permute.xlu0 %877
      %vm879 = vcmask 982016
      %v880 = vsel %vm879, %v876, %v878
      %881 = vrot.lane.b32.xlu0 %v861, 119
      %v882 = vpop.permute.xlu0 %881
      %v883 = vrot.slane %v863, 4
      %884 = vrot.lane.b32.xlu0 %v883, 118
      %v885 = vpop.permute.xlu0 %884
      %886 = vrot.lane.b32.xlu0 %v859, 112
      %v887 = vpop.permute.xlu0 %886
      %888 = vrot.lane.b32.xlu0 %v865, 111
      %v889 = vpop.permute.xlu0 %888
      %890 = vrot.lane.b32.xlu0 %v863, 110
      %v891 = vpop.permute.xlu0 %890
      %v893 = vsel %vm497, 0, %v868
      %v895 = vsel %vm497, %v859, %v867
      %v898 = vsel %vm497, %v872, %v880
      %v901 = vsel %vm497, %v871, %v878
      %v904 = vsel %vm497, %v882, %v885
      %v907 = vsel %vm497, %v887, %v889
      %909 = vset.pattern.permute.xlu0 0
      %910 = vperm.xlu0 %909, %v837
      %v911 = vpop.permute.xlu0 %910
      %914 = vset.pattern.permute.xlu0 0
      %915 = vperm.xlu0 %914, %v838
      %v916 = vpop.permute.xlu0 %915
      %v920 = vunpack.c.l.b16 %v835
      %v921 = vunpack.c.l.b16 %v836
      %v922 = vpack.c.b16 %v921, %v920
      %929 = vrot.lane.b32.xlu0 %v893, 9
      %v930 = vpop.permute.xlu0 %929
      %931 = vrot.lane.b32.xlu0 %v895, 9
      %v932 = vpop.permute.xlu0 %931
      %933 = vrot.lane.b32.xlu0 %v898, 9
      %v934 = vpop.permute.xlu0 %933
      %935 = vrot.lane.b32.xlu0 %v901, 9
      %v936 = vpop.permute.xlu0 %935
      %937 = vrot.lane.b32.xlu0 %v904, 9
      %v938 = vpop.permute.xlu0 %937
      %939 = vrot.lane.b32.xlu0 %v907, 9
      %v940 = vpop.permute.xlu0 %939
      %941 = vrot.lane.b32.xlu0 %v891, 9
      %v942 = vpop.permute.xlu0 %941
      %vm943 = vcmask 72704
      %v944 = vsel %vm943, %v930, %v932
      %v945 = vsel %vm943, %v934, %v936
      %v951 = vsel %vm600, %v922, 0
      %v954 = vsel %vm497, %v942, 0
      %956 = vmatprep.subr.bf16.mxu0 0
      %957 = vmatpush1.bf16.msra.mxu0 0
      %958 = vmatprep.subr.bf16.mxu0 0
      %959 = vmatpush1.bf16.msra.mxu0 0
      %960 = vmatprep.subr.bf16.mxu0 0
      %961 = vmatpush1.bf16.msra.mxu0 0
      %962 = vmatprep.subr.bf16.mxu0 0
      %963 = vmatpush1.bf16.msra.mxu0 %v954
      %964 = vmatprep.subr.bf16.mxu0 0
      %965 = vmatpush1.bf16.msra.mxu0 %v940
      %966 = vmatprep.subr.bf16.mxu0 0
      %967 = vmatpush1.bf16.msra.mxu0 %v938
      %968 = vmatprep.subr.bf16.mxu0 0
      %969 = vmatpush1.bf16.msra.mxu0 %v945
      %970 = vmatprep.subr.bf16.mxu0 0
      %971 = vmatpush1.bf16.msra.mxu0 %v944
      %972 = vmatprep.subr.bf16.mxu0 0
      %973 = vmatpush2.bf16.msra.mxu0 0
      %974 = vmatprep.subr.bf16.mxu0 0
      %975 = vmatpush2.bf16.msra.mxu0 0
      %976 = vmatprep.subr.bf16.mxu0 0
      %977 = vmatpush2.bf16.msra.mxu0 0
      %978 = vmatprep.subr.bf16.mxu0 0
      %979 = vmatpush2.bf16.msra.mxu0 0
      %980 = vmatprep.subr.bf16.mxu0 0
      %981 = vmatpush2.bf16.msra.mxu0 0
      %982 = vmatprep.subr.bf16.mxu0 0
      %983 = vmatpush2.bf16.msra.mxu0 0
      %984 = vmatprep.subr.bf16.mxu0 0
      %985 = vmatpush2.bf16.msra.mxu0 0
      %986 = vmatprep.subr.bf16.mxu0 0
      %987 = vmatpush2.bf16.msra.mxu0 0
      %988 = vmatprep.mubr.bf16.mxu0 0
      %989 = vmatmul.mubr.bf16.gmra.mxu0 %v951
      %v990 = vpop.f32.mrf.mxu0
      %v991 = vadd.f32 %v911, %v990
      %v992 = vpop.f32.mrf.mxu0
      %v993 = vpop.f32.mrf.mxu0
      %v994 = vadd.f32 %v916, %v993
      %v995 = vpop.f32.mrf.mxu0
      %996 = vdwg.mxu0
      %vm997 = vcmp.gt.f32.partialorder %v991, 0.0
      %vm998 = vcmp.gt.f32.partialorder %v994, 0.0
      %v999 = vmul.f32 %v991, 0.01
      %v1000 = vmul.f32 %v994, 0.01
      %v1001 = vsel %vm997, %v991, %v999
      %v1002 = vsel %vm998, %v994, %v1000
      %v1003 = vpack.c.bf16 %v1002, %v1001
      %v1005 = vunpack.c.l.b16 %v1003
      %v1006 = vunpack.c.h.b16 %v1003
      %v1007 = vpack.c.b16 %v1005, %v1005
      %v1008 = vpack.c.b16 %v1006, %v1006
      %vm1011 = vcmask 519168
      %1012 = vst.msk [vmem:[%s345] sm:$0xf] %vm1011, %v1007
      %1013 = vst.msk [vmem:[%s345 + $0x4] sm:$0xf] %vm1011, %v1008
      %p1014 = scmp.lt.s32.totalorder %s21, 1
      %s1015 = scalar_select %p1014, %s21, 1
      %s1016 = smul.addr %s1015, 2
      %s1017 = smul.addr %s1016, 8
      %s1018 = scalar_lea.vmem %s8, %s1017
      %p1019 = scmp.lt.s32.totalorder %s21, 1
      %s1020 = scalar_select %p1019, %s21, 1
      %s1021 = smul.addr %s1020, 2
      %s1022 = smul.addr %s1021, 4
      %s1023 = scalar_lea.vmem %s9, %s1022
      // Predicated region
      $region53: #{hourglass_forward.3} parent=51 // pred_check
        %p1024 = pneg %p212
      $region54: #{hourglass_forward.3} parent=51 // pred_check_branch
        %1026 = sbr.rel (%p1024) target = $region56
      $region55: #{hourglass_forward.3} parent=51 // pred_region
        _
      $region56: #{hourglass_forward.3} parent=51 // pred_fallthru
        _
      // Predicated region
      $region57: #{hourglass_forward.3} parent=51 // pred_check
        %p1027 = pneg %p238
      $region58: #{hourglass_forward.3} parent=51 // pred_check_branch
        %1029 = sbr.rel (%p1027) target = $region60
      $region59: #{hourglass_forward.3} parent=51 // pred_region
        _
      $region60: #{hourglass_forward.3} parent=51 // pred_fallthru
        _
    $region52: #{hourglass_forward.3} parent=5 // pred_fallthru
      _
    %p1030 = scmp.le.s32.totalorder 2, %s16
    // Predicated region
    $region61: #{hourglass_forward.3} parent=5 // pred_check
      %p1031 = pneg %p1030
    $region62: #{hourglass_forward.3} parent=5 // pred_check_branch
      %1033 = sbr.rel (%p1031) target = $region64
    $region63: #{hourglass_forward.3} parent=5 // pred_region
      %s1034 = ssub.s32 %s16, 2
      // Predicated region
      $region65: #{hourglass_forward.3} parent=63 // pred_check
        %p1035 = pneg %p218
      $region66: #{hourglass_forward.3} parent=63 // pred_check_branch
        %1037 = sbr.rel (%p1035) target = $region68
      $region67: #{hourglass_forward.3} parent=63 // pred_region
        %p1038 = scmp.lt.s32.totalorder %s22, 1
        %s1039 = scalar_select %p1038, %s22, 1
        %s1040 = smul.addr %s1039, 2
        %s1041 = smul.addr %s1040, 8
        %s1042 = scalar_lea.vmem %s8, %s1041
      $region68: #{hourglass_forward.3} parent=63 // pred_fallthru
        _
      // Predicated region
      $region69: #{hourglass_forward.3} parent=63 // pred_check
        %p1043 = pneg %p244
      $region70: #{hourglass_forward.3} parent=63 // pred_check_branch
        %1045 = sbr.rel (%p1043) target = $region72
      $region71: #{hourglass_forward.3} parent=63 // pred_region
        %p1046 = scmp.lt.s32.totalorder %s22, 1
        %s1047 = scalar_select %p1046, %s22, 1
        %s1048 = smul.addr %s1047, 2
        %s1049 = smul.addr %s1048, 4
        %s1050 = scalar_lea.vmem %s9, %s1049
      $region72: #{hourglass_forward.3} parent=63 // pred_fallthru
        _
    $region64: #{hourglass_forward.3} parent=5 // pred_fallthru
      _
  $region6: #{hourglass_forward.3} parent=0 // loop_footer
    %s20 = sadd.s32 1, %s16
  $region7: #{hourglass_forward.3} parent=0 // loop_footer_branch
    %15 = sbr.rel target = $region3
  $region8: #{hourglass_forward.3} parent=0 // loop_exit
    _

// kernel: hourglass_forward.5
$region0: #{hourglass_forward.5}
  #allocation0 [shape = 'u32[]', space=smem, size = 0x4, offset = 0x4, fixed_abs, tag = 'smem constant byte address 0x4 - core index']
  #allocation1 [shape = 'u32[144,128]{1,0:T(1,128)}', space=vmem, size = 0x12000, scoped, tag = 'internal scratch']
  %s0 = inlined_call_operand.vmem [shape: f32[2,16,64], index: 0, kind: input, shape index: {}]
  %s1 = inlined_call_operand.vmem [shape: f32[2,8,256], index: 1, kind: input, shape index: {}, may-alias: {1,11}]
  %s2 = inlined_call_operand.vmem [shape: bf16[8,144], index: 2, kind: input, shape index: {}]
  %s3 = inlined_call_operand.vmem [shape: f32[8,1], index: 3, kind: input, shape index: {}]
  %s4 = inlined_call_operand.vmem [shape: bf16[8,72], index: 4, kind: input, shape index: {}]
  %s5 = inlined_call_operand.vmem [shape: f32[8,1], index: 5, kind: input, shape index: {}]
  %s6 = inlined_call_operand.vmem [shape: bf16[8,72], index: 6, kind: input, shape index: {}]
  %s7 = inlined_call_operand.vmem [shape: f32[8,1], index: 7, kind: input, shape index: {}]
  %s8 = inlined_call_operand.vmem [shape: f32[2,64], index: 8, kind: input, shape index: {}]
  %s9 = inlined_call_operand.vmem [shape: f32[2,256], index: 9, kind: input, shape index: {}]
  %s10 = inlined_call_operand.vmem [shape: bf16[8,16], index: 10, kind: input, shape index: {}]
  %s11 = inlined_call_operand.vmem [shape: f32[2,8,256], index: 11, kind: output, shape index: {}, may-alias: {1,11}]
  %s12 = sld [smem:[#allocation0]]
  $region77: #{hourglass_forward.5} parent=0
    _
  %s14 = ssub.s32 1, %s12
  %s15 = scalar_select 0, %s14, %s12
  loop: start=0, step=1, limit=4
  $region2: #{hourglass_forward.5} parent=0 // loop_pre_header
    _
  $region3: #{hourglass_forward.5} parent=0 // loop_header
    %s17 = sphi 0, %s21
    %p18 = scmp.ge.s32.totalorder %s17, 4
    %s27 = sphi 0, %s29
    %s30 = sphi 0, %s27
    %s31 = sphi 0, %s30
    %s47 = sphi 0, %s31
    %s53 = sphi 0, %s55
    %s56 = sphi 0, %s53
    %s57 = sphi 0, %s56
    %s73 = sphi 0, %s57
    %s77 = sphi 0, %s77
    %s79 = sphi 0, %s77
    %s80 = sphi 0, %s79
    %s94 = sphi 0, %s80
    %s98 = sphi 0, %s98
    %s100 = sphi 0, %s98
    %s101 = sphi 0, %s100
    %s115 = sphi 0, %s101
    %s119 = sphi 0, %s119
    %s121 = sphi 0, %s119
    %s122 = sphi 0, %s121
    %s136 = sphi 0, %s122
    %s140 = sphi 0, %s140
    %s142 = sphi 0, %s140
    %s143 = sphi 0, %s142
    %s157 = sphi 0, %s143
    %s161 = sphi 0, %s161
    %s163 = sphi 0, %s161
    %s164 = sphi 0, %s163
    %s178 = sphi 0, %s164
    %s182 = sphi 0, %s182
    %s184 = sphi 0, %s182
    %s185 = sphi 0, %s184
    %s199 = sphi 0, %s185
    %s203 = sphi 0, %s203
    %s205 = sphi 0, %s203
    %s206 = sphi 0, %s205
    %s220 = sphi 0, %s206
    %s224 = sphi 0, %s224
    %s226 = sphi 0, %s224
    %s227 = sphi 0, %s226
    %s241 = sphi 0, %s227
    %s245 = sphi 0, %s245
    %s247 = sphi 0, %s245
    %s248 = sphi 0, %s247
    %s262 = sphi 0, %s248
    %s268 = sphi 0, %s270
    %s271 = sphi 0, %s268
    %s272 = sphi 0, %s271
    %s288 = sphi 0, %s272
  $region4: #{hourglass_forward.5} parent=0 // loop_header_branch
    %20 = sbr.rel (%p18) target = $region8
  $region5: #{hourglass_forward.5} parent=0 // loop_body
    %s22 = ssub.s32 %s17, 1
    %s23 = ssub.s32 %s17, 2
    %s24 = sadd.s32 %s17, 1
    %s25 = ssub.s32 %s17, %s24
    %p26 = scmp.eq.s32.totalorder %s25, 0
    %s28 = sadd.s32 %s27, 1
    %s29 = scalar_select %p26, %s27, %s28
    %p32 = pneg %p26
    %p33 = scmp.eq.s32.totalorder %s17, 1
    %p34 = por %p32, %p33
    %p35 = scmp.ne.s32.totalorder %s27, %s30
    %p36 = scmp.eq.s32.totalorder %s17, 0
    %p37 = por %p35, %p36
    %p38 = scmp.ne.s32.totalorder %s27, %s30
    %p39 = scmp.eq.s32.totalorder %s22, 1
    %p40 = por %p38, %p39
    %p41 = scmp.ne.s32.totalorder %s30, %s31
    %p42 = scmp.eq.s32.totalorder %s22, 0
    %p43 = por %p41, %p42
    %p44 = scmp.ne.s32.totalorder %s30, %s31
    %p45 = scmp.eq.s32.totalorder %s23, 1
    %p46 = por %p44, %p45
    %p48 = scmp.ne.s32.totalorder %s31, %s47
    %p49 = scmp.eq.s32.totalorder %s23, 0
    %p50 = por %p48, %p49
    %s51 = ssub.s32 %s17, %s24
    %p52 = scmp.eq.s32.totalorder %s51, 0
    %s54 = sadd.s32 %s53, 1
    %s55 = scalar_select %p52, %s53, %s54
    %p58 = pneg %p52
    %p59 = scmp.eq.s32.totalorder %s17, 1
    %p60 = por %p58, %p59
    %p61 = scmp.ne.s32.totalorder %s53, %s56
    %p62 = scmp.eq.s32.totalorder %s17, 0
    %p63 = por %p61, %p62
    %p64 = scmp.ne.s32.totalorder %s53, %s56
    %p65 = scmp.eq.s32.totalorder %s22, 1
    %p66 = por %p64, %p65
    %p67 = scmp.ne.s32.totalorder %s56, %s57
    %p68 = scmp.eq.s32.totalorder %s22, 0
    %p69 = por %p67, %p68
    %p70 = scmp.ne.s32.totalorder %s56, %s57
    %p71 = scmp.eq.s32.totalorder %s23, 1
    %p72 = por %p70, %p71
    %p74 = scmp.ne.s32.totalorder %s57, %s73
    %p75 = scmp.eq.s32.totalorder %s23, 0
    %p76 = por %p74, %p75
    %s78 = sadd.s32 %s77, 1
    %p81 = scmp.eq.s32.totalorder %s17, 1
    %p82 = scmp.ne.s32.totalorder %s77, %s79
    %p83 = scmp.eq.s32.totalorder %s17, 0
    %p84 = por %p82, %p83
    %p85 = scmp.ne.s32.totalorder %s77, %s79
    %p86 = scmp.eq.s32.totalorder %s22, 1
    %p87 = por %p85, %p86
    %p88 = scmp.ne.s32.totalorder %s79, %s80
    %p89 = scmp.eq.s32.totalorder %s22, 0
    %p90 = por %p88, %p89
    %p91 = scmp.ne.s32.totalorder %s79, %s80
    %p92 = scmp.eq.s32.totalorder %s23, 1
    %p93 = por %p91, %p92
    %p95 = scmp.ne.s32.totalorder %s80, %s94
    %p96 = scmp.eq.s32.totalorder %s23, 0
    %p97 = por %p95, %p96
    %s99 = sadd.s32 %s98, 1
    %p102 = scmp.eq.s32.totalorder %s17, 1
    %p103 = scmp.ne.s32.totalorder %s98, %s100
    %p104 = scmp.eq.s32.totalorder %s17, 0
    %p105 = por %p103, %p104
    %p106 = scmp.ne.s32.totalorder %s98, %s100
    %p107 = scmp.eq.s32.totalorder %s22, 1
    %p108 = por %p106, %p107
    %p109 = scmp.ne.s32.totalorder %s100, %s101
    %p110 = scmp.eq.s32.totalorder %s22, 0
    %p111 = por %p109, %p110
    %p112 = scmp.ne.s32.totalorder %s100, %s101
    %p113 = scmp.eq.s32.totalorder %s23, 1
    %p114 = por %p112, %p113
    %p116 = scmp.ne.s32.totalorder %s101, %s115
    %p117 = scmp.eq.s32.totalorder %s23, 0
    %p118 = por %p116, %p117
    %s120 = sadd.s32 %s119, 1
    %p123 = scmp.eq.s32.totalorder %s17, 1
    %p124 = scmp.ne.s32.totalorder %s119, %s121
    %p125 = scmp.eq.s32.totalorder %s17, 0
    %p126 = por %p124, %p125
    %p127 = scmp.ne.s32.totalorder %s119, %s121
    %p128 = scmp.eq.s32.totalorder %s22, 1
    %p129 = por %p127, %p128
    %p130 = scmp.ne.s32.totalorder %s121, %s122
    %p131 = scmp.eq.s32.totalorder %s22, 0
    %p132 = por %p130, %p131
    %p133 = scmp.ne.s32.totalorder %s121, %s122
    %p134 = scmp.eq.s32.totalorder %s23, 1
    %p135 = por %p133, %p134
    %p137 = scmp.ne.s32.totalorder %s122, %s136
    %p138 = scmp.eq.s32.totalorder %s23, 0
    %p139 = por %p137, %p138
    %s141 = sadd.s32 %s140, 1
    %p144 = scmp.eq.s32.totalorder %s17, 1
    %p145 = scmp.ne.s32.totalorder %s140, %s142
    %p146 = scmp.eq.s32.totalorder %s17, 0
    %p147 = por %p145, %p146
    %p148 = scmp.ne.s32.totalorder %s140, %s142
    %p149 = scmp.eq.s32.totalorder %s22, 1
    %p150 = por %p148, %p149
    %p151 = scmp.ne.s32.totalorder %s142, %s143
    %p152 = scmp.eq.s32.totalorder %s22, 0
    %p153 = por %p151, %p152
    %p154 = scmp.ne.s32.totalorder %s142, %s143
    %p155 = scmp.eq.s32.totalorder %s23, 1
    %p156 = por %p154, %p155
    %p158 = scmp.ne.s32.totalorder %s143, %s157
    %p159 = scmp.eq.s32.totalorder %s23, 0
    %p160 = por %p158, %p159
    %s162 = sadd.s32 %s161, 1
    %p165 = scmp.eq.s32.totalorder %s17, 1
    %p166 = scmp.ne.s32.totalorder %s161, %s163
    %p167 = scmp.eq.s32.totalorder %s17, 0
    %p168 = por %p166, %p167
    %p169 = scmp.ne.s32.totalorder %s161, %s163
    %p170 = scmp.eq.s32.totalorder %s22, 1
    %p171 = por %p169, %p170
    %p172 = scmp.ne.s32.totalorder %s163, %s164
    %p173 = scmp.eq.s32.totalorder %s22, 0
    %p174 = por %p172, %p173
    %p175 = scmp.ne.s32.totalorder %s163, %s164
    %p176 = scmp.eq.s32.totalorder %s23, 1
    %p177 = por %p175, %p176
    %p179 = scmp.ne.s32.totalorder %s164, %s178
    %p180 = scmp.eq.s32.totalorder %s23, 0
    %p181 = por %p179, %p180
    %s183 = sadd.s32 %s182, 1
    %p186 = scmp.eq.s32.totalorder %s17, 1
    %p187 = scmp.ne.s32.totalorder %s182, %s184
    %p188 = scmp.eq.s32.totalorder %s17, 0
    %p189 = por %p187, %p188
    %p190 = scmp.ne.s32.totalorder %s182, %s184
    %p191 = scmp.eq.s32.totalorder %s22, 1
    %p192 = por %p190, %p191
    %p193 = scmp.ne.s32.totalorder %s184, %s185
    %p194 = scmp.eq.s32.totalorder %s22, 0
    %p195 = por %p193, %p194
    %p196 = scmp.ne.s32.totalorder %s184, %s185
    %p197 = scmp.eq.s32.totalorder %s23, 1
    %p198 = por %p196, %p197
    %p200 = scmp.ne.s32.totalorder %s185, %s199
    %p201 = scmp.eq.s32.totalorder %s23, 0
    %p202 = por %p200, %p201
    %s204 = sadd.s32 %s203, 1
    %p207 = scmp.eq.s32.totalorder %s17, 1
    %p208 = scmp.ne.s32.totalorder %s203, %s205
    %p209 = scmp.eq.s32.totalorder %s17, 0
    %p210 = por %p208, %p209
    %p211 = scmp.ne.s32.totalorder %s203, %s205
    %p212 = scmp.eq.s32.totalorder %s22, 1
    %p213 = por %p211, %p212
    %p214 = scmp.ne.s32.totalorder %s205, %s206
    %p215 = scmp.eq.s32.totalorder %s22, 0
    %p216 = por %p214, %p215
    %p217 = scmp.ne.s32.totalorder %s205, %s206
    %p218 = scmp.eq.s32.totalorder %s23, 1
    %p219 = por %p217, %p218
    %p221 = scmp.ne.s32.totalorder %s206, %s220
    %p222 = scmp.eq.s32.totalorder %s23, 0
    %p223 = por %p221, %p222
    %s225 = sadd.s32 %s224, 1
    %p228 = scmp.eq.s32.totalorder %s17, 1
    %p229 = scmp.ne.s32.totalorder %s224, %s226
    %p230 = scmp.eq.s32.totalorder %s17, 0
    %p231 = por %p229, %p230
    %p232 = scmp.ne.s32.totalorder %s224, %s226
    %p233 = scmp.eq.s32.totalorder %s22, 1
    %p234 = por %p232, %p233
    %p235 = scmp.ne.s32.totalorder %s226, %s227
    %p236 = scmp.eq.s32.totalorder %s22, 0
    %p237 = por %p235, %p236
    %p238 = scmp.ne.s32.totalorder %s226, %s227
    %p239 = scmp.eq.s32.totalorder %s23, 1
    %p240 = por %p238, %p239
    %p242 = scmp.ne.s32.totalorder %s227, %s241
    %p243 = scmp.eq.s32.totalorder %s23, 0
    %p244 = por %p242, %p243
    %s246 = sadd.s32 %s245, 1
    %p249 = scmp.eq.s32.totalorder %s17, 1
    %p250 = scmp.ne.s32.totalorder %s245, %s247
    %p251 = scmp.eq.s32.totalorder %s17, 0
    %p252 = por %p250, %p251
    %p253 = scmp.ne.s32.totalorder %s245, %s247
    %p254 = scmp.eq.s32.totalorder %s22, 1
    %p255 = por %p253, %p254
    %p256 = scmp.ne.s32.totalorder %s247, %s248
    %p257 = scmp.eq.s32.totalorder %s22, 0
    %p258 = por %p256, %p257
    %p259 = scmp.ne.s32.totalorder %s247, %s248
    %p260 = scmp.eq.s32.totalorder %s23, 1
    %p261 = por %p259, %p260
    %p263 = scmp.ne.s32.totalorder %s248, %s262
    %p264 = scmp.eq.s32.totalorder %s23, 0
    %p265 = por %p263, %p264
    %s266 = ssub.s32 %s17, %s24
    %p267 = scmp.eq.s32.totalorder %s266, 0
    %s269 = sadd.s32 %s268, 1
    %s270 = scalar_select %p267, %s268, %s269
    %p273 = pneg %p267
    %p274 = scmp.eq.s32.totalorder %s17, 1
    %p275 = por %p273, %p274
    %p276 = scmp.ne.s32.totalorder %s268, %s271
    %p277 = scmp.eq.s32.totalorder %s17, 0
    %p278 = por %p276, %p277
    %p279 = scmp.ne.s32.totalorder %s268, %s271
    %p280 = scmp.eq.s32.totalorder %s22, 1
    %p281 = por %p279, %p280
    %p282 = scmp.ne.s32.totalorder %s271, %s272
    %p283 = scmp.eq.s32.totalorder %s22, 0
    %p284 = por %p282, %p283
    %p285 = scmp.ne.s32.totalorder %s271, %s272
    %p286 = scmp.eq.s32.totalorder %s23, 1
    %p287 = por %p285, %p286
    %p289 = scmp.ne.s32.totalorder %s272, %s288
    %p290 = scmp.eq.s32.totalorder %s23, 0
    %p291 = por %p289, %p290
    %p292 = scmp.le.s32.totalorder 1, %s17
    %p293 = scmp.lt.s32.totalorder %s17, 3
    %p294 = pnand %p292, %p293
    %p295 = pneg %p294
    // Predicated region
    $region9: #{hourglass_forward.5} parent=5 // pred_check
      _
    $region10: #{hourglass_forward.5} parent=5 // pred_check_branch
      %297 = sbr.rel (%p294) target = $region12
    $region11: #{hourglass_forward.5} parent=5 // pred_region
      %s298 = ssub.s32 %s17, 1
      // Predicated region
      $region13: #{hourglass_forward.5} parent=11 // pred_check
        %p299 = pneg %p90
      $region14: #{hourglass_forward.5} parent=11 // pred_check_branch
        %301 = sbr.rel (%p299) target = $region16
      $region15: #{hourglass_forward.5} parent=11 // pred_region
        _
      $region16: #{hourglass_forward.5} parent=11 // pred_fallthru
        _
      // Predicated region
      $region17: #{hourglass_forward.5} parent=11 // pred_check
        %p302 = pneg %p111
      $region18: #{hourglass_forward.5} parent=11 // pred_check_branch
        %304 = sbr.rel (%p302) target = $region20
      $region19: #{hourglass_forward.5} parent=11 // pred_region
        _
      $region20: #{hourglass_forward.5} parent=11 // pred_fallthru
        _
      // Predicated region
      $region21: #{hourglass_forward.5} parent=11 // pred_check
        %p305 = pneg %p132
      $region22: #{hourglass_forward.5} parent=11 // pred_check_branch
        %307 = sbr.rel (%p305) target = $region24
      $region23: #{hourglass_forward.5} parent=11 // pred_region
        _
      $region24: #{hourglass_forward.5} parent=11 // pred_fallthru
        _
      // Predicated region
      $region25: #{hourglass_forward.5} parent=11 // pred_check
        %p308 = pneg %p153
      $region26: #{hourglass_forward.5} parent=11 // pred_check_branch
        %310 = sbr.rel (%p308) target = $region28
      $region27: #{hourglass_forward.5} parent=11 // pred_region
        _
      $region28: #{hourglass_forward.5} parent=11 // pred_fallthru
        _
      // Predicated region
      $region29: #{hourglass_forward.5} parent=11 // pred_check
        %p311 = pneg %p174
      $region30: #{hourglass_forward.5} parent=11 // pred_check_branch
        %313 = sbr.rel (%p311) target = $region32
      $region31: #{hourglass_forward.5} parent=11 // pred_region
        _
      $region32: #{hourglass_forward.5} parent=11 // pred_fallthru
        _
      // Predicated region
      $region33: #{hourglass_forward.5} parent=11 // pred_check
        %p314 = pneg %p195
      $region34: #{hourglass_forward.5} parent=11 // pred_check_branch
        %316 = sbr.rel (%p314) target = $region36
      $region35: #{hourglass_forward.5} parent=11 // pred_region
        _
      $region36: #{hourglass_forward.5} parent=11 // pred_fallthru
        _
      // Predicated region
      $region37: #{hourglass_forward.5} parent=11 // pred_check
        %p317 = pneg %p216
      $region38: #{hourglass_forward.5} parent=11 // pred_check_branch
        %319 = sbr.rel (%p317) target = $region40
      $region39: #{hourglass_forward.5} parent=11 // pred_region
        _
      $region40: #{hourglass_forward.5} parent=11 // pred_fallthru
        _
      // Predicated region
      $region41: #{hourglass_forward.5} parent=11 // pred_check
        %p320 = pneg %p237
      $region42: #{hourglass_forward.5} parent=11 // pred_check_branch
        %322 = sbr.rel (%p320) target = $region44
      $region43: #{hourglass_forward.5} parent=11 // pred_region
        _
      $region44: #{hourglass_forward.5} parent=11 // pred_fallthru
        _
      // Predicated region
      $region45: #{hourglass_forward.5} parent=11 // pred_check
        %p323 = pneg %p258
      $region46: #{hourglass_forward.5} parent=11 // pred_check_branch
        %325 = sbr.rel (%p323) target = $region48
      $region47: #{hourglass_forward.5} parent=11 // pred_region
        _
      $region48: #{hourglass_forward.5} parent=11 // pred_fallthru
        _
    $region12: #{hourglass_forward.5} parent=5 // pred_fallthru
      _
    %p326 = scmp.lt.s32.totalorder %s17, 2
    // Predicated region
    $region49: #{hourglass_forward.5} parent=5 // pred_check
      %p327 = pneg %p326
    $region50: #{hourglass_forward.5} parent=5 // pred_check_branch
      %329 = sbr.rel (%p327) target = $region52
    $region51: #{hourglass_forward.5} parent=5 // pred_region
      // Predicated region
      $region53: #{hourglass_forward.5} parent=51 // pred_check
        %p330 = pneg %p37
      $region54: #{hourglass_forward.5} parent=51 // pred_check_branch
        %332 = sbr.rel (%p330) target = $region56
      $region55: #{hourglass_forward.5} parent=51 // pred_region
        %p333 = scmp.lt.s32.totalorder %s17, 1
        %s334 = scalar_select %p333, %s17, 1
        %s335 = smul.addr %s334, 2
        %s336 = smul.addr %s335, 8
        %s337 = scalar_lea.vmem %s0, %s336
      $region56: #{hourglass_forward.5} parent=51 // pred_fallthru
        _
      // Predicated region
      $region57: #{hourglass_forward.5} parent=51 // pred_check
        %p338 = pneg %p63
      $region58: #{hourglass_forward.5} parent=51 // pred_check_branch
        %340 = sbr.rel (%p338) target = $region60
      $region59: #{hourglass_forward.5} parent=51 // pred_region
        %p341 = scmp.lt.s32.totalorder %s17, 1
        %s342 = scalar_select %p341, %s17, 1
        %s343 = smul.addr %s342, 2
        %s344 = smul.addr %s343, 8
        %s345 = scalar_lea.vmem %s1, %s344
      $region60: #{hourglass_forward.5} parent=51 // pred_fallthru
        _
    $region52: #{hourglass_forward.5} parent=5 // pred_fallthru
      _
    %p346 = scmp.le.s32.totalorder 1, %s17
    %p347 = scmp.lt.s32.totalorder %s17, 3
    %p348 = pnand %p346, %p347
    %p349 = pneg %p348
    // Predicated region
    $region61: #{hourglass_forward.5} parent=5 // pred_check
      _
    $region62: #{hourglass_forward.5} parent=5 // pred_check_branch
      %351 = sbr.rel (%p348) target = $region64
    $region63: #{hourglass_forward.5} parent=5 // pred_region
      %s352 = ssub.s32 %s17, 1
      %p353 = scmp.lt.s32.totalorder %s22, 1
      %s354 = scalar_select %p353, %s22, 1
      %s355 = smul.addr %s354, 2
      %s356 = smul.addr %s355, 8
      %s357 = scalar_lea.vmem %s0, %s356
      %p358 = pneg %p43
      %p359 = pneg %p40
      %p360 = scmp.lt.s32.totalorder %s22, 1
      %s361 = scalar_select %p360, %s22, 1
      %s362 = smul.addr %s361, 2
      %s363 = smul.addr %s362, 8
      %s364 = scalar_lea.vmem %s1, %s363
      %p365 = pneg %p69
      %p366 = pneg %p66
      %p367 = pneg %p90
      %p368 = pneg %p87
      %p369 = pneg %p111
      %p370 = pneg %p108
      %p371 = pneg %p132
      %p372 = pneg %p129
      %p373 = pneg %p153
      %p374 = pneg %p150
      %p375 = pneg %p174
      %p376 = pneg %p171
      %p377 = pneg %p195
      %p378 = pneg %p192
      %p379 = pneg %p216
      %p380 = pneg %p213
      %p381 = pneg %p237
      %p382 = pneg %p234
      %p383 = pneg %p258
      %p384 = pneg %p255
      %p385 = pneg %p284
      %p386 = pneg %p281
      %p387 = scmp.lt.s32.totalorder %s22, 1
      %s388 = scalar_select %p387, %s22, 1
      %s389 = smul.addr %s388, 2
      %s390 = smul.addr %s389, 8
      %s391 = scalar_lea.vmem %s11, %s390
      %p392 = scmp.lt.s32.totalorder %s22, 1
      %s393 = scalar_select %p392, %s22, 1
      %s394 = smul.addr %s393, 2
      %s395 = smul.addr %s394, 8
      %s396 = scalar_lea.vmem %s0, %s395
      %p397 = scmp.lt.s32.totalorder %s22, 1
      %s398 = scalar_select %p397, %s22, 1
      %s399 = smul.addr %s398, 2
      %s400 = smul.addr %s399, 8
      %s401 = scalar_lea.vmem %s1, %s400
      %p402 = scmp.lt.s32.totalorder %s22, 1
      %s403 = scalar_select %p402, %s22, 1
      %s404 = smul.addr %s403, 2
      %s405 = smul.addr %s404, 8
      %s406 = scalar_lea.vmem %s11, %s405
      %v408 = vld [vmem:[%s8] sm:$0x3]
      %v409 = vld [vmem:[%s9] sm:$0xf]
      %v410 = vld [vmem:[%s396] sm:$0xff]
      %v411 = vld [vmem:[%s396 + $0x8] sm:$0xff]
      %v412 = vld [vmem:[%s2] sm:$0xff]
      %v413 = vld [vmem:[%s3] sm:$0xff]
      %v414 = vpack.c.bf16 %v411, %v410
      %v415 = vpack.c.bf16 %v408, %v408
      %v417 = vpack.i.b16 %v415, %v415
      %v419 = vlaneseq
      %v420 = vshrl.u32 %v419, 7
      %v421 = vsub.s32 0, %v420
      %v422 = vrot.slane %v417, %v421
      %v423 = vmul.bf16 %v414, %v422
      %v424 = vshrl.u32 %v415, 16
      %v425 = vpack.i.b16 %v424, %v424
      %v427 = vlaneseq
      %v428 = vshrl.u32 %v427, 7
      %v429 = vsub.s32 0, %v428
      %v430 = vrot.slane %v425, %v429
      %v431 = vmul.bf16 %v414, %v430
      %vm432 = vcmask 523264
      %v435 = vsel %vm432, %v423, 0
      %v437 = vsel %vm432, %v414, 0
      %v439 = vsel %vm432, %v431, 0
      %442 = vrot.lane.b32.xlu0 0, 127
      %v443 = vpop.permute.xlu0 %442
      %444 = vrot.lane.b32.xlu0 %v437, 127
      %v445 = vpop.permute.xlu0 %444
      %vm446 = vcmask 1039360
      %v447 = vsel %vm446, %v443, %v445
      %449 = vrot.lane.b32.xlu0 0, 126
      %v450 = vpop.permute.xlu0 %449
      %451 = vrot.lane.b32.xlu0 %v439, 126
      %v452 = vpop.permute.xlu0 %451
      %vm453 = vcmask 1031168
      %v454 = vsel %vm453, %v450, %v452
      %456 = vrot.lane.b32.xlu0 0, 120
      %v457 = vpop.permute.xlu0 %456
      %458 = vrot.lane.b32.xlu0 %v435, 120
      %v459 = vpop.permute.xlu0 %458
      %vm460 = vcmask 982016
      %v461 = vsel %vm460, %v457, %v459
      %462 = vrot.lane.b32.xlu0 %v437, 119
      %v463 = vpop.permute.xlu0 %462
      %464 = vrot.lane.b32.xlu0 %v439, 118
      %v465 = vpop.permute.xlu0 %464
      %466 = vrot.lane.b32.xlu0 %v435, 112
      %v467 = vpop.permute.xlu0 %466
      %468 = vrot.lane.b32.xlu0 %v437, 111
      %v469 = vpop.permute.xlu0 %468
      %470 = vrot.lane.b32.xlu0 %v439, 110
      %v471 = vpop.permute.xlu0 %470
      %473 = vset.pattern.permute.xlu0 0
      %474 = vperm.xlu0 %473, %v413
      %v475 = vpop.permute.xlu0 %474
      %v478 = vunpack.c.l.b16 %v412
      %v479 = vunpack.c.h.b16 %v412
      %v480 = vpack.c.b16 %v478, %v478
      %v481 = vpack.c.b16 %v479, %v479
      %483 = vrot.lane.b32.xlu0 0, 9
      %v484 = vpop.permute.xlu0 %483
      %485 = vrot.lane.b32.xlu0 %v435, 9
      %v486 = vpop.permute.xlu0 %485
      %487 = vrot.lane.b32.xlu0 %v447, 9
      %v488 = vpop.permute.xlu0 %487
      %489 = vrot.lane.b32.xlu0 %v445, 9
      %v490 = vpop.permute.xlu0 %489
      %491 = vrot.lane.b32.xlu0 %v454, 9
      %v492 = vpop.permute.xlu0 %491
      %493 = vrot.lane.b32.xlu0 %v452, 9
      %v494 = vpop.permute.xlu0 %493
      %495 = vrot.lane.b32.xlu0 %v461, 9
      %v496 = vpop.permute.xlu0 %495
      %497 = vrot.lane.b32.xlu0 %v459, 9
      %v498 = vpop.permute.xlu0 %497
      %499 = vrot.lane.b32.xlu0 %v463, 9
      %v500 = vpop.permute.xlu0 %499
      %501 = vrot.lane.b32.xlu0 %v465, 9
      %v502 = vpop.permute.xlu0 %501
      %503 = vrot.lane.b32.xlu0 %v467, 9
      %v504 = vpop.permute.xlu0 %503
      %505 = vrot.lane.b32.xlu0 %v469, 9
      %v506 = vpop.permute.xlu0 %505
      %507 = vrot.lane.b32.xlu0 %v471, 9
      %v508 = vpop.permute.xlu0 %507
      %vm509 = vcmask 72704
      %v510 = vsel %vm509, %v484, %v486
      %v511 = vsel %vm509, %v488, %v490
      %v512 = vsel %vm509, %v492, %v494
      %v513 = vsel %vm509, %v496, %v498
      %vm523 = vcmask 130048
      %v525 = vsel %vm523, %v481, 0
      %527 = vmatprep.subr.bf16.mxu0 0
      %528 = vmatpush1.bf16.msra.mxu0 %v506
      %529 = vmatprep.subr.bf16.mxu0 0
      %530 = vmatpush1.bf16.msra.mxu0 %v504
      %531 = vmatprep.subr.bf16.mxu0 0
      %532 = vmatpush1.bf16.msra.mxu0 %v502
      %533 = vmatprep.subr.bf16.mxu0 0
      %534 = vmatpush1.bf16.msra.mxu0 %v500
      %535 = vmatprep.subr.bf16.mxu0 0
      %536 = vmatpush1.bf16.msra.mxu0 %v513
      %537 = vmatprep.subr.bf16.mxu0 0
      %538 = vmatpush1.bf16.msra.mxu0 %v512
      %539 = vmatprep.subr.bf16.mxu0 0
      %540 = vmatpush1.bf16.msra.mxu0 %v511
      %541 = vmatprep.subr.bf16.mxu0 0
      %542 = vmatpush1.bf16.msra.mxu0 %v510
      %543 = vmatprep.subr.bf16.mxu0 0
      %544 = vmatpush2.bf16.msra.mxu0 0
      %545 = vmatprep.subr.bf16.mxu0 0
      %546 = vmatpush2.bf16.msra.mxu0 0
      %547 = vmatprep.subr.bf16.mxu0 0
      %548 = vmatpush2.bf16.msra.mxu0 0
      %549 = vmatprep.subr.bf16.mxu0 0
      %550 = vmatpush2.bf16.msra.mxu0 0
      %551 = vmatprep.subr.bf16.mxu0 0
      %552 = vmatpush2.bf16.msra.mxu0 0
      %553 = vmatprep.subr.bf16.mxu0 0
      %554 = vmatpush2.bf16.msra.mxu0 0
      %555 = vmatprep.subr.bf16.mxu0 0
      %556 = vmatpush2.bf16.msra.mxu0 0
      %557 = vmatprep.subr.bf16.mxu0 0
      %558 = vmatpush2.bf16.msra.mxu0 %v508
      %559 = vmatprep.mubr.bf16.mxu0 %v525
      %560 = vmatmul.mubr.bf16.gmra.mxu0 %v480
      %v561 = vpop.f32.mrf.mxu0
      %v562 = vadd.f32 %v475, %v561
      %v563 = vpop.f32.mrf.mxu0
      %v564 = vpop.f32.mrf.mxu0
      %v565 = vpop.f32.mrf.mxu0
      %566 = vdwg.mxu0
      %vm567 = vcmp.gt.f32.partialorder %v562, 0.0
      %v568 = vmul.f32 %v562, 0.01
      %v569 = vsel %vm567, %v562, %v568
      %v570 = vld [vmem:[%s10] sm:$0xf]
      %572 = vrot.lane.b32.xlu0 %v569, 120
      %v573 = vpop.permute.xlu0 %572
      %575 = vrot.lane.b32.xlu0 %v569, 112
      %v576 = vpop.permute.xlu0 %575
      %578 = vrot.lane.b32.xlu0 %v569, 104
      %v579 = vpop.permute.xlu0 %578
      %581 = vrot.lane.b32.xlu0 %v569, 96
      %v582 = vpop.permute.xlu0 %581
      %584 = vrot.lane.b32.xlu0 %v569, 88
      %v585 = vpop.permute.xlu0 %584
      %587 = vrot.lane.b32.xlu0 %v569, 80
      %v588 = vpop.permute.xlu0 %587
      %590 = vrot.lane.b32.xlu0 %v569, 72
      %v591 = vpop.permute.xlu0 %590
      %v593 = vpack.c.bf16 %v573, %v569
      %v594 = vpack.c.bf16 %v579, %v576
      %v595 = vpack.c.bf16 %v585, %v582
      %v596 = vpack.c.bf16 %v591, %v588
      %vm597 = vcmask 64512
      %v599 = vsel %vm597, %v593, 0
      %v602 = vsel %vm597, %v594, 0
      %v605 = vsel %vm597, %v595, 0
      %v608 = vsel %vm597, %v596, 0
      %vm610 = vcmask 1043456
      %v612 = vsel %vm610, %v570, 0
      %614 = vmatprep.subr.bf16.mxu0 0
      %615 = vmatpush1.bf16.msra.mxu0 0
      %616 = vmatprep.subr.bf16.mxu0 0
      %617 = vmatpush1.bf16.msra.mxu0 0
      %618 = vmatprep.subr.bf16.mxu0 0
      %619 = vmatpush1.bf16.msra.mxu0 0
      %620 = vmatprep.subr.bf16.mxu0 0
      %621 = vmatpush1.bf16.msra.mxu0 0
      %622 = vmatprep.subr.bf16.mxu0 0
      %623 = vmatpush1.bf16.msra.mxu0 0
      %624 = vmatprep.subr.bf16.mxu0 0
      %625 = vmatpush1.bf16.msra.mxu0 0
      %626 = vmatprep.subr.bf16.mxu0 0
      %627 = vmatpush1.bf16.msra.mxu0 0
      %628 = vmatprep.subr.bf16.mxu0 0
      %629 = vmatpush1.bf16.msra.mxu0 %v612
      %630 = vmatprep.subr.bf16.mxu0 0
      %631 = vmatpush2.bf16.msra.mxu0 0
      %632 = vmatprep.subr.bf16.mxu0 0
      %633 = vmatpush2.bf16.msra.mxu0 0
      %634 = vmatprep.subr.bf16.mxu0 0
      %635 = vmatpush2.bf16.msra.mxu0 0
      %636 = vmatprep.subr.bf16.mxu0 0
      %637 = vmatpush2.bf16.msra.mxu0 0
      %638 = vmatprep.subr.bf16.mxu0 0
      %639 = vmatpush2.bf16.msra.mxu0 0
      %640 = vmatprep.subr.bf16.mxu0 0
      %641 = vmatpush2.bf16.msra.mxu0 0
      %642 = vmatprep.subr.bf16.mxu0 0
      %643 = vmatpush2.bf16.msra.mxu0 0
      %644 = vmatprep.subr.bf16.mxu0 0
      %645 = vmatpush2.bf16.msra.mxu0 0
      %646 = vmatprep.mubr.bf16.mxu0 0
      %647 = vmatmul.mubr.bf16.gmra.mxu0 %v599
      %v648 = vpop.f32.mrf.mxu0
      %v649 = vadd.f32 0.0, %v648
      %v650 = vpop.f32.mrf.mxu0
      %v651 = vpop.f32.mrf.mxu0
      %v652 = vadd.f32 0.0, %v651
      %v653 = vpop.f32.mrf.mxu0
      %654 = vmatprep.mubr.bf16.mxu0 0
      %655 = vmatmul.mubr.bf16.gmra.mxu0 %v602
      %v656 = vpop.f32.mrf.mxu0
      %v657 = vadd.f32 0.0, %v656
      %v658 = vpop.f32.mrf.mxu0
      %v659 = vpop.f32.mrf.mxu0
      %v660 = vadd.f32 0.0, %v659
      %v661 = vpop.f32.mrf.mxu0
      %662 = vmatprep.mubr.bf16.mxu0 0
      %663 = vmatmul.mubr.bf16.gmra.mxu0 %v605
      %v664 = vpop.f32.mrf.mxu0
      %v665 = vadd.f32 0.0, %v664
      %v666 = vpop.f32.mrf.mxu0
      %v667 = vpop.f32.mrf.mxu0
      %v668 = vadd.f32 0.0, %v667
      %v669 = vpop.f32.mrf.mxu0
      %670 = vmatprep.mubr.bf16.mxu0 0
      %671 = vmatmul.mubr.bf16.gmra.mxu0 %v608
      %v672 = vpop.f32.mrf.mxu0
      %v673 = vadd.f32 0.0, %v672
      %v674 = vpop.f32.mrf.mxu0
      %v675 = vpop.f32.mrf.mxu0
      %v676 = vadd.f32 0.0, %v675
      %v677 = vpop.f32.mrf.mxu0
      %678 = vdwg.mxu0
      %680 = vrot.lane.b32.xlu0 %v649, 16
      %v681 = vpop.permute.xlu0 %680
      %684 = vrot.lane.b32.xlu0 %v652, 32
      %v685 = vpop.permute.xlu0 %684
      %687 = vrot.lane.b32.xlu0 %v652, 48
      %v688 = vpop.permute.xlu0 %687
      %691 = vrot.lane.b32.xlu0 %v657, 64
      %v692 = vpop.permute.xlu0 %691
      %694 = vrot.lane.b32.xlu0 %v657, 80
      %v695 = vpop.permute.xlu0 %694
      %698 = vrot.lane.b32.xlu0 %v660, 96
      %v699 = vpop.permute.xlu0 %698
      %701 = vrot.lane.b32.xlu0 %v660, 112
      %v702 = vpop.permute.xlu0 %701
      %705 = vrot.lane.b32.xlu0 %v665, 16
      %v706 = vpop.permute.xlu0 %705
      %709 = vrot.lane.b32.xlu0 %v668, 32
      %v710 = vpop.permute.xlu0 %709
      %712 = vrot.lane.b32.xlu0 %v668, 48
      %v713 = vpop.permute.xlu0 %712
      %716 = vrot.lane.b32.xlu0 %v673, 64
      %v717 = vpop.permute.xlu0 %716
      %719 = vrot.lane.b32.xlu0 %v673, 80
      %v720 = vpop.permute.xlu0 %719
      %723 = vrot.lane.b32.xlu0 %v676, 96
      %v724 = vpop.permute.xlu0 %723
      %726 = vrot.lane.b32.xlu0 %v676, 112
      %v727 = vpop.permute.xlu0 %726
      %v729 = vsel %vm523, %v649, %v681
      %vm730 = vcmask 261120
      %v731 = vsel %vm730, %v729, %v685
      %vm732 = vcmask 392192
      %v733 = vsel %vm732, %v731, %v688
      %v734 = vsel %vm432, %v733, %v692
      %vm735 = vcmask 654336
      %v736 = vsel %vm735, %v734, %v695
      %vm737 = vcmask 785408
      %v738 = vsel %vm737, %v736, %v699
      %vm739 = vcmask 916480
      %v740 = vsel %vm739, %v738, %v702
      %v741 = vsel %vm523, %v665, %v706
      %v742 = vsel %vm730, %v741, %v710
      %v743 = vsel %vm732, %v742, %v713
      %v744 = vsel %vm432, %v743, %v717
      %v745 = vsel %vm735, %v744, %v720
      %v746 = vsel %vm737, %v745, %v724
      %v747 = vsel %vm739, %v746, %v727
      %v748 = vld [vmem:[%s4] sm:$0xf]
      %v749 = vld [vmem:[%s5] sm:$0xff]
      %v750 = vpack.c.bf16 %v740, %v740
      %v751 = vpack.c.bf16 %v747, %v747
      %v753 = vlaneseq
      %v754 = vshrl.u32 %v753, 7
      %v755 = vsub.s32 0, %v754
      %v756 = vrot.slane %v409, %v755
      %v757 = vlaneseq
      %v758 = vshrl.u32 %v757, 7
      %v759 = vsub.s32 2, %v758
      %v760 = vrot.slane %v409, %v759
      %v763 = vpack.c.bf16 %v756, %v756
      %v764 = vpack.c.bf16 %v760, %v760
      %v766 = vpack.i.b16 %v763, %v763
      %v768 = vlaneseq
      %v769 = vshrl.u32 %v768, 7
      %v770 = vsub.s32 0, %v769
      %v771 = vrot.slane %v766, %v770
      %v773 = vpack.i.b16 %v764, %v764
      %v775 = vlaneseq
      %v776 = vshrl.u32 %v775, 7
      %v777 = vsub.s32 0, %v776
      %v778 = vrot.slane %v773, %v777
      %v779 = vmul.bf16 %v750, %v771
      %v780 = vmul.bf16 %v751, %v778
      %v781 = vlaneseq
      %v782 = vshrl.u32 %v781, 7
      %v783 = vsub.s32 1, %v782
      %v784 = vrot.slane %v409, %v783
      %v785 = vlaneseq
      %v786 = vshrl.u32 %v785, 7
      %v787 = vsub.s32 3, %v786
      %v788 = vrot.slane %v409, %v787
      %v791 = vpack.c.bf16 %v784, %v784
      %v792 = vpack.c.bf16 %v788, %v788
      %v794 = vshrl.u32 %v791, 16
      %v795 = vpack.i.b16 %v794, %v794
      %v797 = vlaneseq
      %v798 = vshrl.u32 %v797, 7
      %v799 = vsub.s32 0, %v798
      %v800 = vrot.slane %v795, %v799
      %v802 = vshrl.u32 %v792, 16
      %v803 = vpack.i.b16 %v802, %v802
      %v805 = vlaneseq
      %v806 = vshrl.u32 %v805, 7
      %v807 = vsub.s32 0, %v806
      %v808 = vrot.slane %v803, %v807
      %v809 = vmul.bf16 %v750, %v800
      %v810 = vmul.bf16 %v751, %v808
      %v813 = vrot.slane 0, 4
      %v814 = vrot.slane %v750, 4
      %v815 = vrot.slane %v751, 4
      %816 = vrot.lane.b32.xlu0 %v813, 127
      %v817 = vpop.permute.xlu0 %816
      %818 = vrot.lane.b32.xlu0 %v814, 127
      %v819 = vpop.permute.xlu0 %818
      %820 = vrot.lane.b32.xlu0 %v815, 127
      %v821 = vpop.permute.xlu0 %820
      %v822 = vsel %vm446, %v817, %v819
      %v823 = vsel %vm446, %v819, %v821
      %826 = vrot.lane.b32.xlu0 %v809, 126
      %v827 = vpop.permute.xlu0 %826
      %828 = vrot.lane.b32.xlu0 %v810, 126
      %v829 = vpop.permute.xlu0 %828
      %v830 = vsel %vm453, %v450, %v827
      %v831 = vsel %vm453, %v827, %v829
      %v834 = vrot.slane %v779, 4
      %v835 = vrot.slane %v780, 4
      %836 = vrot.lane.b32.xlu0 %v813, 112
      %v837 = vpop.permute.xlu0 %836
      %838 = vrot.lane.b32.xlu0 %v834, 112
      %v839 = vpop.permute.xlu0 %838
      %840 = vrot.lane.b32.xlu0 %v835, 112
      %v841 = vpop.permute.xlu0 %840
      %vm842 = vcmask 916480
      %v843 = vsel %vm842, %v837, %v839
      %v844 = vsel %vm842, %v839, %v841
      %845 = vrot.lane.b32.xlu0 %v750, 111
      %v846 = vpop.permute.xlu0 %845
      %847 = vrot.lane.b32.xlu0 %v751, 111
      %v848 = vpop.permute.xlu0 %847
      %vm849 = vcmask 908288
      %v850 = vsel %vm849, %v846, %v848
      %v851 = vrot.slane %v809, 4
      %v852 = vrot.slane %v810, 4
      %853 = vrot.lane.b32.xlu0 %v851, 110
      %v854 = vpop.permute.xlu0 %853
      %855 = vrot.lane.b32.xlu0 %v852, 110
      %v856 = vpop.permute.xlu0 %855
      %857 = vrot.lane.b32.xlu0 %v813, 110
      %v858 = vpop.permute.xlu0 %857
      %vm859 = vcmask 900096
      %v860 = vsel %vm859, %v854, %v856
      %v861 = vsel %vm859, %v856, %v858
      %862 = vrot.lane.b32.xlu0 %v779, 96
      %v863 = vpop.permute.xlu0 %862
      %864 = vrot.lane.b32.xlu0 %v780, 96
      %v865 = vpop.permute.xlu0 %864
      %866 = vrot.lane.b32.xlu0 0, 96
      %v867 = vpop.permute.xlu0 %866
      %vm868 = vcmask 785408
      %v869 = vsel %vm868, %v863, %v865
      %v870 = vsel %vm868, %v865, %v867
      %871 = vrot.lane.b32.xlu0 %v814, 95
      %v872 = vpop.permute.xlu0 %871
      %873 = vrot.lane.b32.xlu0 %v815, 95
      %v874 = vpop.permute.xlu0 %873
      %875 = vrot.lane.b32.xlu0 %v813, 95
      %v876 = vpop.permute.xlu0 %875
      %vm877 = vcmask 777216
      %v878 = vsel %vm877, %v872, %v874
      %v879 = vsel %vm877, %v874, %v876
      %880 = vrot.lane.b32.xlu0 %v809, 94
      %v881 = vpop.permute.xlu0 %880
      %882 = vrot.lane.b32.xlu0 %v810, 94
      %v883 = vpop.permute.xlu0 %882
      %884 = vrot.lane.b32.xlu0 0, 94
      %v885 = vpop.permute.xlu0 %884
      %vm886 = vcmask 769024
      %v887 = vsel %vm886, %v881, %v883
      %v888 = vsel %vm886, %v883, %v885
      %v890 = vsel %vm610, 0, %v822
      %v893 = vsel %vm610, %v779, %v823
      %v896 = vsel %vm610, %v780, %v821
      %v899 = vsel %vm610, %v830, %v843
      %v902 = vsel %vm610, %v831, %v844
      %v905 = vsel %vm610, %v829, %v841
      %v908 = vsel %vm610, %v846, %v854
      %v911 = vsel %vm610, %v850, %v860
      %v914 = vsel %vm610, %v848, %v861
      %v917 = vsel %vm610, %v863, %v872
      %v920 = vsel %vm610, %v869, %v878
      %v923 = vsel %vm610, %v870, %v879
      %925 = vset.pattern.permute.xlu0 0
      %926 = vperm.xlu0 %925, %v749
      %v927 = vpop.permute.xlu0 %926
      %941 = vrot.lane.b32.xlu0 %v890, 17
      %v942 = vpop.permute.xlu0 %941
      %943 = vrot.lane.b32.xlu0 %v893, 17
      %v944 = vpop.permute.xlu0 %943
      %945 = vrot.lane.b32.xlu0 %v896, 17
      %v946 = vpop.permute.xlu0 %945
      %947 = vrot.lane.b32.xlu0 %v899, 17
      %v948 = vpop.permute.xlu0 %947
      %949 = vrot.lane.b32.xlu0 %v902, 17
      %v950 = vpop.permute.xlu0 %949
      %951 = vrot.lane.b32.xlu0 %v905, 17
      %v952 = vpop.permute.xlu0 %951
      %953 = vrot.lane.b32.xlu0 %v908, 17
      %v954 = vpop.permute.xlu0 %953
      %955 = vrot.lane.b32.xlu0 %v911, 17
      %v956 = vpop.permute.xlu0 %955
      %957 = vrot.lane.b32.xlu0 %v914, 17
      %v958 = vpop.permute.xlu0 %957
      %959 = vrot.lane.b32.xlu0 %v917, 17
      %v960 = vpop.permute.xlu0 %959
      %961 = vrot.lane.b32.xlu0 %v920, 17
      %v962 = vpop.permute.xlu0 %961
      %963 = vrot.lane.b32.xlu0 %v923, 17
      %v964 = vpop.permute.xlu0 %963
      %965 = vrot.lane.b32.xlu0 %v881, 17
      %v966 = vpop.permute.xlu0 %965
      %967 = vrot.lane.b32.xlu0 %v887, 17
      %v968 = vpop.permute.xlu0 %967
      %969 = vrot.lane.b32.xlu0 %v888, 17
      %v970 = vpop.permute.xlu0 %969
      %vm971 = vcmask 138240
      %v972 = vsel %vm971, %v942, %v944
      %v973 = vsel %vm971, %v944, %v946
      %v974 = vsel %vm971, %v948, %v950
      %v975 = vsel %vm971, %v950, %v952
      %v976 = vsel %vm971, %v954, %v956
      %v977 = vsel %vm971, %v956, %v958
      %v978 = vsel %vm971, %v960, %v962
      %v979 = vsel %vm971, %v962, %v964
      %v980 = vsel %vm971, %v966, %v968
      %v981 = vsel %vm971, %v968, %v970
      %vm990 = vcmask 588800
      %v992 = vsel %vm990, %v748, 0
      %v995 = vsel %vm610, %v980, 0
      %v998 = vsel %vm610, %v981, 0
      %1000 = vmatprep.subr.bf16.mxu0 0
      %1001 = vmatpush1.bf16.msra.mxu0 0
      %1002 = vmatprep.subr.bf16.mxu0 0
      %1003 = vmatpush1.bf16.msra.mxu0 0
      %1004 = vmatprep.subr.bf16.mxu0 0
      %1005 = vmatpush1.bf16.msra.mxu0 0
      %1006 = vmatprep.subr.bf16.mxu0 %v998
      %1007 = vmatpush1.bf16.msra.mxu0 %v995
      %1008 = vmatprep.subr.bf16.mxu0 %v979
      %1009 = vmatpush1.bf16.msra.mxu0 %v978
      %1010 = vmatprep.subr.bf16.mxu0 %v977
      %1011 = vmatpush1.bf16.msra.mxu0 %v976
      %1012 = vmatprep.subr.bf16.mxu0 %v975
      %1013 = vmatpush1.bf16.msra.mxu0 %v974
      %1014 = vmatprep.subr.bf16.mxu0 %v973
      %1015 = vmatpush1.bf16.msra.mxu0 %v972
      %1016 = vmatprep.subr.bf16.mxu0 0
      %1017 = vmatpush2.bf16.msra.mxu0 0
      %1018 = vmatprep.subr.bf16.mxu0 0
      %1019 = vmatpush2.bf16.msra.mxu0 0
      %1020 = vmatprep.subr.bf16.mxu0 0
      %1021 = vmatpush2.bf16.msra.mxu0 0
      %1022 = vmatprep.subr.bf16.mxu0 0
      %1023 = vmatpush2.bf16.msra.mxu0 0
      %1024 = vmatprep.subr.bf16.mxu0 0
      %1025 = vmatpush2.bf16.msra.mxu0 0
      %1026 = vmatprep.subr.bf16.mxu0 0
      %1027 = vmatpush2.bf16.msra.mxu0 0
      %1028 = vmatprep.subr.bf16.mxu0 0
      %1029 = vmatpush2.bf16.msra.mxu0 0
      %1030 = vmatprep.subr.bf16.mxu0 0
      %1031 = vmatpush2.bf16.msra.mxu0 0
      %1032 = vmatprep.mubr.bf16.mxu0 0
      %1033 = vmatmul.mubr.bf16.gmra.mxu0 %v992
      %v1034 = vpop.f32.mrf.mxu0
      %v1035 = vadd.f32 %v927, %v1034
      %v1036 = vpop.f32.mrf.mxu0
      %v1037 = vadd.f32 %v927, %v1036
      %v1038 = vpop.f32.mrf.mxu0
      %v1039 = vpop.f32.mrf.mxu0
      %1040 = vdwg.mxu0
      %vm1041 = vcmp.gt.f32.partialorder %v1035, 0.0
      %vm1042 = vcmp.gt.f32.partialorder %v1037, 0.0
      %v1043 = vmul.f32 %v1035, 0.01
      %v1044 = vmul.f32 %v1037, 0.01
      %v1045 = vsel %vm1041, %v1035, %v1043
      %v1046 = vsel %vm1042, %v1037, %v1044
      %v1047 = vld [vmem:[%s6] sm:$0xf]
      %v1048 = vld [vmem:[%s7] sm:$0xff]
      %v1049 = vpack.c.bf16 %v1045, %v1045
      %v1050 = vpack.c.bf16 %v1046, %v1046
      %v1051 = vmul.bf16 %v1049, %v771
      %v1052 = vmul.bf16 %v1050, %v778
      %v1053 = vmul.bf16 %v1049, %v800
      %v1054 = vmul.bf16 %v1050, %v808
      %v1057 = vrot.slane %v1049, 4
      %v1058 = vrot.slane %v1050, 4
      %1059 = vrot.lane.b32.xlu0 %v1057, 127
      %v1060 = vpop.permute.xlu0 %1059
      %1061 = vrot.lane.b32.xlu0 %v1058, 127
      %v1062 = vpop.permute.xlu0 %1061
      %v1063 = vsel %vm446, %v817, %v1060
      %v1064 = vsel %vm446, %v1060, %v1062
      %1067 = vrot.lane.b32.xlu0 %v1053, 126
      %v1068 = vpop.permute.xlu0 %1067
      %1069 = vrot.lane.b32.xlu0 %v1054, 126
      %v1070 = vpop.permute.xlu0 %1069
      %v1071 = vsel %vm453, %v450, %v1068
      %v1072 = vsel %vm453, %v1068, %v1070
      %v1075 = vrot.slane %v1051, 4
      %v1076 = vrot.slane %v1052, 4
      %1077 = vrot.lane.b32.xlu0 %v1075, 112
      %v1078 = vpop.permute.xlu0 %1077
      %1079 = vrot.lane.b32.xlu0 %v1076, 112
      %v1080 = vpop.permute.xlu0 %1079
      %v1081 = vsel %vm842, %v837, %v1078
      %v1082 = vsel %vm842, %v1078, %v1080
      %1083 = vrot.lane.b32.xlu0 %v1049, 111
      %v1084 = vpop.permute.xlu0 %1083
      %1085 = vrot.lane.b32.xlu0 %v1050, 111
      %v1086 = vpop.permute.xlu0 %1085
      %v1087 = vsel %vm849, %v1084, %v1086
      %v1088 = vrot.slane %v1053, 4
      %v1089 = vrot.slane %v1054, 4
      %1090 = vrot.lane.b32.xlu0 %v1088, 110
      %v1091 = vpop.permute.xlu0 %1090
      %1092 = vrot.lane.b32.xlu0 %v1089, 110
      %v1093 = vpop.permute.xlu0 %1092
      %v1094 = vsel %vm859, %v1091, %v1093
      %v1095 = vsel %vm859, %v1093, %v858
      %1096 = vrot.lane.b32.xlu0 %v1051, 96
      %v1097 = vpop.permute.xlu0 %1096
      %1098 = vrot.lane.b32.xlu0 %v1052, 96
      %v1099 = vpop.permute.xlu0 %1098
      %v1100 = vsel %vm868, %v1097, %v1099
      %v1101 = vsel %vm868, %v1099, %v867
      %1102 = vrot.lane.b32.xlu0 %v1057, 95
      %v1103 = vpop.permute.xlu0 %1102
      %1104 = vrot.lane.b32.xlu0 %v1058, 95
      %v1105 = vpop.permute.xlu0 %1104
      %v1106 = vsel %vm877, %v1103, %v1105
      %v1107 = vsel %vm877, %v1105, %v876
      %1108 = vrot.lane.b32.xlu0 %v1053, 94
      %v1109 = vpop.permute.xlu0 %1108
      %1110 = vrot.lane.b32.xlu0 %v1054, 94
      %v1111 = vpop.permute.xlu0 %1110
      %v1112 = vsel %vm886, %v1109, %v1111
      %v1113 = vsel %vm886, %v1111, %v885
      %v1115 = vsel %vm610, 0, %v1063
      %v1118 = vsel %vm610, %v1051, %v1064
      %v1121 = vsel %vm610, %v1052, %v1062
      %v1124 = vsel %vm610, %v1071, %v1081
      %v1127 = vsel %vm610, %v1072, %v1082
      %v1130 = vsel %vm610, %v1070, %v1080
      %v1133 = vsel %vm610, %v1084, %v1091
      %v1136 = vsel %vm610, %v1087, %v1094
      %v1139 = vsel %vm610, %v1086, %v1095
      %v1142 = vsel %vm610, %v1097, %v1103
      %v1145 = vsel %vm610, %v1100, %v1106
      %v1148 = vsel %vm610, %v1101, %v1107
      %1150 = vset.pattern.permute.xlu0 0
      %1151 = vperm.xlu0 %1150, %v1048
      %v1152 = vpop.permute.xlu0 %1151
      %1166 = vrot.lane.b32.xlu0 %v1115, 17
      %v1167 = vpop.permute.xlu0 %1166
      %1168 = vrot.lane.b32.xlu0 %v1118, 17
      %v1169 = vpop.permute.xlu0 %1168
      %1170 = vrot.lane.b32.xlu0 %v1121, 17
      %v1171 = vpop.permute.xlu0 %1170
      %1172 = vrot.lane.b32.xlu0 %v1124, 17
      %v1173 = vpop.permute.xlu0 %1172
      %1174 = vrot.lane.b32.xlu0 %v1127, 17
      %v1175 = vpop.permute.xlu0 %1174
      %1176 = vrot.lane.b32.xlu0 %v1130, 17
      %v1177 = vpop.permute.xlu0 %1176
      %1178 = vrot.lane.b32.xlu0 %v1133, 17
      %v1179 = vpop.permute.xlu0 %1178
      %1180 = vrot.lane.b32.xlu0 %v1136, 17
      %v1181 = vpop.permute.xlu0 %1180
      %1182 = vrot.lane.b32.xlu0 %v1139, 17
      %v1183 = vpop.permute.xlu0 %1182
      %1184 = vrot.lane.b32.xlu0 %v1142, 17
      %v1185 = vpop.permute.xlu0 %1184
      %1186 = vrot.lane.b32.xlu0 %v1145, 17
      %v1187 = vpop.permute.xlu0 %1186
      %1188 = vrot.lane.b32.xlu0 %v1148, 17
      %v1189 = vpop.permute.xlu0 %1188
      %1190 = vrot.lane.b32.xlu0 %v1109, 17
      %v1191 = vpop.permute.xlu0 %1190
      %1192 = vrot.lane.b32.xlu0 %v1112, 17
      %v1193 = vpop.permute.xlu0 %1192
      %1194 = vrot.lane.b32.xlu0 %v1113, 17
      %v1195 = vpop.permute.xlu0 %1194
      %v1196 = vsel %vm971, %v1167, %v1169
      %v1197 = vsel %vm971, %v1169, %v1171
      %v1198 = vsel %vm971, %v1173, %v1175
      %v1199 = vsel %vm971, %v1175, %v1177
      %v1200 = vsel %vm971, %v1179, %v1181
      %v1201 = vsel %vm971, %v1181, %v1183
      %v1202 = vsel %vm971, %v1185, %v1187
      %v1203 = vsel %vm971, %v1187, %v1189
      %v1204 = vsel %vm971, %v1191, %v1193
      %v1205 = vsel %vm971, %v1193, %v1195
      %v1215 = vsel %vm990, %v1047, 0
      %v1218 = vsel %vm610, %v1204, 0
      %v1221 = vsel %vm610, %v1205, 0
      %1223 = vmatprep.subr.bf16.mxu0 0
      %1224 = vmatpush1.bf16.msra.mxu0 0
      %1225 = vmatprep.subr.bf16.mxu0 0
      %1226 = vmatpush1.bf16.msra.mxu0 0
      %1227 = vmatprep.subr.bf16.mxu0 0
      %1228 = vmatpush1.bf16.msra.mxu0 0
      %1229 = vmatprep.subr.bf16.mxu0 %v1221
      %1230 = vmatpush1.bf16.msra.mxu0 %v1218
      %1231 = vmatprep.subr.bf16.mxu0 %v1203
      %1232 = vmatpush1.bf16.msra.mxu0 %v1202
      %1233 = vmatprep.subr.bf16.mxu0 %v1201
      %1234 = vmatpush1.bf16.msra.mxu0 %v1200
      %1235 = vmatprep.subr.bf16.mxu0 %v1199
      %1236 = vmatpush1.bf16.msra.mxu0 %v1198
      %1237 = vmatprep.subr.bf16.mxu0 %v1197
      %1238 = vmatpush1.bf16.msra.mxu0 %v1196
      %1239 = vmatprep.subr.bf16.mxu0 0
      %1240 = vmatpush2.bf16.msra.mxu0 0
      %1241 = vmatprep.subr.bf16.mxu0 0
      %1242 = vmatpush2.bf16.msra.mxu0 0
      %1243 = vmatprep.subr.bf16.mxu0 0
      %1244 = vmatpush2.bf16.msra.mxu0 0
      %1245 = vmatprep.subr.bf16.mxu0 0
      %1246 = vmatpush2.bf16.msra.mxu0 0
      %1247 = vmatprep.subr.bf16.mxu0 0
      %1248 = vmatpush2.bf16.msra.mxu0 0
      %1249 = vmatprep.subr.bf16.mxu0 0
      %1250 = vmatpush2.bf16.msra.mxu0 0
      %1251 = vmatprep.subr.bf16.mxu0 0
      %1252 = vmatpush2.bf16.msra.mxu0 0
      %1253 = vmatprep.subr.bf16.mxu0 0
      %1254 = vmatpush2.bf16.msra.mxu0 0
      %1255 = vmatprep.mubr.bf16.mxu0 0
      %1256 = vmatmul.mubr.bf16.gmra.mxu0 %v1215
      %v1257 = vpop.f32.mrf.mxu0
      %v1258 = vadd.f32 %v1152, %v1257
      %v1259 = vpop.f32.mrf.mxu0
      %v1260 = vadd.f32 %v1152, %v1259
      %v1261 = vpop.f32.mrf.mxu0
      %v1262 = vpop.f32.mrf.mxu0
      %1263 = vdwg.mxu0
      %v1264 = vld [vmem:[%s401] sm:$0xff]
      %v1265 = vld [vmem:[%s401 + $0x8] sm:$0xff]
      %v1266 = vadd.f32 %v1258, %v1264
      %v1267 = vadd.f32 %v1260, %v1265
      %vm1268 = vcmp.gt.f32.partialorder %v1266, 0.0
      %vm1269 = vcmp.gt.f32.partialorder %v1267, 0.0
      %v1270 = vmul.f32 %v1266, 0.01
      %v1271 = vmul.f32 %v1267, 0.01
      %v1272 = vsel %vm1268, %v1266, %v1270
      %v1273 = vsel %vm1269, %v1267, %v1271
      %1274 = vst [vmem:[%s406] sm:$0xff] %v1272
      %1275 = vst [vmem:[%s406 + $0x8] sm:$0xff] %v1273
      %p1276 = scmp.lt.s32.totalorder %s22, 1
      %s1277 = scalar_select %p1276, %s22, 1
      %s1278 = smul.addr %s1277, 2
      %s1279 = smul.addr %s1278, 8
      %s1280 = scalar_lea.vmem %s11, %s1279
      // Predicated region
      $region65: #{hourglass_forward.5} parent=63 // pred_check
        %p1281 = pneg %p281
      $region66: #{hourglass_forward.5} parent=63 // pred_check_branch
        %1283 = sbr.rel (%p1281) target = $region68
      $region67: #{hourglass_forward.5} parent=63 // pred_region
        _
      $region68: #{hourglass_forward.5} parent=63 // pred_fallthru
        _
    $region64: #{hourglass_forward.5} parent=5 // pred_fallthru
      _
    %p1284 = scmp.le.s32.totalorder 2, %s17
    // Predicated region
    $region69: #{hourglass_forward.5} parent=5 // pred_check
      %p1285 = pneg %p1284
    $region70: #{hourglass_forward.5} parent=5 // pred_check_branch
      %1287 = sbr.rel (%p1285) target = $region72
    $region71: #{hourglass_forward.5} parent=5 // pred_region
      %s1288 = ssub.s32 %s17, 2
      // Predicated region
      $region73: #{hourglass_forward.5} parent=71 // pred_check
        %p1289 = pneg %p287
      $region74: #{hourglass_forward.5} parent=71 // pred_check_branch
        %1291 = sbr.rel (%p1289) target = $region76
      $region75: #{hourglass_forward.5} parent=71 // pred_region
        %p1292 = scmp.lt.s32.totalorder %s23, 1
        %s1293 = scalar_select %p1292, %s23, 1
        %s1294 = smul.addr %s1293, 2
        %s1295 = smul.addr %s1294, 8
        %s1296 = scalar_lea.vmem %s11, %s1295
      $region76: #{hourglass_forward.5} parent=71 // pred_fallthru
        _
    $region72: #{hourglass_forward.5} parent=5 // pred_fallthru
      _
  $region6: #{hourglass_forward.5} parent=0 // loop_footer
    %s21 = sadd.s32 1, %s17
  $region7: #{hourglass_forward.5} parent=0 // loop_footer_branch
    %16 = sbr.rel target = $region3
  $region8: #{hourglass_forward.5} parent=0 // loop_exit
    _

// kernel: hourglass_forward.4
$region0: #{hourglass_forward.4}
  #allocation0 [shape = 'u32[]', space=smem, size = 0x4, offset = 0x4, fixed_abs, tag = 'smem constant byte address 0x4 - core index']
  #allocation1 [shape = 'u32[144,128]{1,0:T(1,128)}', space=vmem, size = 0x12000, scoped, tag = 'internal scratch']
  %s0 = inlined_call_operand.vmem [shape: bf16[2,16,64], index: 0, kind: input, shape index: {}]
  %s1 = inlined_call_operand.vmem [shape: bf16[16,144], index: 1, kind: input, shape index: {}]
  %s2 = inlined_call_operand.vmem [shape: f32[16,1], index: 2, kind: input, shape index: {}]
  %s3 = inlined_call_operand.vmem [shape: bf16[24,144], index: 3, kind: input, shape index: {}]
  %s4 = inlined_call_operand.vmem [shape: f32[24,1], index: 4, kind: input, shape index: {}]
  %s5 = inlined_call_operand.vmem [shape: bf16[24,216], index: 5, kind: input, shape index: {}]
  %s6 = inlined_call_operand.vmem [shape: f32[24,1], index: 6, kind: input, shape index: {}]
  %s7 = inlined_call_operand.vmem [shape: bf16[16,216], index: 7, kind: input, shape index: {}]
  %s8 = inlined_call_operand.vmem [shape: f32[16,1], index: 8, kind: input, shape index: {}]
  %s9 = inlined_call_operand.vmem [shape: bf16[16,144], index: 9, kind: input, shape index: {}]
  %s10 = inlined_call_operand.vmem [shape: f32[16,1], index: 10, kind: input, shape index: {}]
  %s11 = inlined_call_operand.vmem [shape: bf16[16,144], index: 11, kind: input, shape index: {}]
  %s12 = inlined_call_operand.vmem [shape: f32[16,1], index: 12, kind: input, shape index: {}]
  %s13 = inlined_call_operand.vmem [shape: f32[2,64], index: 13, kind: input, shape index: {}]
  %s14 = inlined_call_operand.vmem [shape: f32[2,16], index: 14, kind: input, shape index: {}]
  %s15 = inlined_call_operand.vmem [shape: bf16[8,4], index: 15, kind: input, shape index: {}]
  %s16 = inlined_call_operand.vmem [shape: bf16[4,8], index: 16, kind: input, shape index: {}]
  %s17 = inlined_call_operand.vmem [shape: f32[2,16,64], index: 17, kind: output, shape index: {0}]
  %s18 = inlined_call_operand.vmem [shape: f32[2,24,16], index: 18, kind: output, shape index: {1}]
  %19 = xla_tuple %s17, %s18
  %s20 = sld [smem:[#allocation0]]
  $region109: #{hourglass_forward.4} parent=0
    _
  %s22 = ssub.s32 1, %s20
  %s23 = scalar_select 0, %s22, %s20
  loop: start=0, step=1, limit=4
  $region2: #{hourglass_forward.4} parent=0 // loop_pre_header
    _
  $region3: #{hourglass_forward.4} parent=0 // loop_header
    %s25 = sphi 0, %s29
    %p26 = scmp.ge.s32.totalorder %s25, 4
    %s35 = sphi 0, %s37
    %s38 = sphi 0, %s35
    %s39 = sphi 0, %s38
    %s55 = sphi 0, %s39
    %s59 = sphi 0, %s59
    %s61 = sphi 0, %s59
    %s62 = sphi 0, %s61
    %s76 = sphi 0, %s62
    %s80 = sphi 0, %s80
    %s82 = sphi 0, %s80
    %s83 = sphi 0, %s82
    %s97 = sphi 0, %s83
    %s101 = sphi 0, %s101
    %s103 = sphi 0, %s101
    %s104 = sphi 0, %s103
    %s118 = sphi 0, %s104
    %s122 = sphi 0, %s122
    %s124 = sphi 0, %s122
    %s125 = sphi 0, %s124
    %s139 = sphi 0, %s125
    %s143 = sphi 0, %s143
    %s145 = sphi 0, %s143
    %s146 = sphi 0, %s145
    %s160 = sphi 0, %s146
    %s164 = sphi 0, %s164
    %s166 = sphi 0, %s164
    %s167 = sphi 0, %s166
    %s181 = sphi 0, %s167
    %s185 = sphi 0, %s185
    %s187 = sphi 0, %s185
    %s188 = sphi 0, %s187
    %s202 = sphi 0, %s188
    %s206 = sphi 0, %s206
    %s208 = sphi 0, %s206
    %s209 = sphi 0, %s208
    %s223 = sphi 0, %s209
    %s227 = sphi 0, %s227
    %s229 = sphi 0, %s227
    %s230 = sphi 0, %s229
    %s244 = sphi 0, %s230
    %s248 = sphi 0, %s248
    %s250 = sphi 0, %s248
    %s251 = sphi 0, %s250
    %s265 = sphi 0, %s251
    %s269 = sphi 0, %s269
    %s271 = sphi 0, %s269
    %s272 = sphi 0, %s271
    %s286 = sphi 0, %s272
    %s290 = sphi 0, %s290
    %s292 = sphi 0, %s290
    %s293 = sphi 0, %s292
    %s307 = sphi 0, %s293
    %s311 = sphi 0, %s311
    %s313 = sphi 0, %s311
    %s314 = sphi 0, %s313
    %s328 = sphi 0, %s314
    %s332 = sphi 0, %s332
    %s334 = sphi 0, %s332
    %s335 = sphi 0, %s334
    %s349 = sphi 0, %s335
    %s353 = sphi 0, %s353
    %s355 = sphi 0, %s353
    %s356 = sphi 0, %s355
    %s370 = sphi 0, %s356
    %s374 = sphi 0, %s374
    %s376 = sphi 0, %s374
    %s377 = sphi 0, %s376
    %s391 = sphi 0, %s377
    %s397 = sphi 0, %s399
    %s400 = sphi 0, %s397
    %s401 = sphi 0, %s400
    %s417 = sphi 0, %s401
    %s423 = sphi 0, %s425
    %s426 = sphi 0, %s423
    %s427 = sphi 0, %s426
    %s443 = sphi 0, %s427
  $region4: #{hourglass_forward.4} parent=0 // loop_header_branch
    %28 = sbr.rel (%p26) target = $region8
  $region5: #{hourglass_forward.4} parent=0 // loop_body
    %s30 = ssub.s32 %s25, 1
    %s31 = ssub.s32 %s25, 2
    %s32 = sadd.s32 %s25, 1
    %s33 = ssub.s32 %s25, %s32
    %p34 = scmp.eq.s32.totalorder %s33, 0
    %s36 = sadd.s32 %s35, 1
    %s37 = scalar_select %p34, %s35, %s36
    %p40 = pneg %p34
    %p41 = scmp.eq.s32.totalorder %s25, 1
    %p42 = por %p40, %p41
    %p43 = scmp.ne.s32.totalorder %s35, %s38
    %p44 = scmp.eq.s32.totalorder %s25, 0
    %p45 = por %p43, %p44
    %p46 = scmp.ne.s32.totalorder %s35, %s38
    %p47 = scmp.eq.s32.totalorder %s30, 1
    %p48 = por %p46, %p47
    %p49 = scmp.ne.s32.totalorder %s38, %s39
    %p50 = scmp.eq.s32.totalorder %s30, 0
    %p51 = por %p49, %p50
    %p52 = scmp.ne.s32.totalorder %s38, %s39
    %p53 = scmp.eq.s32.totalorder %s31, 1
    %p54 = por %p52, %p53
    %p56 = scmp.ne.s32.totalorder %s39, %s55
    %p57 = scmp.eq.s32.totalorder %s31, 0
    %p58 = por %p56, %p57
    %s60 = sadd.s32 %s59, 1
    %p63 = scmp.eq.s32.totalorder %s25, 1
    %p64 = scmp.ne.s32.totalorder %s59, %s61
    %p65 = scmp.eq.s32.totalorder %s25, 0
    %p66 = por %p64, %p65
    %p67 = scmp.ne.s32.totalorder %s59, %s61
    %p68 = scmp.eq.s32.totalorder %s30, 1
    %p69 = por %p67, %p68
    %p70 = scmp.ne.s32.totalorder %s61, %s62
    %p71 = scmp.eq.s32.totalorder %s30, 0
    %p72 = por %p70, %p71
    %p73 = scmp.ne.s32.totalorder %s61, %s62
    %p74 = scmp.eq.s32.totalorder %s31, 1
    %p75 = por %p73, %p74
    %p77 = scmp.ne.s32.totalorder %s62, %s76
    %p78 = scmp.eq.s32.totalorder %s31, 0
    %p79 = por %p77, %p78
    %s81 = sadd.s32 %s80, 1
    %p84 = scmp.eq.s32.totalorder %s25, 1
    %p85 = scmp.ne.s32.totalorder %s80, %s82
    %p86 = scmp.eq.s32.totalorder %s25, 0
    %p87 = por %p85, %p86
    %p88 = scmp.ne.s32.totalorder %s80, %s82
    %p89 = scmp.eq.s32.totalorder %s30, 1
    %p90 = por %p88, %p89
    %p91 = scmp.ne.s32.totalorder %s82, %s83
    %p92 = scmp.eq.s32.totalorder %s30, 0
    %p93 = por %p91, %p92
    %p94 = scmp.ne.s32.totalorder %s82, %s83
    %p95 = scmp.eq.s32.totalorder %s31, 1
    %p96 = por %p94, %p95
    %p98 = scmp.ne.s32.totalorder %s83, %s97
    %p99 = scmp.eq.s32.totalorder %s31, 0
    %p100 = por %p98, %p99
    %s102 = sadd.s32 %s101, 1
    %p105 = scmp.eq.s32.totalorder %s25, 1
    %p106 = scmp.ne.s32.totalorder %s101, %s103
    %p107 = scmp.eq.s32.totalorder %s25, 0
    %p108 = por %p106, %p107
    %p109 = scmp.ne.s32.totalorder %s101, %s103
    %p110 = scmp.eq.s32.totalorder %s30, 1
    %p111 = por %p109, %p110
    %p112 = scmp.ne.s32.totalorder %s103, %s104
    %p113 = scmp.eq.s32.totalorder %s30, 0
    %p114 = por %p112, %p113
    %p115 = scmp.ne.s32.totalorder %s103, %s104
    %p116 = scmp.eq.s32.totalorder %s31, 1
    %p117 = por %p115, %p116
    %p119 = scmp.ne.s32.totalorder %s104, %s118
    %p120 = scmp.eq.s32.totalorder %s31, 0
    %p121 = por %p119, %p120
    %s123 = sadd.s32 %s122, 1
    %p126 = scmp.eq.s32.totalorder %s25, 1
    %p127 = scmp.ne.s32.totalorder %s122, %s124
    %p128 = scmp.eq.s32.totalorder %s25, 0
    %p129 = por %p127, %p128
    %p130 = scmp.ne.s32.totalorder %s122, %s124
    %p131 = scmp.eq.s32.totalorder %s30, 1
    %p132 = por %p130, %p131
    %p133 = scmp.ne.s32.totalorder %s124, %s125
    %p134 = scmp.eq.s32.totalorder %s30, 0
    %p135 = por %p133, %p134
    %p136 = scmp.ne.s32.totalorder %s124, %s125
    %p137 = scmp.eq.s32.totalorder %s31, 1
    %p138 = por %p136, %p137
    %p140 = scmp.ne.s32.totalorder %s125, %s139
    %p141 = scmp.eq.s32.totalorder %s31, 0
    %p142 = por %p140, %p141
    %s144 = sadd.s32 %s143, 1
    %p147 = scmp.eq.s32.totalorder %s25, 1
    %p148 = scmp.ne.s32.totalorder %s143, %s145
    %p149 = scmp.eq.s32.totalorder %s25, 0
    %p150 = por %p148, %p149
    %p151 = scmp.ne.s32.totalorder %s143, %s145
    %p152 = scmp.eq.s32.totalorder %s30, 1
    %p153 = por %p151, %p152
    %p154 = scmp.ne.s32.totalorder %s145, %s146
    %p155 = scmp.eq.s32.totalorder %s30, 0
    %p156 = por %p154, %p155
    %p157 = scmp.ne.s32.totalorder %s145, %s146
    %p158 = scmp.eq.s32.totalorder %s31, 1
    %p159 = por %p157, %p158
    %p161 = scmp.ne.s32.totalorder %s146, %s160
    %p162 = scmp.eq.s32.totalorder %s31, 0
    %p163 = por %p161, %p162
    %s165 = sadd.s32 %s164, 1
    %p168 = scmp.eq.s32.totalorder %s25, 1
    %p169 = scmp.ne.s32.totalorder %s164, %s166
    %p170 = scmp.eq.s32.totalorder %s25, 0
    %p171 = por %p169, %p170
    %p172 = scmp.ne.s32.totalorder %s164, %s166
    %p173 = scmp.eq.s32.totalorder %s30, 1
    %p174 = por %p172, %p173
    %p175 = scmp.ne.s32.totalorder %s166, %s167
    %p176 = scmp.eq.s32.totalorder %s30, 0
    %p177 = por %p175, %p176
    %p178 = scmp.ne.s32.totalorder %s166, %s167
    %p179 = scmp.eq.s32.totalorder %s31, 1
    %p180 = por %p178, %p179
    %p182 = scmp.ne.s32.totalorder %s167, %s181
    %p183 = scmp.eq.s32.totalorder %s31, 0
    %p184 = por %p182, %p183
    %s186 = sadd.s32 %s185, 1
    %p189 = scmp.eq.s32.totalorder %s25, 1
    %p190 = scmp.ne.s32.totalorder %s185, %s187
    %p191 = scmp.eq.s32.totalorder %s25, 0
    %p192 = por %p190, %p191
    %p193 = scmp.ne.s32.totalorder %s185, %s187
    %p194 = scmp.eq.s32.totalorder %s30, 1
    %p195 = por %p193, %p194
    %p196 = scmp.ne.s32.totalorder %s187, %s188
    %p197 = scmp.eq.s32.totalorder %s30, 0
    %p198 = por %p196, %p197
    %p199 = scmp.ne.s32.totalorder %s187, %s188
    %p200 = scmp.eq.s32.totalorder %s31, 1
    %p201 = por %p199, %p200
    %p203 = scmp.ne.s32.totalorder %s188, %s202
    %p204 = scmp.eq.s32.totalorder %s31, 0
    %p205 = por %p203, %p204
    %s207 = sadd.s32 %s206, 1
    %p210 = scmp.eq.s32.totalorder %s25, 1
    %p211 = scmp.ne.s32.totalorder %s206, %s208
    %p212 = scmp.eq.s32.totalorder %s25, 0
    %p213 = por %p211, %p212
    %p214 = scmp.ne.s32.totalorder %s206, %s208
    %p215 = scmp.eq.s32.totalorder %s30, 1
    %p216 = por %p214, %p215
    %p217 = scmp.ne.s32.totalorder %s208, %s209
    %p218 = scmp.eq.s32.totalorder %s30, 0
    %p219 = por %p217, %p218
    %p220 = scmp.ne.s32.totalorder %s208, %s209
    %p221 = scmp.eq.s32.totalorder %s31, 1
    %p222 = por %p220, %p221
    %p224 = scmp.ne.s32.totalorder %s209, %s223
    %p225 = scmp.eq.s32.totalorder %s31, 0
    %p226 = por %p224, %p225
    %s228 = sadd.s32 %s227, 1
    %p231 = scmp.eq.s32.totalorder %s25, 1
    %p232 = scmp.ne.s32.totalorder %s227, %s229
    %p233 = scmp.eq.s32.totalorder %s25, 0
    %p234 = por %p232, %p233
    %p235 = scmp.ne.s32.totalorder %s227, %s229
    %p236 = scmp.eq.s32.totalorder %s30, 1
    %p237 = por %p235, %p236
    %p238 = scmp.ne.s32.totalorder %s229, %s230
    %p239 = scmp.eq.s32.totalorder %s30, 0
    %p240 = por %p238, %p239
    %p241 = scmp.ne.s32.totalorder %s229, %s230
    %p242 = scmp.eq.s32.totalorder %s31, 1
    %p243 = por %p241, %p242
    %p245 = scmp.ne.s32.totalorder %s230, %s244
    %p246 = scmp.eq.s32.totalorder %s31, 0
    %p247 = por %p245, %p246
    %s249 = sadd.s32 %s248, 1
    %p252 = scmp.eq.s32.totalorder %s25, 1
    %p253 = scmp.ne.s32.totalorder %s248, %s250
    %p254 = scmp.eq.s32.totalorder %s25, 0
    %p255 = por %p253, %p254
    %p256 = scmp.ne.s32.totalorder %s248, %s250
    %p257 = scmp.eq.s32.totalorder %s30, 1
    %p258 = por %p256, %p257
    %p259 = scmp.ne.s32.totalorder %s250, %s251
    %p260 = scmp.eq.s32.totalorder %s30, 0
    %p261 = por %p259, %p260
    %p262 = scmp.ne.s32.totalorder %s250, %s251
    %p263 = scmp.eq.s32.totalorder %s31, 1
    %p264 = por %p262, %p263
    %p266 = scmp.ne.s32.totalorder %s251, %s265
    %p267 = scmp.eq.s32.totalorder %s31, 0
    %p268 = por %p266, %p267
    %s270 = sadd.s32 %s269, 1
    %p273 = scmp.eq.s32.totalorder %s25, 1
    %p274 = scmp.ne.s32.totalorder %s269, %s271
    %p275 = scmp.eq.s32.totalorder %s25, 0
    %p276 = por %p274, %p275
    %p277 = scmp.ne.s32.totalorder %s269, %s271
    %p278 = scmp.eq.s32.totalorder %s30, 1
    %p279 = por %p277, %p278
    %p280 = scmp.ne.s32.totalorder %s271, %s272
    %p281 = scmp.eq.s32.totalorder %s30, 0
    %p282 = por %p280, %p281
    %p283 = scmp.ne.s32.totalorder %s271, %s272
    %p284 = scmp.eq.s32.totalorder %s31, 1
    %p285 = por %p283, %p284
    %p287 = scmp.ne.s32.totalorder %s272, %s286
    %p288 = scmp.eq.s32.totalorder %s31, 0
    %p289 = por %p287, %p288
    %s291 = sadd.s32 %s290, 1
    %p294 = scmp.eq.s32.totalorder %s25, 1
    %p295 = scmp.ne.s32.totalorder %s290, %s292
    %p296 = scmp.eq.s32.totalorder %s25, 0
    %p297 = por %p295, %p296
    %p298 = scmp.ne.s32.totalorder %s290, %s292
    %p299 = scmp.eq.s32.totalorder %s30, 1
    %p300 = por %p298, %p299
    %p301 = scmp.ne.s32.totalorder %s292, %s293
    %p302 = scmp.eq.s32.totalorder %s30, 0
    %p303 = por %p301, %p302
    %p304 = scmp.ne.s32.totalorder %s292, %s293
    %p305 = scmp.eq.s32.totalorder %s31, 1
    %p306 = por %p304, %p305
    %p308 = scmp.ne.s32.totalorder %s293, %s307
    %p309 = scmp.eq.s32.totalorder %s31, 0
    %p310 = por %p308, %p309
    %s312 = sadd.s32 %s311, 1
    %p315 = scmp.eq.s32.totalorder %s25, 1
    %p316 = scmp.ne.s32.totalorder %s311, %s313
    %p317 = scmp.eq.s32.totalorder %s25, 0
    %p318 = por %p316, %p317
    %p319 = scmp.ne.s32.totalorder %s311, %s313
    %p320 = scmp.eq.s32.totalorder %s30, 1
    %p321 = por %p319, %p320
    %p322 = scmp.ne.s32.totalorder %s313, %s314
    %p323 = scmp.eq.s32.totalorder %s30, 0
    %p324 = por %p322, %p323
    %p325 = scmp.ne.s32.totalorder %s313, %s314
    %p326 = scmp.eq.s32.totalorder %s31, 1
    %p327 = por %p325, %p326
    %p329 = scmp.ne.s32.totalorder %s314, %s328
    %p330 = scmp.eq.s32.totalorder %s31, 0
    %p331 = por %p329, %p330
    %s333 = sadd.s32 %s332, 1
    %p336 = scmp.eq.s32.totalorder %s25, 1
    %p337 = scmp.ne.s32.totalorder %s332, %s334
    %p338 = scmp.eq.s32.totalorder %s25, 0
    %p339 = por %p337, %p338
    %p340 = scmp.ne.s32.totalorder %s332, %s334
    %p341 = scmp.eq.s32.totalorder %s30, 1
    %p342 = por %p340, %p341
    %p343 = scmp.ne.s32.totalorder %s334, %s335
    %p344 = scmp.eq.s32.totalorder %s30, 0
    %p345 = por %p343, %p344
    %p346 = scmp.ne.s32.totalorder %s334, %s335
    %p347 = scmp.eq.s32.totalorder %s31, 1
    %p348 = por %p346, %p347
    %p350 = scmp.ne.s32.totalorder %s335, %s349
    %p351 = scmp.eq.s32.totalorder %s31, 0
    %p352 = por %p350, %p351
    %s354 = sadd.s32 %s353, 1
    %p357 = scmp.eq.s32.totalorder %s25, 1
    %p358 = scmp.ne.s32.totalorder %s353, %s355
    %p359 = scmp.eq.s32.totalorder %s25, 0
    %p360 = por %p358, %p359
    %p361 = scmp.ne.s32.totalorder %s353, %s355
    %p362 = scmp.eq.s32.totalorder %s30, 1
    %p363 = por %p361, %p362
    %p364 = scmp.ne.s32.totalorder %s355, %s356
    %p365 = scmp.eq.s32.totalorder %s30, 0
    %p366 = por %p364, %p365
    %p367 = scmp.ne.s32.totalorder %s355, %s356
    %p368 = scmp.eq.s32.totalorder %s31, 1
    %p369 = por %p367, %p368
    %p371 = scmp.ne.s32.totalorder %s356, %s370
    %p372 = scmp.eq.s32.totalorder %s31, 0
    %p373 = por %p371, %p372
    %s375 = sadd.s32 %s374, 1
    %p378 = scmp.eq.s32.totalorder %s25, 1
    %p379 = scmp.ne.s32.totalorder %s374, %s376
    %p380 = scmp.eq.s32.totalorder %s25, 0
    %p381 = por %p379, %p380
    %p382 = scmp.ne.s32.totalorder %s374, %s376
    %p383 = scmp.eq.s32.totalorder %s30, 1
    %p384 = por %p382, %p383
    %p385 = scmp.ne.s32.totalorder %s376, %s377
    %p386 = scmp.eq.s32.totalorder %s30, 0
    %p387 = por %p385, %p386
    %p388 = scmp.ne.s32.totalorder %s376, %s377
    %p389 = scmp.eq.s32.totalorder %s31, 1
    %p390 = por %p388, %p389
    %p392 = scmp.ne.s32.totalorder %s377, %s391
    %p393 = scmp.eq.s32.totalorder %s31, 0
    %p394 = por %p392, %p393
    %s395 = ssub.s32 %s25, %s32
    %p396 = scmp.eq.s32.totalorder %s395, 0
    %s398 = sadd.s32 %s397, 1
    %s399 = scalar_select %p396, %s397, %s398
    %p402 = pneg %p396
    %p403 = scmp.eq.s32.totalorder %s25, 1
    %p404 = por %p402, %p403
    %p405 = scmp.ne.s32.totalorder %s397, %s400
    %p406 = scmp.eq.s32.totalorder %s25, 0
    %p407 = por %p405, %p406
    %p408 = scmp.ne.s32.totalorder %s397, %s400
    %p409 = scmp.eq.s32.totalorder %s30, 1
    %p410 = por %p408, %p409
    %p411 = scmp.ne.s32.totalorder %s400, %s401
    %p412 = scmp.eq.s32.totalorder %s30, 0
    %p413 = por %p411, %p412
    %p414 = scmp.ne.s32.totalorder %s400, %s401
    %p415 = scmp.eq.s32.totalorder %s31, 1
    %p416 = por %p414, %p415
    %p418 = scmp.ne.s32.totalorder %s401, %s417
    %p419 = scmp.eq.s32.totalorder %s31, 0
    %p420 = por %p418, %p419
    %s421 = ssub.s32 %s25, %s32
    %p422 = scmp.eq.s32.totalorder %s421, 0
    %s424 = sadd.s32 %s423, 1
    %s425 = scalar_select %p422, %s423, %s424
    %p428 = pneg %p422
    %p429 = scmp.eq.s32.totalorder %s25, 1
    %p430 = por %p428, %p429
    %p431 = scmp.ne.s32.totalorder %s423, %s426
    %p432 = scmp.eq.s32.totalorder %s25, 0
    %p433 = por %p431, %p432
    %p434 = scmp.ne.s32.totalorder %s423, %s426
    %p435 = scmp.eq.s32.totalorder %s30, 1
    %p436 = por %p434, %p435
    %p437 = scmp.ne.s32.totalorder %s426, %s427
    %p438 = scmp.eq.s32.totalorder %s30, 0
    %p439 = por %p437, %p438
    %p440 = scmp.ne.s32.totalorder %s426, %s427
    %p441 = scmp.eq.s32.totalorder %s31, 1
    %p442 = por %p440, %p441
    %p444 = scmp.ne.s32.totalorder %s427, %s443
    %p445 = scmp.eq.s32.totalorder %s31, 0
    %p446 = por %p444, %p445
    %p447 = scmp.le.s32.totalorder 1, %s25
    %p448 = scmp.lt.s32.totalorder %s25, 3
    %p449 = pnand %p447, %p448
    %p450 = pneg %p449
    // Predicated region
    $region9: #{hourglass_forward.4} parent=5 // pred_check
      _
    $region10: #{hourglass_forward.4} parent=5 // pred_check_branch
      %452 = sbr.rel (%p449) target = $region12
    $region11: #{hourglass_forward.4} parent=5 // pred_region
      %s453 = ssub.s32 %s25, 1
      // Predicated region
      $region13: #{hourglass_forward.4} parent=11 // pred_check
        %p454 = pneg %p72
      $region14: #{hourglass_forward.4} parent=11 // pred_check_branch
        %456 = sbr.rel (%p454) target = $region16
      $region15: #{hourglass_forward.4} parent=11 // pred_region
        _
      $region16: #{hourglass_forward.4} parent=11 // pred_fallthru
        _
      // Predicated region
      $region17: #{hourglass_forward.4} parent=11 // pred_check
        %p457 = pneg %p93
      $region18: #{hourglass_forward.4} parent=11 // pred_check_branch
        %459 = sbr.rel (%p457) target = $region20
      $region19: #{hourglass_forward.4} parent=11 // pred_region
        _
      $region20: #{hourglass_forward.4} parent=11 // pred_fallthru
        _
      // Predicated region
      $region21: #{hourglass_forward.4} parent=11 // pred_check
        %p460 = pneg %p114
      $region22: #{hourglass_forward.4} parent=11 // pred_check_branch
        %462 = sbr.rel (%p460) target = $region24
      $region23: #{hourglass_forward.4} parent=11 // pred_region
        _
      $region24: #{hourglass_forward.4} parent=11 // pred_fallthru
        _
      // Predicated region
      $region25: #{hourglass_forward.4} parent=11 // pred_check
        %p463 = pneg %p135
      $region26: #{hourglass_forward.4} parent=11 // pred_check_branch
        %465 = sbr.rel (%p463) target = $region28
      $region27: #{hourglass_forward.4} parent=11 // pred_region
        _
      $region28: #{hourglass_forward.4} parent=11 // pred_fallthru
        _
      // Predicated region
      $region29: #{hourglass_forward.4} parent=11 // pred_check
        %p466 = pneg %p156
      $region30: #{hourglass_forward.4} parent=11 // pred_check_branch
        %468 = sbr.rel (%p466) target = $region32
      $region31: #{hourglass_forward.4} parent=11 // pred_region
        _
      $region32: #{hourglass_forward.4} parent=11 // pred_fallthru
        _
      // Predicated region
      $region33: #{hourglass_forward.4} parent=11 // pred_check
        %p469 = pneg %p177
      $region34: #{hourglass_forward.4} parent=11 // pred_check_branch
        %471 = sbr.rel (%p469) target = $region36
      $region35: #{hourglass_forward.4} parent=11 // pred_region
        _
      $region36: #{hourglass_forward.4} parent=11 // pred_fallthru
        _
      // Predicated region
      $region37: #{hourglass_forward.4} parent=11 // pred_check
        %p472 = pneg %p198
      $region38: #{hourglass_forward.4} parent=11 // pred_check_branch
        %474 = sbr.rel (%p472) target = $region40
      $region39: #{hourglass_forward.4} parent=11 // pred_region
        _
      $region40: #{hourglass_forward.4} parent=11 // pred_fallthru
        _
      // Predicated region
      $region41: #{hourglass_forward.4} parent=11 // pred_check
        %p475 = pneg %p219
      $region42: #{hourglass_forward.4} parent=11 // pred_check_branch
        %477 = sbr.rel (%p475) target = $region44
      $region43: #{hourglass_forward.4} parent=11 // pred_region
        _
      $region44: #{hourglass_forward.4} parent=11 // pred_fallthru
        _
      // Predicated region
      $region45: #{hourglass_forward.4} parent=11 // pred_check
        %p478 = pneg %p240
      $region46: #{hourglass_forward.4} parent=11 // pred_check_branch
        %480 = sbr.rel (%p478) target = $region48
      $region47: #{hourglass_forward.4} parent=11 // pred_region
        _
      $region48: #{hourglass_forward.4} parent=11 // pred_fallthru
        _
      // Predicated region
      $region49: #{hourglass_forward.4} parent=11 // pred_check
        %p481 = pneg %p261
      $region50: #{hourglass_forward.4} parent=11 // pred_check_branch
        %483 = sbr.rel (%p481) target = $region52
      $region51: #{hourglass_forward.4} parent=11 // pred_region
        _
      $region52: #{hourglass_forward.4} parent=11 // pred_fallthru
        _
      // Predicated region
      $region53: #{hourglass_forward.4} parent=11 // pred_check
        %p484 = pneg %p282
      $region54: #{hourglass_forward.4} parent=11 // pred_check_branch
        %486 = sbr.rel (%p484) target = $region56
      $region55: #{hourglass_forward.4} parent=11 // pred_region
        _
      $region56: #{hourglass_forward.4} parent=11 // pred_fallthru
        _
      // Predicated region
      $region57: #{hourglass_forward.4} parent=11 // pred_check
        %p487 = pneg %p303
      $region58: #{hourglass_forward.4} parent=11 // pred_check_branch
        %489 = sbr.rel (%p487) target = $region60
      $region59: #{hourglass_forward.4} parent=11 // pred_region
        _
      $region60: #{hourglass_forward.4} parent=11 // pred_fallthru
        _
      // Predicated region
      $region61: #{hourglass_forward.4} parent=11 // pred_check
        %p490 = pneg %p324
      $region62: #{hourglass_forward.4} parent=11 // pred_check_branch
        %492 = sbr.rel (%p490) target = $region64
      $region63: #{hourglass_forward.4} parent=11 // pred_region
        _
      $region64: #{hourglass_forward.4} parent=11 // pred_fallthru
        _
      // Predicated region
      $region65: #{hourglass_forward.4} parent=11 // pred_check
        %p493 = pneg %p345
      $region66: #{hourglass_forward.4} parent=11 // pred_check_branch
        %495 = sbr.rel (%p493) target = $region68
      $region67: #{hourglass_forward.4} parent=11 // pred_region
        _
      $region68: #{hourglass_forward.4} parent=11 // pred_fallthru
        _
      // Predicated region
      $region69: #{hourglass_forward.4} parent=11 // pred_check
        %p496 = pneg %p366
      $region70: #{hourglass_forward.4} parent=11 // pred_check_branch
        %498 = sbr.rel (%p496) target = $region72
      $region71: #{hourglass_forward.4} parent=11 // pred_region
        _
      $region72: #{hourglass_forward.4} parent=11 // pred_fallthru
        _
      // Predicated region
      $region73: #{hourglass_forward.4} parent=11 // pred_check
        %p499 = pneg %p387
      $region74: #{hourglass_forward.4} parent=11 // pred_check_branch
        %501 = sbr.rel (%p499) target = $region76
      $region75: #{hourglass_forward.4} parent=11 // pred_region
        _
      $region76: #{hourglass_forward.4} parent=11 // pred_fallthru
        _
    $region12: #{hourglass_forward.4} parent=5 // pred_fallthru
      _
    %p502 = scmp.lt.s32.totalorder %s25, 2
    // Predicated region
    $region77: #{hourglass_forward.4} parent=5 // pred_check
      %p503 = pneg %p502
    $region78: #{hourglass_forward.4} parent=5 // pred_check_branch
      %505 = sbr.rel (%p503) target = $region80
    $region79: #{hourglass_forward.4} parent=5 // pred_region
      // Predicated region
      $region81: #{hourglass_forward.4} parent=79 // pred_check
        %p506 = pneg %p45
      $region82: #{hourglass_forward.4} parent=79 // pred_check_branch
        %508 = sbr.rel (%p506) target = $region84
      $region83: #{hourglass_forward.4} parent=79 // pred_region
        %p509 = scmp.lt.s32.totalorder %s25, 1
        %s510 = scalar_select %p509, %s25, 1
        %s511 = smul.addr %s510, 2
        %s512 = smul.addr %s511, 4
        %s513 = scalar_lea.vmem %s0, %s512
      $region84: #{hourglass_forward.4} parent=79 // pred_fallthru
        _
    $region80: #{hourglass_forward.4} parent=5 // pred_fallthru
      _
    %p514 = scmp.le.s32.totalorder 1, %s25
    %p515 = scmp.lt.s32.totalorder %s25, 3
    %p516 = pnand %p514, %p515
    %p517 = pneg %p516
    // Predicated region
    $region85: #{hourglass_forward.4} parent=5 // pred_check
      _
    $region86: #{hourglass_forward.4} parent=5 // pred_check_branch
      %519 = sbr.rel (%p516) target = $region88
    $region87: #{hourglass_forward.4} parent=5 // pred_region
      %s520 = ssub.s32 %s25, 1
      %p521 = scmp.lt.s32.totalorder %s30, 1
      %s522 = scalar_select %p521, %s30, 1
      %s523 = smul.addr %s522, 2
      %s524 = smul.addr %s523, 4
      %s525 = scalar_lea.vmem %s0, %s524
      %p526 = pneg %p51
      %p527 = pneg %p48
      %p528 = pneg %p72
      %p529 = pneg %p69
      %p530 = pneg %p93
      %p531 = pneg %p90
      %p532 = pneg %p114
      %p533 = pneg %p111
      %p534 = pneg %p135
      %p535 = pneg %p132
      %p536 = pneg %p156
      %p537 = pneg %p153
      %p538 = pneg %p177
      %p539 = pneg %p174
      %p540 = pneg %p198
      %p541 = pneg %p195
      %p542 = pneg %p219
      %p543 = pneg %p216
      %p544 = pneg %p240
      %p545 = pneg %p237
      %p546 = pneg %p261
      %p547 = pneg %p258
      %p548 = pneg %p282
      %p549 = pneg %p279
      %p550 = pneg %p303
      %p551 = pneg %p300
      %p552 = pneg %p324
      %p553 = pneg %p321
      %p554 = pneg %p345
      %p555 = pneg %p342
      %p556 = pneg %p366
      %p557 = pneg %p363
      %p558 = pneg %p387
      %p559 = pneg %p384
      %p560 = pneg %p413
      %p561 = pneg %p410
      %p562 = scmp.lt.s32.totalorder %s30, 1
      %s563 = scalar_select %p562, %s30, 1
      %s564 = smul.addr %s563, 2
      %s565 = smul.addr %s564, 8
      %s566 = scalar_lea.vmem %s17, %s565
      %p567 = pneg %p439
      %p568 = pneg %p436
      %p569 = scmp.lt.s32.totalorder %s30, 1
      %s570 = scalar_select %p569, %s30, 1
      %s571 = smul.addr %s570, 3
      %s572 = smul.addr %s571, 8
      %s573 = scalar_lea.vmem %s18, %s572
      %p574 = scmp.lt.s32.totalorder %s30, 1
      %s575 = scalar_select %p574, %s30, 1
      %s576 = smul.addr %s575, 2
      %s577 = smul.addr %s576, 4
      %s578 = scalar_lea.vmem %s0, %s577
      %p579 = scmp.lt.s32.totalorder %s30, 1
      %s580 = scalar_select %p579, %s30, 1
      %s581 = smul.addr %s580, 2
      %s582 = smul.addr %s581, 8
      %s583 = scalar_lea.vmem %s17, %s582
      %p584 = scmp.lt.s32.totalorder %s30, 1
      %s585 = scalar_select %p584, %s30, 1
      %s586 = smul.addr %s585, 3
      %s587 = smul.addr %s586, 8
      %s588 = scalar_lea.vmem %s18, %s587
      %v590 = vld [vmem:[%s578] sm:$0xf]
      %v591 = vld [vmem:[%s578 + $0x4] sm:$0xf]
      %v592 = vld [vmem:[%s13] sm:$0x3]
      %v593 = vld [vmem:[%s14] sm:$0x3]
      %v594 = vld [vmem:[%s1] sm:$0xff]
      %v595 = vld [vmem:[%s1 + $0x8] sm:$0xff]
      %v596 = vld [vmem:[%s2] sm:$0xff]
      %v597 = vld [vmem:[%s2 + $0x8] sm:$0xff]
      %v598 = vpack.c.bf16 %v592, %v592
      %v600 = vpack.i.b16 %v598, %v598
      %v602 = vlaneseq
      %v603 = vshrl.u32 %v602, 7
      %v604 = vsub.s32 0, %v603
      %v605 = vrot.slane %v600, %v604
      %v607 = vunpack.c.l.b16 %v605
      %v608 = vpack.c.b16 %v607, %v607
      %v610 = vmul.bf16 %v590, %v608
      %v611 = vmul.bf16 %v591, %v608
      %v612 = vshrl.u32 %v598, 16
      %v613 = vpack.i.b16 %v612, %v612
      %v615 = vlaneseq
      %v616 = vshrl.u32 %v615, 7
      %v617 = vsub.s32 0, %v616
      %v618 = vrot.slane %v613, %v617
      %v620 = vunpack.c.l.b16 %v618
      %v621 = vpack.c.b16 %v620, %v620
      %v623 = vmul.bf16 %v590, %v621
      %v624 = vmul.bf16 %v591, %v621
      %v627 = vunpack.c.l.b16 %v610
      %v628 = vunpack.c.l.b16 %v611
      %v629 = vpack.c.b16 %v628, %v627
      %vm630 = vcmask 523264
      %v633 = vsel %vm630, %v629, 0
      %v636 = vunpack.c.l.b16 %v590
      %v637 = vunpack.c.l.b16 %v591
      %v638 = vpack.c.b16 %v637, %v636
      %v640 = vsel %vm630, %v638, 0
      %v643 = vunpack.c.l.b16 %v623
      %v644 = vunpack.c.l.b16 %v624
      %v645 = vpack.c.b16 %v644, %v643
      %v647 = vsel %vm630, %v645, 0
      %650 = vrot.lane.b32.xlu0 0, 127
      %v651 = vpop.permute.xlu0 %650
      %652 = vrot.lane.b32.xlu0 %v640, 127
      %v653 = vpop.permute.xlu0 %652
      %vm654 = vcmask 1039360
      %v655 = vsel %vm654, %v651, %v653
      %657 = vrot.lane.b32.xlu0 0, 126
      %v658 = vpop.permute.xlu0 %657
      %659 = vrot.lane.b32.xlu0 %v647, 126
      %v660 = vpop.permute.xlu0 %659
      %vm661 = vcmask 1031168
      %v662 = vsel %vm661, %v658, %v660
      %664 = vrot.lane.b32.xlu0 0, 120
      %v665 = vpop.permute.xlu0 %664
      %666 = vrot.lane.b32.xlu0 %v633, 120
      %v667 = vpop.permute.xlu0 %666
      %vm668 = vcmask 982016
      %v669 = vsel %vm668, %v665, %v667
      %670 = vrot.lane.b32.xlu0 %v640, 119
      %v671 = vpop.permute.xlu0 %670
      %672 = vrot.lane.b32.xlu0 %v647, 118
      %v673 = vpop.permute.xlu0 %672
      %674 = vrot.lane.b32.xlu0 %v633, 112
      %v675 = vpop.permute.xlu0 %674
      %676 = vrot.lane.b32.xlu0 %v640, 111
      %v677 = vpop.permute.xlu0 %676
      %678 = vrot.lane.b32.xlu0 %v647, 110
      %v679 = vpop.permute.xlu0 %678
      %681 = vset.pattern.permute.xlu0 0
      %682 = vperm.xlu0 %681, %v596
      %v683 = vpop.permute.xlu0 %682
      %686 = vset.pattern.permute.xlu0 0
      %687 = vperm.xlu0 %686, %v597
      %v688 = vpop.permute.xlu0 %687
      %v692 = vunpack.c.l.b16 %v594
      %v693 = vunpack.c.h.b16 %v594
      %v694 = vunpack.c.l.b16 %v595
      %v695 = vunpack.c.h.b16 %v595
      %v696 = vpack.c.b16 %v694, %v692
      %v697 = vpack.c.b16 %v695, %v693
      %699 = vrot.lane.b32.xlu0 0, 9
      %v700 = vpop.permute.xlu0 %699
      %701 = vrot.lane.b32.xlu0 %v633, 9
      %v702 = vpop.permute.xlu0 %701
      %703 = vrot.lane.b32.xlu0 %v655, 9
      %v704 = vpop.permute.xlu0 %703
      %705 = vrot.lane.b32.xlu0 %v653, 9
      %v706 = vpop.permute.xlu0 %705
      %707 = vrot.lane.b32.xlu0 %v662, 9
      %v708 = vpop.permute.xlu0 %707
      %709 = vrot.lane.b32.xlu0 %v660, 9
      %v710 = vpop.permute.xlu0 %709
      %711 = vrot.lane.b32.xlu0 %v669, 9
      %v712 = vpop.permute.xlu0 %711
      %713 = vrot.lane.b32.xlu0 %v667, 9
      %v714 = vpop.permute.xlu0 %713
      %715 = vrot.lane.b32.xlu0 %v671, 9
      %v716 = vpop.permute.xlu0 %715
      %717 = vrot.lane.b32.xlu0 %v673, 9
      %v718 = vpop.permute.xlu0 %717
      %719 = vrot.lane.b32.xlu0 %v675, 9
      %v720 = vpop.permute.xlu0 %719
      %721 = vrot.lane.b32.xlu0 %v677, 9
      %v722 = vpop.permute.xlu0 %721
      %723 = vrot.lane.b32.xlu0 %v679, 9
      %v724 = vpop.permute.xlu0 %723
      %vm725 = vcmask 72704
      %v726 = vsel %vm725, %v700, %v702
      %v727 = vsel %vm725, %v704, %v706
      %v728 = vsel %vm725, %v708, %v710
      %v729 = vsel %vm725, %v712, %v714
      %vm739 = vcmask 130048
      %v741 = vsel %vm739, %v697, 0
      %743 = vmatprep.subr.bf16.mxu0 0
      %744 = vmatpush1.bf16.msra.mxu0 %v722
      %745 = vmatprep.subr.bf16.mxu0 0
      %746 = vmatpush1.bf16.msra.mxu0 %v720
      %747 = vmatprep.subr.bf16.mxu0 0
      %748 = vmatpush1.bf16.msra.mxu0 %v718
      %749 = vmatprep.subr.bf16.mxu0 0
      %750 = vmatpush1.bf16.msra.mxu0 %v716
      %751 = vmatprep.subr.bf16.mxu0 0
      %752 = vmatpush1.bf16.msra.mxu0 %v729
      %753 = vmatprep.subr.bf16.mxu0 0
      %754 = vmatpush1.bf16.msra.mxu0 %v728
      %755 = vmatprep.subr.bf16.mxu0 0
      %756 = vmatpush1.bf16.msra.mxu0 %v727
      %757 = vmatprep.subr.bf16.mxu0 0
      %758 = vmatpush1.bf16.msra.mxu0 %v726
      %759 = vmatprep.subr.bf16.mxu0 0
      %760 = vmatpush2.bf16.msra.mxu0 0
      %761 = vmatprep.subr.bf16.mxu0 0
      %762 = vmatpush2.bf16.msra.mxu0 0
      %763 = vmatprep.subr.bf16.mxu0 0
      %764 = vmatpush2.bf16.msra.mxu0 0
      %765 = vmatprep.subr.bf16.mxu0 0
      %766 = vmatpush2.bf16.msra.mxu0 0
      %767 = vmatprep.subr.bf16.mxu0 0
      %768 = vmatpush2.bf16.msra.mxu0 0
      %769 = vmatprep.subr.bf16.mxu0 0
      %770 = vmatpush2.bf16.msra.mxu0 0
      %771 = vmatprep.subr.bf16.mxu0 0
      %772 = vmatpush2.bf16.msra.mxu0 0
      %773 = vmatprep.subr.bf16.mxu0 0
      %774 = vmatpush2.bf16.msra.mxu0 %v724
      %775 = vmatprep.mubr.bf16.mxu0 %v741
      %776 = vmatmul.mubr.bf16.gmra.mxu0 %v696
      %v777 = vpop.f32.mrf.mxu0
      %v778 = vadd.f32 %v683, %v777
      %v779 = vpop.f32.mrf.mxu0
      %v780 = vpop.f32.mrf.mxu0
      %v781 = vadd.f32 %v688, %v780
      %v782 = vpop.f32.mrf.mxu0
      %783 = vdwg.mxu0
      %v784 = vld [vmem:[%s15] sm:$0xf]
      %v785 = vunpack.c.l.b16 %v640
      %v786 = vunpack.c.h.b16 %v640
      %v787 = vpack.c.b16 %v785, %v785
      %v788 = vpack.c.b16 %v786, %v786
      %789 = vrot.lane.b32.xlu0 %v787, 127
      %v790 = vpop.permute.xlu0 %789
      %791 = vrot.lane.b32.xlu0 %v788, 127
      %v792 = vpop.permute.xlu0 %791
      %v795 = vmax.bf16 %v590, %v790
      %v796 = vmax.bf16 %v591, %v792
      %v799 = vunpack.c.l.b16 %v795
      %v800 = vunpack.c.l.b16 %v796
      %v801 = vpack.c.b16 %v800, %v799
      %v803 = vsel %vm630, %v801, 0
      %v805 = vunpack.c.l.b16 %v803
      %v806 = vunpack.c.h.b16 %v803
      %v807 = vpack.c.b16 %v805, %v805
      %v808 = vpack.c.b16 %v806, %v806
      %809 = vrot.lane.b32.xlu0 %v807, 120
      %v810 = vpop.permute.xlu0 %809
      %811 = vrot.lane.b32.xlu0 %v808, 120
      %v812 = vpop.permute.xlu0 %811
      %v815 = vmax.bf16 %v795, %v810
      %v816 = vmax.bf16 %v796, %v812
      %v819 = vunpack.c.l.b16 %v815
      %v820 = vunpack.c.l.b16 %v816
      %v821 = vpack.c.b16 %v820, %v819
      %822 = vrot.lane.b32.xlu0 %v821, 112
      %v823 = vpop.permute.xlu0 %822
      %824 = vrot.lane.b32.xlu0 %v821, 96
      %v825 = vpop.permute.xlu0 %824
      %826 = vrot.lane.b32.xlu0 %v821, 80
      %v827 = vpop.permute.xlu0 %826
      %vm828 = vcmask 64512
      %v830 = vsel %vm828, %v821, 0
      %v833 = vsel %vm828, %v823, 0
      %v836 = vsel %vm828, %v825, 0
      %v839 = vsel %vm828, %v827, 0
      %vm841 = vcmask 1043456
      %v843 = vsel %vm841, %v784, 0
      %845 = vmatprep.subr.bf16.mxu0 0
      %846 = vmatpush1.bf16.msra.mxu0 0
      %847 = vmatprep.subr.bf16.mxu0 0
      %848 = vmatpush1.bf16.msra.mxu0 0
      %849 = vmatprep.subr.bf16.mxu0 0
      %850 = vmatpush1.bf16.msra.mxu0 0
      %851 = vmatprep.subr.bf16.mxu0 0
      %852 = vmatpush1.bf16.msra.mxu0 0
      %853 = vmatprep.subr.bf16.mxu0 0
      %854 = vmatpush1.bf16.msra.mxu0 0
      %855 = vmatprep.subr.bf16.mxu0 0
      %856 = vmatpush1.bf16.msra.mxu0 0
      %857 = vmatprep.subr.bf16.mxu0 0
      %858 = vmatpush1.bf16.msra.mxu0 0
      %859 = vmatprep.subr.bf16.mxu0 0
      %860 = vmatpush1.bf16.msra.mxu0 %v843
      %861 = vmatprep.subr.bf16.mxu0 0
      %862 = vmatpush2.bf16.msra.mxu0 0
      %863 = vmatprep.subr.bf16.mxu0 0
      %864 = vmatpush2.bf16.msra.mxu0 0
      %865 = vmatprep.subr.bf16.mxu0 0
      %866 = vmatpush2.bf16.msra.mxu0 0
      %867 = vmatprep.subr.bf16.mxu0 0
      %868 = vmatpush2.bf16.msra.mxu0 0
      %869 = vmatprep.subr.bf16.mxu0 0
      %870 = vmatpush2.bf16.msra.mxu0 0
      %871 = vmatprep.subr.bf16.mxu0 0
      %872 = vmatpush2.bf16.msra.mxu0 0
      %873 = vmatprep.subr.bf16.mxu0 0
      %874 = vmatpush2.bf16.msra.mxu0 0
      %875 = vmatprep.subr.bf16.mxu0 0
      %876 = vmatpush2.bf16.msra.mxu0 0
      %877 = vmatprep.mubr.bf16.mxu0 0
      %878 = vmatmul.mubr.bf16.gmra.mxu0 %v830
      %v879 = vpop.f32.mrf.mxu0
      %v880 = vadd.f32 0.0, %v879
      %v881 = vpop.f32.mrf.mxu0
      %v882 = vpop.f32.mrf.mxu0
      %v883 = vadd.f32 0.0, %v882
      %v884 = vpop.f32.mrf.mxu0
      %885 = vmatprep.mubr.bf16.mxu0 0
      %886 = vmatmul.mubr.bf16.gmra.mxu0 %v833
      %v887 = vpop.f32.mrf.mxu0
      %v888 = vadd.f32 0.0, %v887
      %v889 = vpop.f32.mrf.mxu0
      %v890 = vpop.f32.mrf.mxu0
      %v891 = vadd.f32 0.0, %v890
      %v892 = vpop.f32.mrf.mxu0
      %893 = vmatprep.mubr.bf16.mxu0 0
      %894 = vmatmul.mubr.bf16.gmra.mxu0 %v836
      %v895 = vpop.f32.mrf.mxu0
      %v896 = vadd.f32 0.0, %v895
      %v897 = vpop.f32.mrf.mxu0
      %v898 = vpop.f32.mrf.mxu0
      %v899 = vadd.f32 0.0, %v898
      %v900 = vpop.f32.mrf.mxu0
      %901 = vmatprep.mubr.bf16.mxu0 0
      %902 = vmatmul.mubr.bf16.gmra.mxu0 %v839
      %v903 = vpop.f32.mrf.mxu0
      %v904 = vadd.f32 0.0, %v903
      %v905 = vpop.f32.mrf.mxu0
      %v906 = vpop.f32.mrf.mxu0
      %v907 = vadd.f32 0.0, %v906
      %v908 = vpop.f32.mrf.mxu0
      %909 = vdwg.mxu0
      %912 = vrot.lane.b32.xlu0 %v888, 4
      %v913 = vpop.permute.xlu0 %912
      %914 = vrot.lane.b32.xlu0 %v891, 4
      %v915 = vpop.permute.xlu0 %914
      %920 = vrot.lane.b32.xlu0 %v896, 8
      %v921 = vpop.permute.xlu0 %920
      %922 = vrot.lane.b32.xlu0 %v899, 8
      %v923 = vpop.permute.xlu0 %922
      %928 = vrot.lane.b32.xlu0 %v904, 12
      %v929 = vpop.permute.xlu0 %928
      %930 = vrot.lane.b32.xlu0 %v907, 12
      %v931 = vpop.permute.xlu0 %930
      %vm934 = vcmask 31744
      %v935 = vsel %vm934, %v880, %v913
      %v936 = vsel %vm934, %v883, %v915
      %v937 = vsel %vm828, %v935, %v921
      %v938 = vsel %vm828, %v936, %v923
      %vm939 = vcmask 97280
      %v940 = vsel %vm939, %v937, %v929
      %v941 = vsel %vm939, %v938, %v931
      %v942 = vld [vmem:[%s3] sm:$0xff]
      %v943 = vld [vmem:[%s3 + $0x8] sm:$0xff]
      %v944 = vld [vmem:[%s3 + $0x10] sm:$0xff]
      %v945 = vld [vmem:[%s4] sm:$0xff]
      %v946 = vld [vmem:[%s4 + $0x8] sm:$0xff]
      %v947 = vld [vmem:[%s4 + $0x10] sm:$0xff]
      %v948 = vpack.c.bf16 %v941, %v940
      %v949 = vpack.c.bf16 %v593, %v593
      %v951 = vpack.i.b16 %v949, %v949
      %v953 = vlaneseq
      %v954 = vshrl.u32 %v953, 7
      %v955 = vsub.s32 0, %v954
      %v956 = vrot.slane %v951, %v955
      %v957 = vmul.bf16 %v948, %v956
      %v958 = vshrl.u32 %v949, 16
      %v959 = vpack.i.b16 %v958, %v958
      %v961 = vlaneseq
      %v962 = vshrl.u32 %v961, 7
      %v963 = vsub.s32 0, %v962
      %v964 = vrot.slane %v959, %v963
      %v965 = vmul.bf16 %v948, %v964
      %v967 = vsel %vm739, %v957, 0
      %v969 = vsel %vm739, %v948, 0
      %v971 = vsel %vm739, %v965, 0
      %973 = vrot.lane.b32.xlu0 %v969, 127
      %v974 = vpop.permute.xlu0 %973
      %v975 = vsel %vm654, %v651, %v974
      %977 = vrot.lane.b32.xlu0 %v971, 126
      %v978 = vpop.permute.xlu0 %977
      %v979 = vsel %vm661, %v658, %v978
      %981 = vrot.lane.b32.xlu0 0, 124
      %v982 = vpop.permute.xlu0 %981
      %983 = vrot.lane.b32.xlu0 %v967, 124
      %v984 = vpop.permute.xlu0 %983
      %vm985 = vcmask 1014784
      %v986 = vsel %vm985, %v982, %v984
      %987 = vrot.lane.b32.xlu0 %v969, 123
      %v988 = vpop.permute.xlu0 %987
      %989 = vrot.lane.b32.xlu0 %v971, 122
      %v990 = vpop.permute.xlu0 %989
      %991 = vrot.lane.b32.xlu0 %v967, 120
      %v992 = vpop.permute.xlu0 %991
      %993 = vrot.lane.b32.xlu0 %v969, 119
      %v994 = vpop.permute.xlu0 %993
      %995 = vrot.lane.b32.xlu0 %v971, 118
      %v996 = vpop.permute.xlu0 %995
      %998 = vset.pattern.permute.xlu0 0
      %999 = vperm.xlu0 %998, %v945
      %v1000 = vpop.permute.xlu0 %999
      %1003 = vset.pattern.permute.xlu0 0
      %1004 = vperm.xlu0 %1003, %v946
      %v1005 = vpop.permute.xlu0 %1004
      %1008 = vset.pattern.permute.xlu0 0
      %1009 = vperm.xlu0 %1008, %v947
      %v1010 = vpop.permute.xlu0 %1009
      %v1015 = vunpack.c.l.b16 %v942
      %v1016 = vunpack.c.h.b16 %v942
      %v1017 = vunpack.c.l.b16 %v943
      %v1018 = vunpack.c.h.b16 %v943
      %v1019 = vunpack.c.l.b16 %v944
      %v1020 = vunpack.c.h.b16 %v944
      %v1021 = vpack.c.b16 %v1017, %v1015
      %v1022 = vpack.c.b16 %v1018, %v1016
      %v1023 = vpack.c.b16 %v1019, %v1019
      %v1024 = vpack.c.b16 %v1020, %v1020
      %1027 = vrot.lane.b32.xlu0 0, 5
      %v1028 = vpop.permute.xlu0 %1027
      %1029 = vrot.lane.b32.xlu0 %v967, 5
      %v1030 = vpop.permute.xlu0 %1029
      %1031 = vrot.lane.b32.xlu0 %v975, 5
      %v1032 = vpop.permute.xlu0 %1031
      %1033 = vrot.lane.b32.xlu0 %v974, 5
      %v1034 = vpop.permute.xlu0 %1033
      %1035 = vrot.lane.b32.xlu0 %v979, 5
      %v1036 = vpop.permute.xlu0 %1035
      %1037 = vrot.lane.b32.xlu0 %v978, 5
      %v1038 = vpop.permute.xlu0 %1037
      %1039 = vrot.lane.b32.xlu0 %v986, 5
      %v1040 = vpop.permute.xlu0 %1039
      %1041 = vrot.lane.b32.xlu0 %v984, 5
      %v1042 = vpop.permute.xlu0 %1041
      %1043 = vrot.lane.b32.xlu0 %v988, 5
      %v1044 = vpop.permute.xlu0 %1043
      %1045 = vrot.lane.b32.xlu0 %v990, 5
      %v1046 = vpop.permute.xlu0 %1045
      %1047 = vrot.lane.b32.xlu0 %v992, 5
      %v1048 = vpop.permute.xlu0 %1047
      %1049 = vrot.lane.b32.xlu0 %v994, 5
      %v1050 = vpop.permute.xlu0 %1049
      %1051 = vrot.lane.b32.xlu0 %v996, 5
      %v1052 = vpop.permute.xlu0 %1051
      %vm1053 = vcmask 39936
      %v1054 = vsel %vm1053, %v1028, %v1030
      %v1055 = vsel %vm1053, %v1032, %v1034
      %v1056 = vsel %vm1053, %v1036, %v1038
      %v1057 = vsel %vm1053, %v1040, %v1042
      %v1068 = vsel %vm739, %v1022, 0
      %v1071 = vsel %vm739, %v1024, 0
      %1073 = vmatprep.subr.bf16.mxu0 0
      %1074 = vmatpush1.bf16.msra.mxu0 %v1050
      %1075 = vmatprep.subr.bf16.mxu0 0
      %1076 = vmatpush1.bf16.msra.mxu0 %v1048
      %1077 = vmatprep.subr.bf16.mxu0 0
      %1078 = vmatpush1.bf16.msra.mxu0 %v1046
      %1079 = vmatprep.subr.bf16.mxu0 0
      %1080 = vmatpush1.bf16.msra.mxu0 %v1044
      %1081 = vmatprep.subr.bf16.mxu0 0
      %1082 = vmatpush1.bf16.msra.mxu0 %v1057
      %1083 = vmatprep.subr.bf16.mxu0 0
      %1084 = vmatpush1.bf16.msra.mxu0 %v1056
      %1085 = vmatprep.subr.bf16.mxu0 0
      %1086 = vmatpush1.bf16.msra.mxu0 %v1055
      %1087 = vmatprep.subr.bf16.mxu0 0
      %1088 = vmatpush1.bf16.msra.mxu0 %v1054
      %1089 = vmatprep.subr.bf16.mxu0 0
      %1090 = vmatpush2.bf16.msra.mxu0 0
      %1091 = vmatprep.subr.bf16.mxu0 0
      %1092 = vmatpush2.bf16.msra.mxu0 0
      %1093 = vmatprep.subr.bf16.mxu0 0
      %1094 = vmatpush2.bf16.msra.mxu0 0
      %1095 = vmatprep.subr.bf16.mxu0 0
      %1096 = vmatpush2.bf16.msra.mxu0 0
      %1097 = vmatprep.subr.bf16.mxu0 0
      %1098 = vmatpush2.bf16.msra.mxu0 0
      %1099 = vmatprep.subr.bf16.mxu0 0
      %1100 = vmatpush2.bf16.msra.mxu0 0
      %1101 = vmatprep.subr.bf16.mxu0 0
      %1102 = vmatpush2.bf16.msra.mxu0 0
      %1103 = vmatprep.subr.bf16.mxu0 0
      %1104 = vmatpush2.bf16.msra.mxu0 %v1052
      %1105 = vmatprep.mubr.bf16.mxu0 %v1068
      %1106 = vmatmul.mubr.bf16.gmra.mxu0 %v1021
      %v1107 = vpop.f32.mrf.mxu0
      %v1108 = vadd.f32 %v1000, %v1107
      %v1109 = vpop.f32.mrf.mxu0
      %v1110 = vpop.f32.mrf.mxu0
      %v1111 = vadd.f32 %v1005, %v1110
      %v1112 = vpop.f32.mrf.mxu0
      %1113 = vmatprep.mubr.bf16.mxu0 %v1071
      %1114 = vmatmul.mubr.bf16.gmra.mxu0 %v1023
      %v1115 = vpop.f32.mrf.mxu0
      %v1116 = vadd.f32 %v1010, %v1115
      %v1117 = vpop.f32.mrf.mxu0
      %v1118 = vpop.f32.mrf.mxu0
      %v1119 = vpop.f32.mrf.mxu0
      %1120 = vdwg.mxu0
      %vm1121 = vcmp.gt.f32.partialorder %v1108, 0.0
      %vm1122 = vcmp.gt.f32.partialorder %v1111, 0.0
      %vm1123 = vcmp.gt.f32.partialorder %v1116, 0.0
      %v1124 = vmul.f32 %v1108, 0.01
      %v1125 = vmul.f32 %v1111, 0.01
      %v1126 = vmul.f32 %v1116, 0.01
      %v1127 = vsel %vm1121, %v1108, %v1124
      %v1128 = vsel %vm1122, %v1111, %v1125
      %v1129 = vsel %vm1123, %v1116, %v1126
      %v1130 = vld [vmem:[%s5] sm:$0xff]
      %v1131 = vld [vmem:[%s5 + $0x8] sm:$0xff]
      %v1132 = vld [vmem:[%s5 + $0x10] sm:$0xff]
      %v1133 = vld [vmem:[%s6] sm:$0xff]
      %v1134 = vld [vmem:[%s6 + $0x8] sm:$0xff]
      %v1135 = vld [vmem:[%s6 + $0x10] sm:$0xff]
      %v1136 = vpack.c.bf16 %v1128, %v1127
      %v1137 = vpack.c.bf16 %v1129, %v1129
      %v1138 = vmul.bf16 %v1136, %v956
      %v1139 = vmul.bf16 %v1137, %v956
      %v1140 = vmul.bf16 %v1136, %v964
      %v1141 = vmul.bf16 %v1137, %v964
      %v1143 = vsel %vm739, %v1138, 0
      %v1145 = vsel %vm739, %v1139, 0
      %v1147 = vsel %vm739, %v1136, 0
      %v1149 = vsel %vm739, %v1137, 0
      %v1151 = vsel %vm739, %v1140, 0
      %v1153 = vsel %vm739, %v1141, 0
      %vm1156 = vcmask 1043456
      %v1157 = vrot.slane 0, 4
      %v1158 = vrot.slane %v1147, 4
      %v1159 = vsel %vm1156, %v1157, %v1157
      %v1160 = vrot.slane %v1149, 4
      %v1161 = vsel %vm1156, %v1158, %v1160
      %1162 = vrot.lane.b32.xlu0 %v1157, 127
      %v1163 = vpop.permute.xlu0 %1162
      %1164 = vrot.lane.b32.xlu0 %v1158, 127
      %v1165 = vpop.permute.xlu0 %1164
      %1166 = vrot.lane.b32.xlu0 %v1159, 127
      %v1167 = vpop.permute.xlu0 %1166
      %1168 = vrot.lane.b32.xlu0 %v1161, 127
      %v1169 = vpop.permute.xlu0 %1168
      %v1170 = vsel %vm654, %v1163, %v1165
      %v1171 = vsel %vm654, %v1167, %v1169
      %1174 = vrot.lane.b32.xlu0 %v1151, 126
      %v1175 = vpop.permute.xlu0 %1174
      %1176 = vrot.lane.b32.xlu0 %v1153, 126
      %v1177 = vpop.permute.xlu0 %1176
      %v1178 = vsel %vm661, %v658, %v1175
      %v1179 = vsel %vm661, %v658, %v1177
      %v1182 = vrot.slane %v1143, 4
      %v1183 = vrot.slane %v1145, 4
      %v1184 = vsel %vm1156, %v1182, %v1183
      %1185 = vrot.lane.b32.xlu0 %v1157, 124
      %v1186 = vpop.permute.xlu0 %1185
      %1187 = vrot.lane.b32.xlu0 %v1182, 124
      %v1188 = vpop.permute.xlu0 %1187
      %1189 = vrot.lane.b32.xlu0 %v1159, 124
      %v1190 = vpop.permute.xlu0 %1189
      %1191 = vrot.lane.b32.xlu0 %v1184, 124
      %v1192 = vpop.permute.xlu0 %1191
      %v1193 = vsel %vm985, %v1186, %v1188
      %v1194 = vsel %vm985, %v1190, %v1192
      %1195 = vrot.lane.b32.xlu0 %v1147, 123
      %v1196 = vpop.permute.xlu0 %1195
      %1197 = vrot.lane.b32.xlu0 %v1149, 123
      %v1198 = vpop.permute.xlu0 %1197
      %v1199 = vrot.slane %v1151, 4
      %v1200 = vrot.slane %v1153, 4
      %v1201 = vsel %vm1156, %v1199, %v1200
      %1202 = vrot.lane.b32.xlu0 %v1199, 122
      %v1203 = vpop.permute.xlu0 %1202
      %1204 = vrot.lane.b32.xlu0 %v1201, 122
      %v1205 = vpop.permute.xlu0 %1204
      %1206 = vrot.lane.b32.xlu0 %v1143, 120
      %v1207 = vpop.permute.xlu0 %1206
      %1208 = vrot.lane.b32.xlu0 %v1145, 120
      %v1209 = vpop.permute.xlu0 %1208
      %1210 = vrot.lane.b32.xlu0 %v1158, 119
      %v1211 = vpop.permute.xlu0 %1210
      %1212 = vrot.lane.b32.xlu0 %v1161, 119
      %v1213 = vpop.permute.xlu0 %1212
      %1214 = vrot.lane.b32.xlu0 %v1151, 118
      %v1215 = vpop.permute.xlu0 %1214
      %1216 = vrot.lane.b32.xlu0 %v1153, 118
      %v1217 = vpop.permute.xlu0 %1216
      %v1219 = vsel %vm841, 0, %v1170
      %v1221 = vsel %vm841, %v1145, %v1165
      %v1224 = vsel %vm841, %v1179, %v1193
      %v1227 = vsel %vm841, %v1177, %v1188
      %v1230 = vsel %vm841, %v1198, %v1203
      %v1233 = vsel %vm841, %v1209, %v1211
      %1235 = vset.pattern.permute.xlu0 0
      %1236 = vperm.xlu0 %1235, %v1133
      %v1237 = vpop.permute.xlu0 %1236
      %1240 = vset.pattern.permute.xlu0 0
      %1241 = vperm.xlu0 %1240, %v1134
      %v1242 = vpop.permute.xlu0 %1241
      %1245 = vset.pattern.permute.xlu0 0
      %1246 = vperm.xlu0 %1245, %v1135
      %v1247 = vpop.permute.xlu0 %1246
      %v1252 = vunpack.c.l.b16 %v1130
      %v1253 = vunpack.c.h.b16 %v1130
      %v1254 = vunpack.c.l.b16 %v1131
      %v1255 = vunpack.c.h.b16 %v1131
      %v1256 = vunpack.c.l.b16 %v1132
      %v1257 = vunpack.c.h.b16 %v1132
      %v1258 = vpack.c.b16 %v1254, %v1252
      %v1259 = vpack.c.b16 %v1255, %v1253
      %v1260 = vpack.c.b16 %v1256, %v1256
      %v1261 = vpack.c.b16 %v1257, %v1257
      %1270 = vrot.lane.b32.xlu0 %v1143, 5
      %v1271 = vpop.permute.xlu0 %1270
      %1272 = vrot.lane.b32.xlu0 %v1219, 5
      %v1273 = vpop.permute.xlu0 %1272
      %1274 = vrot.lane.b32.xlu0 %v1221, 5
      %v1275 = vpop.permute.xlu0 %1274
      %1276 = vrot.lane.b32.xlu0 %v1171, 5
      %v1277 = vpop.permute.xlu0 %1276
      %1278 = vrot.lane.b32.xlu0 %v1169, 5
      %v1279 = vpop.permute.xlu0 %1278
      %1280 = vrot.lane.b32.xlu0 %v1178, 5
      %v1281 = vpop.permute.xlu0 %1280
      %1282 = vrot.lane.b32.xlu0 %v1175, 5
      %v1283 = vpop.permute.xlu0 %1282
      %1284 = vrot.lane.b32.xlu0 %v1224, 5
      %v1285 = vpop.permute.xlu0 %1284
      %1286 = vrot.lane.b32.xlu0 %v1227, 5
      %v1287 = vpop.permute.xlu0 %1286
      %1288 = vrot.lane.b32.xlu0 %v1194, 5
      %v1289 = vpop.permute.xlu0 %1288
      %1290 = vrot.lane.b32.xlu0 %v1192, 5
      %v1291 = vpop.permute.xlu0 %1290
      %1292 = vrot.lane.b32.xlu0 %v1196, 5
      %v1293 = vpop.permute.xlu0 %1292
      %1294 = vrot.lane.b32.xlu0 %v1230, 5
      %v1295 = vpop.permute.xlu0 %1294
      %1296 = vrot.lane.b32.xlu0 %v1205, 5
      %v1297 = vpop.permute.xlu0 %1296
      %1298 = vrot.lane.b32.xlu0 %v1207, 5
      %v1299 = vpop.permute.xlu0 %1298
      %1300 = vrot.lane.b32.xlu0 %v1233, 5
      %v1301 = vpop.permute.xlu0 %1300
      %1302 = vrot.lane.b32.xlu0 %v1213, 5
      %v1303 = vpop.permute.xlu0 %1302
      %1304 = vrot.lane.b32.xlu0 %v1215, 5
      %v1305 = vpop.permute.xlu0 %1304
      %1306 = vrot.lane.b32.xlu0 %v1217, 5
      %v1307 = vpop.permute.xlu0 %1306
      %v1308 = vsel %vm1053, %v1028, %v1271
      %v1309 = vsel %vm1053, %v1273, %v1275
      %v1310 = vsel %vm1053, %v1277, %v1279
      %v1311 = vsel %vm1053, %v1281, %v1283
      %v1312 = vsel %vm1053, %v1285, %v1287
      %v1313 = vsel %vm1053, %v1289, %v1291
      %vm1327 = vcmask 719872
      %v1329 = vsel %vm1327, %v1259, 0
      %v1332 = vsel %vm1327, %v1261, 0
      %v1335 = vsel %vm841, %v1307, 0
      %1337 = vmatprep.subr.bf16.mxu0 0
      %1338 = vmatpush1.bf16.msra.mxu0 %v1295
      %1339 = vmatprep.subr.bf16.mxu0 0
      %1340 = vmatpush1.bf16.msra.mxu0 %v1293
      %1341 = vmatprep.subr.bf16.mxu0 0
      %1342 = vmatpush1.bf16.msra.mxu0 %v1313
      %1343 = vmatprep.subr.bf16.mxu0 0
      %1344 = vmatpush1.bf16.msra.mxu0 %v1312
      %1345 = vmatprep.subr.bf16.mxu0 0
      %1346 = vmatpush1.bf16.msra.mxu0 %v1311
      %1347 = vmatprep.subr.bf16.mxu0 0
      %1348 = vmatpush1.bf16.msra.mxu0 %v1310
      %1349 = vmatprep.subr.bf16.mxu0 0
      %1350 = vmatpush1.bf16.msra.mxu0 %v1309
      %1351 = vmatprep.subr.bf16.mxu0 0
      %1352 = vmatpush1.bf16.msra.mxu0 %v1308
      %1353 = vmatprep.subr.bf16.mxu0 0
      %1354 = vmatpush2.bf16.msra.mxu0 0
      %1355 = vmatprep.subr.bf16.mxu0 0
      %1356 = vmatpush2.bf16.msra.mxu0 0
      %1357 = vmatprep.subr.bf16.mxu0 0
      %1358 = vmatpush2.bf16.msra.mxu0 %v1335
      %1359 = vmatprep.subr.bf16.mxu0 0
      %1360 = vmatpush2.bf16.msra.mxu0 %v1305
      %1361 = vmatprep.subr.bf16.mxu0 0
      %1362 = vmatpush2.bf16.msra.mxu0 %v1303
      %1363 = vmatprep.subr.bf16.mxu0 0
      %1364 = vmatpush2.bf16.msra.mxu0 %v1301
      %1365 = vmatprep.subr.bf16.mxu0 0
      %1366 = vmatpush2.bf16.msra.mxu0 %v1299
      %1367 = vmatprep.subr.bf16.mxu0 0
      %1368 = vmatpush2.bf16.msra.mxu0 %v1297
      %1369 = vmatprep.mubr.bf16.mxu0 %v1329
      %1370 = vmatmul.mubr.bf16.gmra.mxu0 %v1258
      %v1371 = vpop.f32.mrf.mxu0
      %v1372 = vadd.f32 %v1237, %v1371
      %v1373 = vpop.f32.mrf.mxu0
      %v1374 = vpop.f32.mrf.mxu0
      %v1375 = vadd.f32 %v1242, %v1374
      %v1376 = vpop.f32.mrf.mxu0
      %1377 = vmatprep.mubr.bf16.mxu0 %v1332
      %1378 = vmatmul.mubr.bf16.gmra.mxu0 %v1260
      %v1379 = vpop.f32.mrf.mxu0
      %v1380 = vadd.f32 %v1247, %v1379
      %v1381 = vpop.f32.mrf.mxu0
      %v1382 = vpop.f32.mrf.mxu0
      %v1383 = vpop.f32.mrf.mxu0
      %1384 = vdwg.mxu0
      %vm1385 = vcmp.gt.f32.partialorder %v1372, 0.0
      %vm1386 = vcmp.gt.f32.partialorder %v1375, 0.0
      %vm1387 = vcmp.gt.f32.partialorder %v1380, 0.0
      %v1388 = vmul.f32 %v1372, 0.01
      %v1389 = vmul.f32 %v1375, 0.01
      %v1390 = vmul.f32 %v1380, 0.01
      %v1391 = vsel %vm1385, %v1372, %v1388
      %v1392 = vsel %vm1386, %v1375, %v1389
      %v1393 = vsel %vm1387, %v1380, %v1390
      %1394 = vst.msk [vmem:[%s588] sm:$0xff] %vm739, %v1391
      %1395 = vst.msk [vmem:[%s588 + $0x8] sm:$0xff] %vm739, %v1392
      %1396 = vst.msk [vmem:[%s588 + $0x10] sm:$0xff] %vm739, %v1393
      %v1397 = vld [vmem:[%s7] sm:$0xff]
      %v1398 = vld [vmem:[%s7 + $0x8] sm:$0xff]
      %v1399 = vld [vmem:[%s8] sm:$0xff]
      %v1400 = vld [vmem:[%s8 + $0x8] sm:$0xff]
      %v1401 = vpack.c.bf16 %v1392, %v1391
      %v1402 = vpack.c.bf16 %v1393, %v1393
      %v1403 = vmul.bf16 %v1401, %v956
      %v1404 = vmul.bf16 %v1402, %v956
      %v1405 = vmul.bf16 %v1401, %v964
      %v1406 = vmul.bf16 %v1402, %v964
      %v1408 = vsel %vm739, %v1403, 0
      %v1410 = vsel %vm739, %v1404, 0
      %v1412 = vsel %vm739, %v1401, 0
      %v1414 = vsel %vm739, %v1402, 0
      %v1416 = vsel %vm739, %v1405, 0
      %v1418 = vsel %vm739, %v1406, 0
      %v1421 = vrot.slane %v1412, 4
      %v1422 = vrot.slane %v1414, 4
      %v1423 = vsel %vm1156, %v1421, %v1422
      %1424 = vrot.lane.b32.xlu0 %v1421, 127
      %v1425 = vpop.permute.xlu0 %1424
      %1426 = vrot.lane.b32.xlu0 %v1423, 127
      %v1427 = vpop.permute.xlu0 %1426
      %v1428 = vsel %vm654, %v1163, %v1425
      %v1429 = vsel %vm654, %v1167, %v1427
      %1432 = vrot.lane.b32.xlu0 %v1416, 126
      %v1433 = vpop.permute.xlu0 %1432
      %1434 = vrot.lane.b32.xlu0 %v1418, 126
      %v1435 = vpop.permute.xlu0 %1434
      %v1436 = vsel %vm661, %v658, %v1433
      %v1437 = vsel %vm661, %v658, %v1435
      %v1440 = vrot.slane %v1408, 4
      %v1441 = vrot.slane %v1410, 4
      %v1442 = vsel %vm1156, %v1440, %v1441
      %1443 = vrot.lane.b32.xlu0 %v1440, 124
      %v1444 = vpop.permute.xlu0 %1443
      %1445 = vrot.lane.b32.xlu0 %v1442, 124
      %v1446 = vpop.permute.xlu0 %1445
      %v1447 = vsel %vm985, %v1186, %v1444
      %v1448 = vsel %vm985, %v1190, %v1446
      %1449 = vrot.lane.b32.xlu0 %v1412, 123
      %v1450 = vpop.permute.xlu0 %1449
      %1451 = vrot.lane.b32.xlu0 %v1414, 123
      %v1452 = vpop.permute.xlu0 %1451
      %v1453 = vrot.slane %v1416, 4
      %v1454 = vrot.slane %v1418, 4
      %v1455 = vsel %vm1156, %v1453, %v1454
      %1456 = vrot.lane.b32.xlu0 %v1453, 122
      %v1457 = vpop.permute.xlu0 %1456
      %1458 = vrot.lane.b32.xlu0 %v1455, 122
      %v1459 = vpop.permute.xlu0 %1458
      %1460 = vrot.lane.b32.xlu0 %v1408, 120
      %v1461 = vpop.permute.xlu0 %1460
      %1462 = vrot.lane.b32.xlu0 %v1410, 120
      %v1463 = vpop.permute.xlu0 %1462
      %1464 = vrot.lane.b32.xlu0 %v1421, 119
      %v1465 = vpop.permute.xlu0 %1464
      %1466 = vrot.lane.b32.xlu0 %v1423, 119
      %v1467 = vpop.permute.xlu0 %1466
      %1468 = vrot.lane.b32.xlu0 %v1416, 118
      %v1469 = vpop.permute.xlu0 %1468
      %1470 = vrot.lane.b32.xlu0 %v1418, 118
      %v1471 = vpop.permute.xlu0 %1470
      %v1473 = vsel %vm841, 0, %v1428
      %v1475 = vsel %vm841, %v1410, %v1425
      %v1478 = vsel %vm841, %v1437, %v1447
      %v1481 = vsel %vm841, %v1435, %v1444
      %v1484 = vsel %vm841, %v1452, %v1457
      %v1487 = vsel %vm841, %v1463, %v1465
      %1489 = vset.pattern.permute.xlu0 0
      %1490 = vperm.xlu0 %1489, %v1399
      %v1491 = vpop.permute.xlu0 %1490
      %1494 = vset.pattern.permute.xlu0 0
      %1495 = vperm.xlu0 %1494, %v1400
      %v1496 = vpop.permute.xlu0 %1495
      %v1500 = vunpack.c.l.b16 %v1397
      %v1501 = vunpack.c.h.b16 %v1397
      %v1502 = vunpack.c.l.b16 %v1398
      %v1503 = vunpack.c.h.b16 %v1398
      %v1504 = vpack.c.b16 %v1502, %v1500
      %v1505 = vpack.c.b16 %v1503, %v1501
      %1513 = vrot.lane.b32.xlu0 %v1408, 5
      %v1514 = vpop.permute.xlu0 %1513
      %1515 = vrot.lane.b32.xlu0 %v1473, 5
      %v1516 = vpop.permute.xlu0 %1515
      %1517 = vrot.lane.b32.xlu0 %v1475, 5
      %v1518 = vpop.permute.xlu0 %1517
      %1519 = vrot.lane.b32.xlu0 %v1429, 5
      %v1520 = vpop.permute.xlu0 %1519
      %1521 = vrot.lane.b32.xlu0 %v1427, 5
      %v1522 = vpop.permute.xlu0 %1521
      %1523 = vrot.lane.b32.xlu0 %v1436, 5
      %v1524 = vpop.permute.xlu0 %1523
      %1525 = vrot.lane.b32.xlu0 %v1433, 5
      %v1526 = vpop.permute.xlu0 %1525
      %1527 = vrot.lane.b32.xlu0 %v1478, 5
      %v1528 = vpop.permute.xlu0 %1527
      %1529 = vrot.lane.b32.xlu0 %v1481, 5
      %v1530 = vpop.permute.xlu0 %1529
      %1531 = vrot.lane.b32.xlu0 %v1448, 5
      %v1532 = vpop.permute.xlu0 %1531
      %1533 = vrot.lane.b32.xlu0 %v1446, 5
      %v1534 = vpop.permute.xlu0 %1533
      %1535 = vrot.lane.b32.xlu0 %v1450, 5
      %v1536 = vpop.permute.xlu0 %1535
      %1537 = vrot.lane.b32.xlu0 %v1484, 5
      %v1538 = vpop.permute.xlu0 %1537
      %1539 = vrot.lane.b32.xlu0 %v1459, 5
      %v1540 = vpop.permute.xlu0 %1539
      %1541 = vrot.lane.b32.xlu0 %v1461, 5
      %v1542 = vpop.permute.xlu0 %1541
      %1543 = vrot.lane.b32.xlu0 %v1487, 5
      %v1544 = vpop.permute.xlu0 %1543
      %1545 = vrot.lane.b32.xlu0 %v1467, 5
      %v1546 = vpop.permute.xlu0 %1545
      %1547 = vrot.lane.b32.xlu0 %v1469, 5
      %v1548 = vpop.permute.xlu0 %1547
      %1549 = vrot.lane.b32.xlu0 %v1471, 5
      %v1550 = vpop.permute.xlu0 %1549
      %v1551 = vsel %vm1053, %v1028, %v1514
      %v1552 = vsel %vm1053, %v1516, %v1518
      %v1553 = vsel %vm1053, %v1520, %v1522
      %v1554 = vsel %vm1053, %v1524, %v1526
      %v1555 = vsel %vm1053, %v1528, %v1530
      %v1556 = vsel %vm1053, %v1532, %v1534
      %v1571 = vsel %vm1327, %v1505, 0
      %v1574 = vsel %vm841, %v1550, 0
      %1576 = vmatprep.subr.bf16.mxu0 0
      %1577 = vmatpush1.bf16.msra.mxu0 %v1538
      %1578 = vmatprep.subr.bf16.mxu0 0
      %1579 = vmatpush1.bf16.msra.mxu0 %v1536
      %1580 = vmatprep.subr.bf16.mxu0 0
      %1581 = vmatpush1.bf16.msra.mxu0 %v1556
      %1582 = vmatprep.subr.bf16.mxu0 0
      %1583 = vmatpush1.bf16.msra.mxu0 %v1555
      %1584 = vmatprep.subr.bf16.mxu0 0
      %1585 = vmatpush1.bf16.msra.mxu0 %v1554
      %1586 = vmatprep.subr.bf16.mxu0 0
      %1587 = vmatpush1.bf16.msra.mxu0 %v1553
      %1588 = vmatprep.subr.bf16.mxu0 0
      %1589 = vmatpush1.bf16.msra.mxu0 %v1552
      %1590 = vmatprep.subr.bf16.mxu0 0
      %1591 = vmatpush1.bf16.msra.mxu0 %v1551
      %1592 = vmatprep.subr.bf16.mxu0 0
      %1593 = vmatpush2.bf16.msra.mxu0 0
      %1594 = vmatprep.subr.bf16.mxu0 0
      %1595 = vmatpush2.bf16.msra.mxu0 0
      %1596 = vmatprep.subr.bf16.mxu0 0
      %1597 = vmatpush2.bf16.msra.mxu0 %v1574
      %1598 = vmatprep.subr.bf16.mxu0 0
      %1599 = vmatpush2.bf16.msra.mxu0 %v1548
      %1600 = vmatprep.subr.bf16.mxu0 0
      %1601 = vmatpush2.bf16.msra.mxu0 %v1546
      %1602 = vmatprep.subr.bf16.mxu0 0
      %1603 = vmatpush2.bf16.msra.mxu0 %v1544
      %1604 = vmatprep.subr.bf16.mxu0 0
      %1605 = vmatpush2.bf16.msra.mxu0 %v1542
      %1606 = vmatprep.subr.bf16.mxu0 0
      %1607 = vmatpush2.bf16.msra.mxu0 %v1540
      %1608 = vmatprep.mubr.bf16.mxu0 %v1571
      %1609 = vmatmul.mubr.bf16.gmra.mxu0 %v1504
      %v1610 = vpop.f32.mrf.mxu0
      %v1611 = vadd.f32 %v1491, %v1610
      %v1612 = vpop.f32.mrf.mxu0
      %v1613 = vpop.f32.mrf.mxu0
      %v1614 = vadd.f32 %v1496, %v1613
      %v1615 = vpop.f32.mrf.mxu0
      %1616 = vdwg.mxu0
      %vm1617 = vcmp.gt.f32.partialorder %v1611, 0.0
      %vm1618 = vcmp.gt.f32.partialorder %v1614, 0.0
      %v1619 = vmul.f32 %v1611, 0.01
      %v1620 = vmul.f32 %v1614, 0.01
      %v1621 = vsel %vm1617, %v1611, %v1619
      %v1622 = vsel %vm1618, %v1614, %v1620
      %v1623 = vld [vmem:[%s16] sm:$0x3]
      %1626 = vrot.lane.b32.xlu0 %v1621, 124
      %v1627 = vpop.permute.xlu0 %1626
      %1628 = vrot.lane.b32.xlu0 %v1622, 124
      %v1629 = vpop.permute.xlu0 %1628
      %1632 = vrot.lane.b32.xlu0 %v1621, 120
      %v1633 = vpop.permute.xlu0 %1632
      %1634 = vrot.lane.b32.xlu0 %v1622, 120
      %v1635 = vpop.permute.xlu0 %1634
      %1638 = vrot.lane.b32.xlu0 %v1621, 116
      %v1639 = vpop.permute.xlu0 %1638
      %1640 = vrot.lane.b32.xlu0 %v1622, 116
      %v1641 = vpop.permute.xlu0 %1640
      %v1644 = vpack.c.bf16 %v1622, %v1621
      %v1645 = vpack.c.bf16 %v1629, %v1627
      %v1646 = vpack.c.bf16 %v1635, %v1633
      %v1647 = vpack.c.bf16 %v1641, %v1639
      %v1649 = vsel %vm934, %v1644, 0
      %v1652 = vsel %vm934, %v1645, 0
      %v1655 = vsel %vm934, %v1646, 0
      %v1658 = vsel %vm934, %v1647, 0
      %vm1660 = vcmask 1041408
      %v1662 = vsel %vm1660, %v1623, 0
      %1664 = vmatprep.subr.bf16.mxu0 0
      %1665 = vmatpush1.bf16.msra.mxu0 0
      %1666 = vmatprep.subr.bf16.mxu0 0
      %1667 = vmatpush1.bf16.msra.mxu0 0
      %1668 = vmatprep.subr.bf16.mxu0 0
      %1669 = vmatpush1.bf16.msra.mxu0 0
      %1670 = vmatprep.subr.bf16.mxu0 0
      %1671 = vmatpush1.bf16.msra.mxu0 0
      %1672 = vmatprep.subr.bf16.mxu0 0
      %1673 = vmatpush1.bf16.msra.mxu0 0
      %1674 = vmatprep.subr.bf16.mxu0 0
      %1675 = vmatpush1.bf16.msra.mxu0 0
      %1676 = vmatprep.subr.bf16.mxu0 0
      %1677 = vmatpush1.bf16.msra.mxu0 0
      %1678 = vmatprep.subr.bf16.mxu0 0
      %1679 = vmatpush1.bf16.msra.mxu0 %v1662
      %1680 = vmatprep.subr.bf16.mxu0 0
      %1681 = vmatpush2.bf16.msra.mxu0 0
      %1682 = vmatprep.subr.bf16.mxu0 0
      %1683 = vmatpush2.bf16.msra.mxu0 0
      %1684 = vmatprep.subr.bf16.mxu0 0
      %1685 = vmatpush2.bf16.msra.mxu0 0
      %1686 = vmatprep.subr.bf16.mxu0 0
      %1687 = vmatpush2.bf16.msra.mxu0 0
      %1688 = vmatprep.subr.bf16.mxu0 0
      %1689 = vmatpush2.bf16.msra.mxu0 0
      %1690 = vmatprep.subr.bf16.mxu0 0
      %1691 = vmatpush2.bf16.msra.mxu0 0
      %1692 = vmatprep.subr.bf16.mxu0 0
      %1693 = vmatpush2.bf16.msra.mxu0 0
      %1694 = vmatprep.subr.bf16.mxu0 0
      %1695 = vmatpush2.bf16.msra.mxu0 0
      %1696 = vmatprep.mubr.bf16.mxu0 0
      %1697 = vmatmul.mubr.bf16.gmra.mxu0 %v1649
      %v1698 = vpop.f32.mrf.mxu0
      %v1699 = vadd.f32 0.0, %v1698
      %v1700 = vpop.f32.mrf.mxu0
      %v1701 = vpop.f32.mrf.mxu0
      %v1702 = vadd.f32 0.0, %v1701
      %v1703 = vpop.f32.mrf.mxu0
      %1704 = vmatprep.mubr.bf16.mxu0 0
      %1705 = vmatmul.mubr.bf16.gmra.mxu0 %v1652
      %v1706 = vpop.f32.mrf.mxu0
      %v1707 = vadd.f32 0.0, %v1706
      %v1708 = vpop.f32.mrf.mxu0
      %v1709 = vpop.f32.mrf.mxu0
      %v1710 = vadd.f32 0.0, %v1709
      %v1711 = vpop.f32.mrf.mxu0
      %1712 = vmatprep.mubr.bf16.mxu0 0
      %1713 = vmatmul.mubr.bf16.gmra.mxu0 %v1655
      %v1714 = vpop.f32.mrf.mxu0
      %v1715 = vadd.f32 0.0, %v1714
      %v1716 = vpop.f32.mrf.mxu0
      %v1717 = vpop.f32.mrf.mxu0
      %v1718 = vadd.f32 0.0, %v1717
      %v1719 = vpop.f32.mrf.mxu0
      %1720 = vmatprep.mubr.bf16.mxu0 0
      %1721 = vmatmul.mubr.bf16.gmra.mxu0 %v1658
      %v1722 = vpop.f32.mrf.mxu0
      %v1723 = vadd.f32 0.0, %v1722
      %v1724 = vpop.f32.mrf.mxu0
      %v1725 = vpop.f32.mrf.mxu0
      %v1726 = vadd.f32 0.0, %v1725
      %v1727 = vpop.f32.mrf.mxu0
      %1728 = vdwg.mxu0
      %1731 = vrot.lane.b32.xlu0 %v1699, 8
      %v1732 = vpop.permute.xlu0 %1731
      %1733 = vrot.lane.b32.xlu0 %v1702, 8
      %v1734 = vpop.permute.xlu0 %1733
      %1739 = vrot.lane.b32.xlu0 %v1707, 16
      %v1740 = vpop.permute.xlu0 %1739
      %1741 = vrot.lane.b32.xlu0 %v1710, 16
      %v1742 = vpop.permute.xlu0 %1741
      %1745 = vrot.lane.b32.xlu0 %v1707, 24
      %v1746 = vpop.permute.xlu0 %1745
      %1747 = vrot.lane.b32.xlu0 %v1710, 24
      %v1748 = vpop.permute.xlu0 %1747
      %1753 = vrot.lane.b32.xlu0 %v1715, 32
      %v1754 = vpop.permute.xlu0 %1753
      %1755 = vrot.lane.b32.xlu0 %v1718, 32
      %v1756 = vpop.permute.xlu0 %1755
      %1759 = vrot.lane.b32.xlu0 %v1715, 40
      %v1760 = vpop.permute.xlu0 %1759
      %1761 = vrot.lane.b32.xlu0 %v1718, 40
      %v1762 = vpop.permute.xlu0 %1761
      %1767 = vrot.lane.b32.xlu0 %v1723, 48
      %v1768 = vpop.permute.xlu0 %1767
      %1769 = vrot.lane.b32.xlu0 %v1726, 48
      %v1770 = vpop.permute.xlu0 %1769
      %1773 = vrot.lane.b32.xlu0 %v1723, 56
      %v1774 = vpop.permute.xlu0 %1773
      %1775 = vrot.lane.b32.xlu0 %v1726, 56
      %v1776 = vpop.permute.xlu0 %1775
      %v1779 = vsel %vm828, %v1699, %v1732
      %v1780 = vsel %vm828, %v1702, %v1734
      %v1781 = vsel %vm739, %v1779, %v1740
      %v1782 = vsel %vm739, %v1780, %v1742
      %vm1783 = vcmask 195584
      %v1784 = vsel %vm1783, %v1781, %v1746
      %v1785 = vsel %vm1783, %v1782, %v1748
      %vm1786 = vcmask 261120
      %v1787 = vsel %vm1786, %v1784, %v1754
      %v1788 = vsel %vm1786, %v1785, %v1756
      %vm1789 = vcmask 326656
      %v1790 = vsel %vm1789, %v1787, %v1760
      %v1791 = vsel %vm1789, %v1788, %v1762
      %vm1792 = vcmask 392192
      %v1793 = vsel %vm1792, %v1790, %v1768
      %v1794 = vsel %vm1792, %v1791, %v1770
      %vm1795 = vcmask 457728
      %v1796 = vsel %vm1795, %v1793, %v1774
      %v1797 = vsel %vm1795, %v1794, %v1776
      %v1798 = vld [vmem:[%s9] sm:$0xff]
      %v1799 = vld [vmem:[%s9 + $0x8] sm:$0xff]
      %v1800 = vld [vmem:[%s10] sm:$0xff]
      %v1801 = vld [vmem:[%s10 + $0x8] sm:$0xff]
      %v1802 = vpack.c.bf16 %v1797, %v1796
      %v1803 = vmul.bf16 %v1802, %v605
      %v1804 = vmul.bf16 %v1802, %v618
      %v1806 = vsel %vm630, %v1803, 0
      %v1808 = vsel %vm630, %v1802, 0
      %v1810 = vsel %vm630, %v1804, 0
      %1812 = vrot.lane.b32.xlu0 %v1808, 127
      %v1813 = vpop.permute.xlu0 %1812
      %v1814 = vsel %vm654, %v651, %v1813
      %1816 = vrot.lane.b32.xlu0 %v1810, 126
      %v1817 = vpop.permute.xlu0 %1816
      %v1818 = vsel %vm661, %v658, %v1817
      %1820 = vrot.lane.b32.xlu0 %v1806, 120
      %v1821 = vpop.permute.xlu0 %1820
      %v1822 = vsel %vm668, %v665, %v1821
      %1823 = vrot.lane.b32.xlu0 %v1808, 119
      %v1824 = vpop.permute.xlu0 %1823
      %1825 = vrot.lane.b32.xlu0 %v1810, 118
      %v1826 = vpop.permute.xlu0 %1825
      %1827 = vrot.lane.b32.xlu0 %v1806, 112
      %v1828 = vpop.permute.xlu0 %1827
      %1829 = vrot.lane.b32.xlu0 %v1808, 111
      %v1830 = vpop.permute.xlu0 %1829
      %1831 = vrot.lane.b32.xlu0 %v1810, 110
      %v1832 = vpop.permute.xlu0 %1831
      %1834 = vset.pattern.permute.xlu0 0
      %1835 = vperm.xlu0 %1834, %v1800
      %v1836 = vpop.permute.xlu0 %1835
      %1839 = vset.pattern.permute.xlu0 0
      %1840 = vperm.xlu0 %1839, %v1801
      %v1841 = vpop.permute.xlu0 %1840
      %v1845 = vunpack.c.l.b16 %v1798
      %v1846 = vunpack.c.h.b16 %v1798
      %v1847 = vunpack.c.l.b16 %v1799
      %v1848 = vunpack.c.h.b16 %v1799
      %v1849 = vpack.c.b16 %v1847, %v1845
      %v1850 = vpack.c.b16 %v1848, %v1846
      %1852 = vrot.lane.b32.xlu0 %v1806, 9
      %v1853 = vpop.permute.xlu0 %1852
      %1854 = vrot.lane.b32.xlu0 %v1814, 9
      %v1855 = vpop.permute.xlu0 %1854
      %1856 = vrot.lane.b32.xlu0 %v1813, 9
      %v1857 = vpop.permute.xlu0 %1856
      %1858 = vrot.lane.b32.xlu0 %v1818, 9
      %v1859 = vpop.permute.xlu0 %1858
      %1860 = vrot.lane.b32.xlu0 %v1817, 9
      %v1861 = vpop.permute.xlu0 %1860
      %1862 = vrot.lane.b32.xlu0 %v1822, 9
      %v1863 = vpop.permute.xlu0 %1862
      %1864 = vrot.lane.b32.xlu0 %v1821, 9
      %v1865 = vpop.permute.xlu0 %1864
      %1866 = vrot.lane.b32.xlu0 %v1824, 9
      %v1867 = vpop.permute.xlu0 %1866
      %1868 = vrot.lane.b32.xlu0 %v1826, 9
      %v1869 = vpop.permute.xlu0 %1868
      %1870 = vrot.lane.b32.xlu0 %v1828, 9
      %v1871 = vpop.permute.xlu0 %1870
      %1872 = vrot.lane.b32.xlu0 %v1830, 9
      %v1873 = vpop.permute.xlu0 %1872
      %1874 = vrot.lane.b32.xlu0 %v1832, 9
      %v1875 = vpop.permute.xlu0 %1874
      %v1876 = vsel %vm725, %v700, %v1853
      %v1877 = vsel %vm725, %v1855, %v1857
      %v1878 = vsel %vm725, %v1859, %v1861
      %v1879 = vsel %vm725, %v1863, %v1865
      %v1890 = vsel %vm739, %v1850, 0
      %1892 = vmatprep.subr.bf16.mxu0 0
      %1893 = vmatpush1.bf16.msra.mxu0 %v1873
      %1894 = vmatprep.subr.bf16.mxu0 0
      %1895 = vmatpush1.bf16.msra.mxu0 %v1871
      %1896 = vmatprep.subr.bf16.mxu0 0
      %1897 = vmatpush1.bf16.msra.mxu0 %v1869
      %1898 = vmatprep.subr.bf16.mxu0 0
      %1899 = vmatpush1.bf16.msra.mxu0 %v1867
      %1900 = vmatprep.subr.bf16.mxu0 0
      %1901 = vmatpush1.bf16.msra.mxu0 %v1879
      %1902 = vmatprep.subr.bf16.mxu0 0
      %1903 = vmatpush1.bf16.msra.mxu0 %v1878
      %1904 = vmatprep.subr.bf16.mxu0 0
      %1905 = vmatpush1.bf16.msra.mxu0 %v1877
      %1906 = vmatprep.subr.bf16.mxu0 0
      %1907 = vmatpush1.bf16.msra.mxu0 %v1876
      %1908 = vmatprep.subr.bf16.mxu0 0
      %1909 = vmatpush2.bf16.msra.mxu0 0
      %1910 = vmatprep.subr.bf16.mxu0 0
      %1911 = vmatpush2.bf16.msra.mxu0 0
      %1912 = vmatprep.subr.bf16.mxu0 0
      %1913 = vmatpush2.bf16.msra.mxu0 0
      %1914 = vmatprep.subr.bf16.mxu0 0
      %1915 = vmatpush2.bf16.msra.mxu0 0
      %1916 = vmatprep.subr.bf16.mxu0 0
      %1917 = vmatpush2.bf16.msra.mxu0 0
      %1918 = vmatprep.subr.bf16.mxu0 0
      %1919 = vmatpush2.bf16.msra.mxu0 0
      %1920 = vmatprep.subr.bf16.mxu0 0
      %1921 = vmatpush2.bf16.msra.mxu0 0
      %1922 = vmatprep.subr.bf16.mxu0 0
      %1923 = vmatpush2.bf16.msra.mxu0 %v1875
      %1924 = vmatprep.mubr.bf16.mxu0 %v1890
      %1925 = vmatmul.mubr.bf16.gmra.mxu0 %v1849
      %v1926 = vpop.f32.mrf.mxu0
      %v1927 = vadd.f32 %v1836, %v1926
      %v1928 = vpop.f32.mrf.mxu0
      %v1929 = vpop.f32.mrf.mxu0
      %v1930 = vadd.f32 %v1841, %v1929
      %v1931 = vpop.f32.mrf.mxu0
      %1932 = vdwg.mxu0
      %vm1933 = vcmp.gt.f32.partialorder %v1927, 0.0
      %vm1934 = vcmp.gt.f32.partialorder %v1930, 0.0
      %v1935 = vmul.f32 %v1927, 0.01
      %v1936 = vmul.f32 %v1930, 0.01
      %v1937 = vsel %vm1933, %v1927, %v1935
      %v1938 = vsel %vm1934, %v1930, %v1936
      %v1939 = vld [vmem:[%s11] sm:$0xff]
      %v1940 = vld [vmem:[%s11 + $0x8] sm:$0xff]
      %v1941 = vld [vmem:[%s12] sm:$0xff]
      %v1942 = vld [vmem:[%s12 + $0x8] sm:$0xff]
      %v1943 = vpack.c.bf16 %v1938, %v1937
      %v1944 = vmul.bf16 %v1943, %v605
      %v1945 = vmul.bf16 %v1943, %v618
      %v1947 = vsel %vm630, %v1944, 0
      %v1949 = vsel %vm630, %v1943, 0
      %v1951 = vsel %vm630, %v1945, 0
      %1953 = vrot.lane.b32.xlu0 %v1949, 127
      %v1954 = vpop.permute.xlu0 %1953
      %v1955 = vsel %vm654, %v651, %v1954
      %1957 = vrot.lane.b32.xlu0 %v1951, 126
      %v1958 = vpop.permute.xlu0 %1957
      %v1959 = vsel %vm661, %v658, %v1958
      %1961 = vrot.lane.b32.xlu0 %v1947, 120
      %v1962 = vpop.permute.xlu0 %1961
      %v1963 = vsel %vm668, %v665, %v1962
      %1964 = vrot.lane.b32.xlu0 %v1949, 119
      %v1965 = vpop.permute.xlu0 %1964
      %1966 = vrot.lane.b32.xlu0 %v1951, 118
      %v1967 = vpop.permute.xlu0 %1966
      %1968 = vrot.lane.b32.xlu0 %v1947, 112
      %v1969 = vpop.permute.xlu0 %1968
      %1970 = vrot.lane.b32.xlu0 %v1949, 111
      %v1971 = vpop.permute.xlu0 %1970
      %1972 = vrot.lane.b32.xlu0 %v1951, 110
      %v1973 = vpop.permute.xlu0 %1972
      %1975 = vset.pattern.permute.xlu0 0
      %1976 = vperm.xlu0 %1975, %v1941
      %v1977 = vpop.permute.xlu0 %1976
      %1980 = vset.pattern.permute.xlu0 0
      %1981 = vperm.xlu0 %1980, %v1942
      %v1982 = vpop.permute.xlu0 %1981
      %v1986 = vunpack.c.l.b16 %v1939
      %v1987 = vunpack.c.h.b16 %v1939
      %v1988 = vunpack.c.l.b16 %v1940
      %v1989 = vunpack.c.h.b16 %v1940
      %v1990 = vpack.c.b16 %v1988, %v1986
      %v1991 = vpack.c.b16 %v1989, %v1987
      %1993 = vrot.lane.b32.xlu0 %v1947, 9
      %v1994 = vpop.permute.xlu0 %1993
      %1995 = vrot.lane.b32.xlu0 %v1955, 9
      %v1996 = vpop.permute.xlu0 %1995
      %1997 = vrot.lane.b32.xlu0 %v1954, 9
      %v1998 = vpop.permute.xlu0 %1997
      %1999 = vrot.lane.b32.xlu0 %v1959, 9
      %v2000 = vpop.permute.xlu0 %1999
      %2001 = vrot.lane.b32.xlu0 %v1958, 9
      %v2002 = vpop.permute.xlu0 %2001
      %2003 = vrot.lane.b32.xlu0 %v1963, 9
      %v2004 = vpop.permute.xlu0 %2003
      %2005 = vrot.lane.b32.xlu0 %v1962, 9
      %v2006 = vpop.permute.xlu0 %2005
      %2007 = vrot.lane.b32.xlu0 %v1965, 9
      %v2008 = vpop.permute.xlu0 %2007
      %2009 = vrot.lane.b32.xlu0 %v1967, 9
      %v2010 = vpop.permute.xlu0 %2009
      %2011 = vrot.lane.b32.xlu0 %v1969, 9
      %v2012 = vpop.permute.xlu0 %2011
      %2013 = vrot.lane.b32.xlu0 %v1971, 9
      %v2014 = vpop.permute.xlu0 %2013
      %2015 = vrot.lane.b32.xlu0 %v1973, 9
      %v2016 = vpop.permute.xlu0 %2015
      %v2017 = vsel %vm725, %v700, %v1994
      %v2018 = vsel %vm725, %v1996, %v1998
      %v2019 = vsel %vm725, %v2000, %v2002
      %v2020 = vsel %vm725, %v2004, %v2006
      %v2031 = vsel %vm739, %v1991, 0
      %2033 = vmatprep.subr.bf16.mxu0 0
      %2034 = vmatpush1.bf16.msra.mxu0 %v2014
      %2035 = vmatprep.subr.bf16.mxu0 0
      %2036 = vmatpush1.bf16.msra.mxu0 %v2012
      %2037 = vmatprep.subr.bf16.mxu0 0
      %2038 = vmatpush1.bf16.msra.mxu0 %v2010
      %2039 = vmatprep.subr.bf16.mxu0 0
      %2040 = vmatpush1.bf16.msra.mxu0 %v2008
      %2041 = vmatprep.subr.bf16.mxu0 0
      %2042 = vmatpush1.bf16.msra.mxu0 %v2020
      %2043 = vmatprep.subr.bf16.mxu0 0
      %2044 = vmatpush1.bf16.msra.mxu0 %v2019
      %2045 = vmatprep.subr.bf16.mxu0 0
      %2046 = vmatpush1.bf16.msra.mxu0 %v2018
      %2047 = vmatprep.subr.bf16.mxu0 0
      %2048 = vmatpush1.bf16.msra.mxu0 %v2017
      %2049 = vmatprep.subr.bf16.mxu0 0
      %2050 = vmatpush2.bf16.msra.mxu0 0
      %2051 = vmatprep.subr.bf16.mxu0 0
      %2052 = vmatpush2.bf16.msra.mxu0 0
      %2053 = vmatprep.subr.bf16.mxu0 0
      %2054 = vmatpush2.bf16.msra.mxu0 0
      %2055 = vmatprep.subr.bf16.mxu0 0
      %2056 = vmatpush2.bf16.msra.mxu0 0
      %2057 = vmatprep.subr.bf16.mxu0 0
      %2058 = vmatpush2.bf16.msra.mxu0 0
      %2059 = vmatprep.subr.bf16.mxu0 0
      %2060 = vmatpush2.bf16.msra.mxu0 0
      %2061 = vmatprep.subr.bf16.mxu0 0
      %2062 = vmatpush2.bf16.msra.mxu0 0
      %2063 = vmatprep.subr.bf16.mxu0 0
      %2064 = vmatpush2.bf16.msra.mxu0 %v2016
      %2065 = vmatprep.mubr.bf16.mxu0 %v2031
      %2066 = vmatmul.mubr.bf16.gmra.mxu0 %v1990
      %v2067 = vpop.f32.mrf.mxu0
      %v2068 = vadd.f32 %v1977, %v2067
      %v2069 = vpop.f32.mrf.mxu0
      %v2070 = vpop.f32.mrf.mxu0
      %v2071 = vadd.f32 %v1982, %v2070
      %v2072 = vpop.f32.mrf.mxu0
      %2073 = vdwg.mxu0
      %v2074 = vadd.f32 %v778, %v2068
      %v2075 = vadd.f32 %v781, %v2071
      %vm2076 = vcmp.gt.f32.partialorder %v2074, 0.0
      %vm2077 = vcmp.gt.f32.partialorder %v2075, 0.0
      %v2078 = vmul.f32 %v2074, 0.01
      %v2079 = vmul.f32 %v2075, 0.01
      %v2080 = vsel %vm2076, %v2074, %v2078
      %v2081 = vsel %vm2077, %v2075, %v2079
      %2082 = vst.msk [vmem:[%s583] sm:$0xff] %vm630, %v2080
      %2083 = vst.msk [vmem:[%s583 + $0x8] sm:$0xff] %vm630, %v2081
      %p2084 = scmp.lt.s32.totalorder %s30, 1
      %s2085 = scalar_select %p2084, %s30, 1
      %s2086 = smul.addr %s2085, 2
      %s2087 = smul.addr %s2086, 8
      %s2088 = scalar_lea.vmem %s17, %s2087
      %p2089 = scmp.lt.s32.totalorder %s30, 1
      %s2090 = scalar_select %p2089, %s30, 1
      %s2091 = smul.addr %s2090, 3
      %s2092 = smul.addr %s2091, 8
      %s2093 = scalar_lea.vmem %s18, %s2092
      // Predicated region
      $region89: #{hourglass_forward.4} parent=87 // pred_check
        %p2094 = pneg %p410
      $region90: #{hourglass_forward.4} parent=87 // pred_check_branch
        %2096 = sbr.rel (%p2094) target = $region92
      $region91: #{hourglass_forward.4} parent=87 // pred_region
        _
      $region92: #{hourglass_forward.4} parent=87 // pred_fallthru
        _
      // Predicated region
      $region93: #{hourglass_forward.4} parent=87 // pred_check
        %p2097 = pneg %p436
      $region94: #{hourglass_forward.4} parent=87 // pred_check_branch
        %2099 = sbr.rel (%p2097) target = $region96
      $region95: #{hourglass_forward.4} parent=87 // pred_region
        _
      $region96: #{hourglass_forward.4} parent=87 // pred_fallthru
        _
    $region88: #{hourglass_forward.4} parent=5 // pred_fallthru
      _
    %p2100 = scmp.le.s32.totalorder 2, %s25
    // Predicated region
    $region97: #{hourglass_forward.4} parent=5 // pred_check
      %p2101 = pneg %p2100
    $region98: #{hourglass_forward.4} parent=5 // pred_check_branch
      %2103 = sbr.rel (%p2101) target = $region100
    $region99: #{hourglass_forward.4} parent=5 // pred_region
      %s2104 = ssub.s32 %s25, 2
      // Predicated region
      $region101: #{hourglass_forward.4} parent=99 // pred_check
        %p2105 = pneg %p416
      $region102: #{hourglass_forward.4} parent=99 // pred_check_branch
        %2107 = sbr.rel (%p2105) target = $region104
      $region103: #{hourglass_forward.4} parent=99 // pred_region
        %p2108 = scmp.lt.s32.totalorder %s31, 1
        %s2109 = scalar_select %p2108, %s31, 1
        %s2110 = smul.addr %s2109, 2
        %s2111 = smul.addr %s2110, 8
        %s2112 = scalar_lea.vmem %s17, %s2111
      $region104: #{hourglass_forward.4} parent=99 // pred_fallthru
        _
      // Predicated region
      $region105: #{hourglass_forward.4} parent=99 // pred_check
        %p2113 = pneg %p442
      $region106: #{hourglass_forward.4} parent=99 // pred_check_branch
        %2115 = sbr.rel (%p2113) target = $region108
      $region107: #{hourglass_forward.4} parent=99 // pred_region
        %p2116 = scmp.lt.s32.totalorder %s31, 1
        %s2117 = scalar_select %p2116, %s31, 1
        %s2118 = smul.addr %s2117, 3
        %s2119 = smul.addr %s2118, 8
        %s2120 = scalar_lea.vmem %s18, %s2119
      $region108: #{hourglass_forward.4} parent=99 // pred_fallthru
        _
    $region100: #{hourglass_forward.4} parent=5 // pred_fallthru
      _
  $region6: #{hourglass_forward.4} parent=0 // loop_footer
    %s29 = sadd.s32 1, %s25
  $region7: #{hourglass_forward.4} parent=0 // loop_footer_branch
    %24 = sbr.rel target = $region3
  $region8: #{hourglass_forward.4} parent=0 // loop_exit
    _

</llo_original>
